<compile_context>
chip_gen: v7x
topology: tpu7x:2x2x1
jax: 0.10.0
libtpu: 0.0.40
codegen_flags: <defaults>
</compile_context>

<pallas_src>
import jax
import jax.numpy as jnp
from jax.experimental import pallas as pl
from jax.experimental.pallas import tpu as pltpu


def gcnreg_kernel(a_ref, x_ref,
                  w1_ref, b1_ref, w2_ref, b2_ref,
                  wc1_ref, bc1_ref, wc2_ref, bc2_ref,
                  wc3_ref, bc3_ref,
                  out_ref):
    """Forward for one block of `bg` graphs (ng block-diagonal groups), VMEM-resident."""
    ng, nb, _ = a_ref.shape            # ng groups of (G*N, G*N) block-diagonal adjacency
    m, fin = x_ref.shape               # m = ng * nb node rows in this block
    hdim = w1_ref.shape[1]
    bg, c = out_ref.shape              # bg graphs in this block
    n = m // bg                        # nodes per graph (static)

    a = a_ref[...]                                        # (ng, nb, nb) bf16 block-diag
    x = x_ref[...].reshape(ng, nb, fin)                   # (ng, nb, fin) bf16

    # ---- GraphConv 1: aggregate (128-tall block-diag matmul) then transform (2D) ----
    ah = jnp.einsum('gij,gjf->gif', a, x, preferred_element_type=jnp.float32)
    h1 = jnp.dot(ah.reshape(m, fin).astype(jnp.bfloat16), w1_ref[...],
                 preferred_element_type=jnp.float32)       # (m, H)
    h1 = jnp.maximum(h1 + b1_ref[...], 0.0).astype(jnp.bfloat16)

    # ---- GraphConv 2: transform (2D matmul) then aggregate (block-diag) ----
    hw2 = jnp.dot(h1, w2_ref[...], preferred_element_type=jnp.float32)
    h2 = jnp.einsum('gij,gjh->gih', a,
                    hw2.astype(jnp.bfloat16).reshape(ng, nb, hdim),
                    preferred_element_type=jnp.float32)
    h2 = jnp.maximum(h2.reshape(m, hdim) + b2_ref[...], 0.0)   # (m, H) f32

    # ---- dgl.mean_nodes: per-graph sum over node rows (1/N folded into wc1 host-side) ----
    hg = jnp.sum(h2.reshape(bg, n, hdim), axis=1).astype(jnp.bfloat16)   # (bg, H)

    # ---- MLP head, M = bg rows per matmul ----
    o = jnp.dot(hg, wc1_ref[...], preferred_element_type=jnp.float32)
    o = jnp.maximum(o + bc1_ref[...], 0.0).astype(jnp.bfloat16)
    o = jnp.dot(o, wc2_ref[...], preferred_element_type=jnp.float32)
    o = jnp.maximum(o + bc2_ref[...], 0.0)                                # (bg, H) f32

    if c == 1:
        # wc3 arrives as a (1, H) row: VPU multiply + lane reduction instead of an MXU
        # pass that would produce a single useful column.
        o3 = jnp.sum(o * wc3_ref[...].astype(jnp.float32), axis=-1, keepdims=True)
    else:
        o3 = jnp.dot(o.astype(jnp.bfloat16), wc3_ref[...],
                     preferred_element_type=jnp.float32)
    out_ref[...] = (o3 + bc3_ref[...]).astype(out_ref.dtype)


def _pack_block_diag(a, g):
    """Pack consecutive groups of `g` graphs' (N,N) adjacencies into a (g*N, g*N)
    block-diagonal tile so aggregation becomes a single lane-dense 128-wide matmul."""
    b, n, _ = a.shape
    groups = b // g
    a4 = a.reshape(groups, g, n, n)
    eye = jnp.eye(g, dtype=a.dtype)
    bd = jnp.einsum('qgnm,gh->qgnhm', a4, eye)
    return bd.reshape(groups, g * n, g * n)


def gcnreg_forward(a_hat, h, params, *, graphs_per_block=None):
    (w1, b1, w2, b2, wc1, bc1, wc2, bc2, wc3, bc3) = params
    B, N, _ = a_hat.shape
    Fin = h.shape[-1]
    H = w1.shape[1]
    C = wc3.shape[1]

    # ---- host-side repacking: lane-dense, MXU-friendly layout ----
    G = max(1, 128 // N)               # graphs per block-diagonal group
    assert B % G == 0, f"batch ({B}) must be a multiple of {G} graphs"
    nb = G * N                         # rows/cols of one block-diagonal tile (128 when N|128)
    groups = B // G

    a_bd = _pack_block_diag(a_hat.astype(jnp.bfloat16), G)    # (groups, nb, nb) bf16
    x_flat = h.astype(jnp.bfloat16).reshape(B * N, Fin)        # (B*N, Fin) bf16

    # Fold the mean-pool 1/N into wc1; keep biases f32 (f32 bias-add / ReLU path).
    w1b, w2b, wc2b = (w.astype(jnp.bfloat16) for w in (w1, w2, wc2))
    wc1b = (wc1 / float(N)).astype(jnp.bfloat16)
    wc3b = (wc3.reshape(1, H) if C == 1 else wc3).astype(jnp.bfloat16)
    tail_ops = (w1b, b1, w2b, b2, wc1b, bc1, wc2b, bc2, wc3b, bc3)

    # ---- generation-aware VMEM budgeting & block sizing (no double counting) ----
    try:
        vmem_phys = pltpu.get_tpu_info().vmem_capacity_bytes
    except Exception:
        vmem_phys = 64 << 20           # assume the smallest (v7x) if the query fails
    vmem_cap = (vmem_phys * 3) // 4    # leave headroom for compiler scratch

    lane = 128
    weight_bytes = sum(int(t.size) * t.dtype.itemsize for t in tail_ops)
    # Per block-diag group: double-buffered bf16 input blocks + generous f32 temporaries.
    per_group = (2 * nb * nb * 2
                 + 2 * nb * max(Fin, lane) * 2
                 + 8 * nb * max(H, lane) * 4)
    fixed = weight_bytes + 2 * max(G, 8) * lane * 4 + (2 << 20)

    if graphs_per_block is None:
        budget_groups = max(1, (vmem_cap - fixed) // per_group)
        if groups <= budget_groups:
            ng = groups                # single grid step: no per-step pipeline overhead
        else:
            cands = [d for d in range(1, groups + 1)
                     if groups % d == 0 and d <= budget_groups and (d * G) % 8 == 0]
            evens = [d for d in cands if (groups // d) % 2 == 0]  # balance v7x's 2 TCs
            ng = max(evens) if evens else (max(cands) if cands else groups)
    else:
        assert graphs_per_block % G == 0, f"graphs_per_block must be a multiple of {G}"
        ng = graphs_per_block // G
        assert groups % ng == 0, "graphs_per_block must evenly divide the batch"

    bg = ng * G                        # graphs per grid step
    m_step = ng * nb                   # node rows per grid step
    vmem_limit = int(max(4 << 20, min(vmem_cap, fixed + ng * per_group)))

    in_specs = [
        pl.BlockSpec((ng, nb, nb), lambda i: (i, 0, 0)),            # block-diag adjacency
        pl.BlockSpec((m_step, Fin), lambda i: (i, 0)),              # node features
    ] + [pl.BlockSpec(t.shape, lambda i, nd=t.ndim: (0,) * nd)      # replicated weights
         for t in tail_ops]
    out_specs = pl.BlockSpec((bg, C), lambda i: (i, 0))

    flops = 2 * B * N * (N * Fin + Fin * H + H * H + N * H) + 2 * B * (2 * H * H + H * C)
    bytes_accessed = int(a_bd.size * 2 + x_flat.size * 2 + weight_bytes + B * C * 4)

    return pl.pallas_call(
        gcnreg_kernel,
        out_shape=jax.ShapeDtypeStruct((B, C), jnp.float32),
        grid=(groups // ng,),
        in_specs=in_specs,
        out_specs=out_specs,
        compiler_params=pltpu.CompilerParams(
            dimension_semantics=("parallel",),
            vmem_limit_bytes=vmem_limit,
        ),
        cost_estimate=pl.CostEstimate(flops=flops, transcendentals=0,
                                      bytes_accessed=bytes_accessed),
    )(a_bd, x_flat, *tail_ops)


def make_params(key, in_dim, hidden_dim, n_classes):
    ks = jax.random.split(key, 10)
    scale = 0.1

    def w(k, shape):
        return scale * jax.random.normal(k, shape, dtype=jnp.float32)

    w1 = w(ks[0], (in_dim, hidden_dim));      b1 = w(ks[1], (1, hidden_dim))
    w2 = w(ks[2], (hidden_dim, hidden_dim));  b2 = w(ks[3], (1, hidden_dim))
    wc1 = w(ks[4], (hidden_dim, hidden_dim)); bc1 = w(ks[5], (1, hidden_dim))
    wc2 = w(ks[6], (hidden_dim, hidden_dim)); bc2 = w(ks[7], (1, hidden_dim))
    wc3 = w(ks[8], (hidden_dim, n_classes));  bc3 = w(ks[9], (1, n_classes))
    return (w1, b1, w2, b2, wc1, bc1, wc2, bc2, wc3, bc3)


def normalized_adjacency(adj):
    """DGL GraphConv norm='both': D^{-1/2} A D^{-1/2} (no self-loops). Batched."""
    deg = jnp.sum(adj, axis=-1)
    d_inv_sqrt = jnp.where(deg > 0, jax.lax.rsqrt(jnp.maximum(deg, 1e-12)), 0.0)
    return adj * d_inv_sqrt[..., :, None] * d_inv_sqrt[..., None, :]


def gcnreg_reference(a_hat, h, params):
    """Pure-JAX f32 reference (original transform-then-aggregate order)."""
    (w1, b1, w2, b2, wc1, bc1, wc2, bc2, wc3, bc3) = params

    def one(a, x):
        h1 = jax.nn.relu(a @ (x @ w1) + b1)
        h2 = jax.nn.relu(a @ (h1 @ w2) + b2)
        hg = jnp.mean(h2, axis=0, keepdims=True)
        o = jax.nn.relu(hg @ wc1 + bc1)
        o = jax.nn.relu(o @ wc2 + bc2)
        o = o @ wc3 + bc3
        return o[0]

    return jax.vmap(one)(a_hat, h)


if __name__ == "__main__":
    key = jax.random.PRNGKey(0)
    k_graph, k_feat, k_param = jax.random.split(key, 3)

    B = 64         # graphs per batch
    N = 8          # nodes per graph
    in_dim = 4     # input feature dim
    hidden = 32    # hidden_dim
    n_classes = 1  # regression output

    # Deterministic symmetric random graphs (no self-loops), one per batch entry.
    logits = jax.random.uniform(k_graph, (B, N, N))
    adj = (logits + jnp.swapaxes(logits, -1, -2) > 1.0).astype(jnp.float32)
    adj = adj * (1.0 - jnp.eye(N, dtype=jnp.float32))
    a_hat = normalized_adjacency(adj)

    h = jax.random.normal(k_feat, (B, N, in_dim), dtype=jnp.float32)
    params = make_params(k_param, in_dim, hidden, n_classes)

    ref = gcnreg_reference(a_hat, h, params)

    # Auto block size: the whole batch fits VMEM -> single grid step.
    out = jax.block_until_ready(gcnreg_forward(a_hat, h, params))
    assert out.shape == (B, n_classes)
    assert bool(jnp.all(jnp.isfinite(out)))
    assert bool(jnp.allclose(out, ref, atol=2e-2, rtol=5e-2)), (
        f"max abs diff {float(jnp.max(jnp.abs(out - ref)))}")

    # Explicit multi-step grid (4 parallel steps of 16 graphs) exercises the pipeline path.
    out2 = jax.block_until_ready(gcnreg_forward(a_hat, h, params, graphs_per_block=16))
    assert bool(jnp.allclose(out2, ref, atol=2e-2, rtol=5e-2)), (
        f"max abs diff {float(jnp.max(jnp.abs(out2 - ref)))}")

    # TODO(synk): saliency branch (output.backward() returning h.grad) is training-time
    # autograd, not part of the forward kernel.
    print("KERNEL_OK")
</pallas_src>

<mosaic_0001>
module attributes {stable_mosaic.version = 11 : i64} {
  func.func @gcnreg_kernel(%arg0: i32, %arg1: memref<4x128x128xbf16, #tpu.memory_space<vmem>>, %arg2: memref<512x4xbf16, #tpu.memory_space<vmem>>, %arg3: memref<4x32xbf16, #tpu.memory_space<vmem>>, %arg4: memref<1x32xf32, #tpu.memory_space<vmem>>, %arg5: memref<32x32xbf16, #tpu.memory_space<vmem>>, %arg6: memref<1x32xf32, #tpu.memory_space<vmem>>, %arg7: memref<32x32xbf16, #tpu.memory_space<vmem>>, %arg8: memref<1x32xf32, #tpu.memory_space<vmem>>, %arg9: memref<32x32xbf16, #tpu.memory_space<vmem>>, %arg10: memref<1x32xf32, #tpu.memory_space<vmem>>, %arg11: memref<1x32xbf16, #tpu.memory_space<vmem>>, %arg12: memref<1x1xf32, #tpu.memory_space<vmem>>, %arg13: memref<64x1xf32, #tpu.memory_space<vmem>>) attributes {dimension_semantics = [#tpu.dimension_semantics<parallel>], iteration_bounds = array<i64: 1>, scalar_prefetch = 0 : i64, scratch_operands = 0 : i64, tpu.core_type = #tpu.core_type<tc>, window_params = [{transform_indices = @transform_0, window_bounds = array<i64: 4, 128, 128>}, {transform_indices = @transform_1, window_bounds = array<i64: 512, 4>}, {pipeline_mode = #tpu.pipeline_mode<synchronous>, transform_indices = @transform_2, window_bounds = array<i64: 4, 32>}, {pipeline_mode = #tpu.pipeline_mode<synchronous>, transform_indices = @transform_3, window_bounds = array<i64: 1, 32>}, {pipeline_mode = #tpu.pipeline_mode<synchronous>, transform_indices = @transform_4, window_bounds = array<i64: 32, 32>}, {pipeline_mode = #tpu.pipeline_mode<synchronous>, transform_indices = @transform_5, window_bounds = array<i64: 1, 32>}, {pipeline_mode = #tpu.pipeline_mode<synchronous>, transform_indices = @transform_6, window_bounds = array<i64: 32, 32>}, {pipeline_mode = #tpu.pipeline_mode<synchronous>, transform_indices = @transform_7, window_bounds = array<i64: 1, 32>}, {pipeline_mode = #tpu.pipeline_mode<synchronous>, transform_indices = @transform_8, window_bounds = array<i64: 32, 32>}, {pipeline_mode = #tpu.pipeline_mode<synchronous>, transform_indices = @transform_9, window_bounds = array<i64: 1, 32>}, {pipeline_mode = #tpu.pipeline_mode<synchronous>, transform_indices = @transform_10, window_bounds = array<i64: 1, 32>}, {pipeline_mode = #tpu.pipeline_mode<synchronous>, transform_indices = @transform_11, window_bounds = array<i64: 1, 1>}, {transform_indices = @transform_12, window_bounds = array<i64: 64, 1>}]} {
    %c0 = arith.constant 0 : index
    %c0_0 = arith.constant 0 : index
    %c0_1 = arith.constant 0 : index
    %0 = vector.load %arg1[%c0, %c0_0, %c0_1] : memref<4x128x128xbf16, #tpu.memory_space<vmem>>, vector<4x128x128xbf16>
    %c0_2 = arith.constant 0 : index
    %c0_3 = arith.constant 0 : index
    %1 = vector.load %arg2[%c0_2, %c0_3] : memref<512x4xbf16, #tpu.memory_space<vmem>>, vector<512x4xbf16>
    %2 = vector.shape_cast %1 : vector<512x4xbf16> to vector<4x128x4xbf16>
    "tpu.trace_start"() <{level = 10 : i32, message = "gij,gjf->gif"}> : () -> ()
    %cst = arith.constant dense<0.000000e+00> : vector<4x128x4xf32>
    %3 = tpu.matmul %0, %2, %cst {dimension_numbers = #tpu.dot_dimension_numbers<[2], [1], [1], [2], [0, 0, 0, 1, 1, 2], [0], [0]>} : vector<4x128x128xbf16>, vector<4x128x4xbf16>, vector<4x128x4xf32> -> vector<4x128x4xf32>
    "tpu.trace_stop"() : () -> ()
    %4 = vector.shape_cast %3 : vector<4x128x4xf32> to vector<512x4xf32>
    %5 = arith.truncf %4 : vector<512x4xf32> to vector<512x4xbf16>
    %c0_4 = arith.constant 0 : index
    %c0_5 = arith.constant 0 : index
    %6 = vector.load %arg3[%c0_4, %c0_5] : memref<4x32xbf16, #tpu.memory_space<vmem>>, vector<4x32xbf16>
    %cst_6 = arith.constant dense<0.000000e+00> : vector<512x32xf32>
    %7 = tpu.matmul %5, %6, %cst_6 {dimension_numbers = #tpu.dot_dimension_numbers<[1], [0], [0], [1], [0, 0, 1, 1], [], []>} : vector<512x4xbf16>, vector<4x32xbf16>, vector<512x32xf32> -> vector<512x32xf32>
    %c0_7 = arith.constant 0 : index
    %c0_8 = arith.constant 0 : index
    %8 = vector.load %arg4[%c0_7, %c0_8] : memref<1x32xf32, #tpu.memory_space<vmem>>, vector<1x32xf32>
    %9 = vector.broadcast %8 : vector<1x32xf32> to vector<512x32xf32>
    %10 = arith.addf %7, %9 : vector<512x32xf32>
    %cst_9 = arith.constant 0.000000e+00 : f32
    %11 = vector.broadcast %cst_9 : f32 to vector<512x32xf32>
    %12 = arith.maximumf %10, %11 : vector<512x32xf32>
    %13 = arith.truncf %12 : vector<512x32xf32> to vector<512x32xbf16>
    %c0_10 = arith.constant 0 : index
    %c0_11 = arith.constant 0 : index
    %14 = vector.load %arg5[%c0_10, %c0_11] : memref<32x32xbf16, #tpu.memory_space<vmem>>, vector<32x32xbf16>
    %cst_12 = arith.constant dense<0.000000e+00> : vector<512x32xf32>
    %15 = tpu.matmul %13, %14, %cst_12 {dimension_numbers = #tpu.dot_dimension_numbers<[1], [0], [0], [1], [0, 0, 1, 1], [], []>} : vector<512x32xbf16>, vector<32x32xbf16>, vector<512x32xf32> -> vector<512x32xf32>
    %16 = arith.truncf %15 : vector<512x32xf32> to vector<512x32xbf16>
    %17 = vector.shape_cast %16 : vector<512x32xbf16> to vector<4x128x32xbf16>
    "tpu.trace_start"() <{level = 10 : i32, message = "gij,gjh->gih"}> : () -> ()
    %cst_13 = arith.constant dense<0.000000e+00> : vector<4x128x32xf32>
    %18 = tpu.matmul %0, %17, %cst_13 {dimension_numbers = #tpu.dot_dimension_numbers<[2], [1], [1], [2], [0, 0, 0, 1, 1, 2], [0], [0]>} : vector<4x128x128xbf16>, vector<4x128x32xbf16>, vector<4x128x32xf32> -> vector<4x128x32xf32>
    "tpu.trace_stop"() : () -> ()
    %19 = vector.shape_cast %18 : vector<4x128x32xf32> to vector<512x32xf32>
    %c0_14 = arith.constant 0 : index
    %c0_15 = arith.constant 0 : index
    %20 = vector.load %arg6[%c0_14, %c0_15] : memref<1x32xf32, #tpu.memory_space<vmem>>, vector<1x32xf32>
    %21 = vector.broadcast %20 : vector<1x32xf32> to vector<512x32xf32>
    %22 = arith.addf %19, %21 : vector<512x32xf32>
    %cst_16 = arith.constant 0.000000e+00 : f32
    %23 = vector.broadcast %cst_16 : f32 to vector<512x32xf32>
    %24 = arith.maximumf %22, %23 : vector<512x32xf32>
    %25 = vector.shape_cast %24 : vector<512x32xf32> to vector<64x8x32xf32>
    %cst_17 = arith.constant dense<0.000000e+00> : vector<64x32xf32>
    %26 = vector.multi_reduction <add>, %25, %cst_17 [1] : vector<64x8x32xf32> to vector<64x32xf32>
    %27 = arith.truncf %26 : vector<64x32xf32> to vector<64x32xbf16>
    %c0_18 = arith.constant 0 : index
    %c0_19 = arith.constant 0 : index
    %28 = vector.load %arg7[%c0_18, %c0_19] : memref<32x32xbf16, #tpu.memory_space<vmem>>, vector<32x32xbf16>
    %cst_20 = arith.constant dense<0.000000e+00> : vector<64x32xf32>
    %29 = tpu.matmul %27, %28, %cst_20 {dimension_numbers = #tpu.dot_dimension_numbers<[1], [0], [0], [1], [0, 0, 1, 1], [], []>} : vector<64x32xbf16>, vector<32x32xbf16>, vector<64x32xf32> -> vector<64x32xf32>
    %c0_21 = arith.constant 0 : index
    %c0_22 = arith.constant 0 : index
    %30 = vector.load %arg8[%c0_21, %c0_22] : memref<1x32xf32, #tpu.memory_space<vmem>>, vector<1x32xf32>
    %31 = vector.broadcast %30 : vector<1x32xf32> to vector<64x32xf32>
    %32 = arith.addf %29, %31 : vector<64x32xf32>
    %cst_23 = arith.constant 0.000000e+00 : f32
    %33 = vector.broadcast %cst_23 : f32 to vector<64x32xf32>
    %34 = arith.maximumf %32, %33 : vector<64x32xf32>
    %35 = arith.truncf %34 : vector<64x32xf32> to vector<64x32xbf16>
    %c0_24 = arith.constant 0 : index
    %c0_25 = arith.constant 0 : index
    %36 = vector.load %arg9[%c0_24, %c0_25] : memref<32x32xbf16, #tpu.memory_space<vmem>>, vector<32x32xbf16>
    %cst_26 = arith.constant dense<0.000000e+00> : vector<64x32xf32>
    %37 = tpu.matmul %35, %36, %cst_26 {dimension_numbers = #tpu.dot_dimension_numbers<[1], [0], [0], [1], [0, 0, 1, 1], [], []>} : vector<64x32xbf16>, vector<32x32xbf16>, vector<64x32xf32> -> vector<64x32xf32>
    %c0_27 = arith.constant 0 : index
    %c0_28 = arith.constant 0 : index
    %38 = vector.load %arg10[%c0_27, %c0_28] : memref<1x32xf32, #tpu.memory_space<vmem>>, vector<1x32xf32>
    %39 = vector.broadcast %38 : vector<1x32xf32> to vector<64x32xf32>
    %40 = arith.addf %37, %39 : vector<64x32xf32>
    %cst_29 = arith.constant 0.000000e+00 : f32
    %41 = vector.broadcast %cst_29 : f32 to vector<64x32xf32>
    %42 = arith.maximumf %40, %41 : vector<64x32xf32>
    %c0_30 = arith.constant 0 : index
    %c0_31 = arith.constant 0 : index
    %43 = vector.load %arg11[%c0_30, %c0_31] : memref<1x32xbf16, #tpu.memory_space<vmem>>, vector<1x32xbf16>
    %44 = arith.extf %43 : vector<1x32xbf16> to vector<1x32xf32>
    %45 = vector.broadcast %44 : vector<1x32xf32> to vector<64x32xf32>
    %46 = arith.mulf %42, %45 : vector<64x32xf32>
    %cst_32 = arith.constant dense<0.000000e+00> : vector<64xf32>
    %47 = vector.multi_reduction <add>, %46, %cst_32 [1] : vector<64x32xf32> to vector<64xf32>
    %48 = vector.shape_cast %47 : vector<64xf32> to vector<64x1xf32>
    %c0_33 = arith.constant 0 : index
    %c0_34 = arith.constant 0 : index
    %49 = vector.load %arg12[%c0_33, %c0_34] : memref<1x1xf32, #tpu.memory_space<vmem>>, vector<1x1xf32>
    %50 = vector.broadcast %49 : vector<1x1xf32> to vector<64x1xf32>
    %51 = arith.addf %48, %50 : vector<64x1xf32>
    %c0_35 = arith.constant 0 : index
    %c0_36 = arith.constant 0 : index
    %52 = vector.load %arg13[%c0_35, %c0_36] : memref<64x1xf32, #tpu.memory_space<vmem>>, vector<64x1xf32>
    tpu.vector_store %arg13[%c0_35, %c0_36], %51 {strides = array<i32>} : memref<64x1xf32, #tpu.memory_space<vmem>>, vector<64x1xf32>,
    return
  }
  func.func @transform_0(%arg0: i32) -> (i32, i32, i32) {
    %c0_i32 = arith.constant 0 : i32
    %c0_i32_0 = arith.constant 0 : i32
    %c0_i32_1 = arith.constant 0 : i32
    return %arg0, %c0_i32, %c0_i32_0 : i32, i32, i32
  }
  func.func @transform_1(%arg0: i32) -> (i32, i32) {
    %c0_i32 = arith.constant 0 : i32
    %c0_i32_0 = arith.constant 0 : i32
    return %arg0, %c0_i32 : i32, i32
  }
  func.func @transform_2(%arg0: i32) -> (i32, i32) {
    %c0_i32 = arith.constant 0 : i32
    %c0_i32_0 = arith.constant 0 : i32
    %c0_i32_1 = arith.constant 0 : i32
    return %c0_i32, %c0_i32_0 : i32, i32
  }
  func.func @transform_3(%arg0: i32) -> (i32, i32) {
    %c0_i32 = arith.constant 0 : i32
    %c0_i32_0 = arith.constant 0 : i32
    %c0_i32_1 = arith.constant 0 : i32
    return %c0_i32, %c0_i32_0 : i32, i32
  }
  func.func @transform_4(%arg0: i32) -> (i32, i32) {
    %c0_i32 = arith.constant 0 : i32
    %c0_i32_0 = arith.constant 0 : i32
    %c0_i32_1 = arith.constant 0 : i32
    return %c0_i32, %c0_i32_0 : i32, i32
  }
  func.func @transform_5(%arg0: i32) -> (i32, i32) {
    %c0_i32 = arith.constant 0 : i32
    %c0_i32_0 = arith.constant 0 : i32
    %c0_i32_1 = arith.constant 0 : i32
    return %c0_i32, %c0_i32_0 : i32, i32
  }
  func.func @transform_6(%arg0: i32) -> (i32, i32) {
    %c0_i32 = arith.constant 0 : i32
    %c0_i32_0 = arith.constant 0 : i32
    %c0_i32_1 = arith.constant 0 : i32
    return %c0_i32, %c0_i32_0 : i32, i32
  }
  func.func @transform_7(%arg0: i32) -> (i32, i32) {
    %c0_i32 = arith.constant 0 : i32
    %c0_i32_0 = arith.constant 0 : i32
    %c0_i32_1 = arith.constant 0 : i32
    return %c0_i32, %c0_i32_0 : i32, i32
  }
  func.func @transform_8(%arg0: i32) -> (i32, i32) {
    %c0_i32 = arith.constant 0 : i32
    %c0_i32_0 = arith.constant 0 : i32
    %c0_i32_1 = arith.constant 0 : i32
    return %c0_i32, %c0_i32_0 : i32, i32
  }
  func.func @transform_9(%arg0: i32) -> (i32, i32) {
    %c0_i32 = arith.constant 0 : i32
    %c0_i32_0 = arith.constant 0 : i32
    %c0_i32_1 = arith.constant 0 : i32
    return %c0_i32, %c0_i32_0 : i32, i32
  }
  func.func @transform_10(%arg0: i32) -> (i32, i32) {
    %c0_i32 = arith.constant 0 : i32
    %c0_i32_0 = arith.constant 0 : i32
    %c0_i32_1 = arith.constant 0 : i32
    return %c0_i32, %c0_i32_0 : i32, i32
  }
  func.func @transform_11(%arg0: i32) -> (i32, i32) {
    %c0_i32 = arith.constant 0 : i32
    %c0_i32_0 = arith.constant 0 : i32
    %c0_i32_1 = arith.constant 0 : i32
    return %c0_i32, %c0_i32_0 : i32, i32
  }
  func.func @transform_12(%arg0: i32) -> (i32, i32) {
    %c0_i32 = arith.constant 0 : i32
    %c0_i32_0 = arith.constant 0 : i32
    return %arg0, %c0_i32 : i32, i32
  }
}

</mosaic_0001>

<llo_original>
// kernel: tpu_custom_call.1
$region0: #{tpu_custom_call.1}
  #allocation0 [shape = 'u32[]', space=smem, size = 0x4, offset = 0x4, fixed_abs, tag = 'smem constant byte address 0x4 - core index']
  #allocation1 [shape = 'u32[144,128]{1,0:T(1,128)}', space=vmem, size = 0x12000, scoped, tag = 'internal scratch']
  #allocation2 [shape = 'f32[1,1]{1,0:T(1,128)S(1)}', space=vmem, size = 0x200, scoped, tag = 'scoped memory for tpu_custom_call.1']
  %s0 = inlined_call_operand.vmem [shape: bf16[4,128,128], index: 0, kind: input, shape index: {}]
  %s1 = inlined_call_operand.vmem [shape: bf16[512,4], index: 1, kind: input, shape index: {}]
  %s2 = inlined_call_operand.vmem [shape: bf16[4,32], index: 2, kind: input, shape index: {}]
  %s3 = inlined_call_operand.hbm [shape: f32[1,32], index: 3, kind: input, shape index: {}]
  %s4 = inlined_call_operand.vmem [shape: bf16[32,32], index: 4, kind: input, shape index: {}]
  %s5 = inlined_call_operand.hbm [shape: f32[1,32], index: 5, kind: input, shape index: {}]
  %s6 = inlined_call_operand.vmem [shape: bf16[32,32], index: 6, kind: input, shape index: {}]
  %s7 = inlined_call_operand.vmem [shape: f32[1,32], index: 7, kind: input, shape index: {}]
  %s8 = inlined_call_operand.hbm [shape: bf16[32,32], index: 8, kind: input, shape index: {}]
  %s9 = inlined_call_operand.vmem [shape: f32[1,32], index: 9, kind: input, shape index: {}]
  %s10 = inlined_call_operand.vmem [shape: bf16[1,32], index: 10, kind: input, shape index: {}]
  %s11 = inlined_call_operand.<no memory space> [shape: f32[1,1], index: 11, kind: input, shape index: {}]
  %s12 = inlined_call_operand.vmem [shape: f32[64,1], index: 12, kind: output, shape index: {}]
  %s13 = sld [smem:[#allocation0]]
  $region70: #{tpu_custom_call.1} parent=0
    _
  %s15 = ssub.s32 1, %s13
  %s16 = scalar_select 0, %s15, %s13
  %v17 = vstv %s11
  %18 = vst [vmem:[#allocation2] sm:$0x1] %v17
  $region1: #{tpu_custom_call.1} parent=0
    #allocation3 [shape = 'u8[512]{0}', space=vmem, size = 0x400, scoped, tag = 'input window, operand 3, single buffered']
    #allocation4 [shape = 's32[1]{0}', space=sflag, size = 0x4, scoped, tag = 'scoped memory for tpu_custom_call.1']
    #allocation5 [shape = 'u8[512]{0}', space=vmem, size = 0x400, scoped, tag = 'input window, operand 5, single buffered']
    #allocation6 [shape = 's32[1]{0}', space=sflag, size = 0x4, scoped, tag = 'scoped memory for tpu_custom_call.1']
    #allocation7 [shape = 'u8[8192]{0}', space=vmem, size = 0x2000, scoped, tag = 'input window, operand 8, single buffered']
    %19 = vsyncpa [#allocation4], 0
    %20 = vsyncpa [#allocation6], 0
    // Predicated region
    $region2: #{tpu_custom_call.1} parent=1 // pred_check
      _
    $region3: #{tpu_custom_call.1} parent=1 // pred_check_branch
      %22 = sbr.rel (0) target = $region5
    $region4: #{tpu_custom_call.1} parent=1 // pred_region
      _
    $region5: #{tpu_custom_call.1} parent=1 // pred_fallthru
      _
    // Predicated region
    $region6: #{tpu_custom_call.1} parent=1 // pred_check
      _
    $region7: #{tpu_custom_call.1} parent=1 // pred_check_branch
      %24 = sbr.rel (0) target = $region9
    $region8: #{tpu_custom_call.1} parent=1 // pred_region
      _
    $region9: #{tpu_custom_call.1} parent=1 // pred_fallthru
      _
    // Predicated region
    $region10: #{tpu_custom_call.1} parent=1 // pred_check
      _
    $region11: #{tpu_custom_call.1} parent=1 // pred_check_branch
      %26 = sbr.rel (0) target = $region13
    $region12: #{tpu_custom_call.1} parent=1 // pred_region
      _
    $region13: #{tpu_custom_call.1} parent=1 // pred_fallthru
      _
    // Predicated region
    $region14: #{tpu_custom_call.1} parent=1 // pred_check
      _
    $region15: #{tpu_custom_call.1} parent=1 // pred_check_branch
      %28 = sbr.rel (0) target = $region17
    $region16: #{tpu_custom_call.1} parent=1 // pred_region
      %s30 = ssub.s32 16, 16
      %31 = vsyncadd [#allocation4], %s30
      %s33 = sshll.u32 [#allocation3], 4
      %s34 = int_to_ptr.vmem [resolvable:$true] %s33
      %36 = dma.hbm_to_vmem [thread:$0]  %s3, 16, %s34, [#allocation4]
    $region17: #{tpu_custom_call.1} parent=1 // pred_fallthru
      _
    // Predicated region
    $region18: #{tpu_custom_call.1} parent=1 // pred_check
      _
    $region19: #{tpu_custom_call.1} parent=1 // pred_check_branch
      %38 = sbr.rel (0) target = $region21
    $region20: #{tpu_custom_call.1} parent=1 // pred_region
      _
    $region21: #{tpu_custom_call.1} parent=1 // pred_fallthru
      _
    // Predicated region
    $region22: #{tpu_custom_call.1} parent=1 // pred_check
      _
    $region23: #{tpu_custom_call.1} parent=1 // pred_check_branch
      %40 = sbr.rel (0) target = $region25
    $region24: #{tpu_custom_call.1} parent=1 // pred_region
      %s42 = ssub.s32 16, 16
      %43 = vsyncadd [#allocation6], %s42
      %s45 = sshll.u32 [#allocation5], 4
      %s46 = int_to_ptr.vmem [resolvable:$true] %s45
      %48 = dma.hbm_to_vmem [thread:$0]  %s5, 16, %s46, [#allocation6]
    $region25: #{tpu_custom_call.1} parent=1 // pred_fallthru
      _
    // Predicated region
    $region26: #{tpu_custom_call.1} parent=1 // pred_check
      _
    $region27: #{tpu_custom_call.1} parent=1 // pred_check_branch
      %50 = sbr.rel (0) target = $region29
    $region28: #{tpu_custom_call.1} parent=1 // pred_region
      _
    $region29: #{tpu_custom_call.1} parent=1 // pred_fallthru
      _
    // Predicated region
    $region30: #{tpu_custom_call.1} parent=1 // pred_check
      _
    $region31: #{tpu_custom_call.1} parent=1 // pred_check_branch
      %52 = sbr.rel (0) target = $region33
    $region32: #{tpu_custom_call.1} parent=1 // pred_region
      _
    $region33: #{tpu_custom_call.1} parent=1 // pred_fallthru
      _
    // Predicated region
    $region34: #{tpu_custom_call.1} parent=1 // pred_check
      _
    $region35: #{tpu_custom_call.1} parent=1 // pred_check_branch
      %54 = sbr.rel (0) target = $region37
    $region36: #{tpu_custom_call.1} parent=1 // pred_region
      %s56 = ssub.s32 256, 256
      %57 = vsyncadd [#allocation6], %s56
      %s58 = sshll.u32 [#allocation7], 4
      %s59 = int_to_ptr.vmem [resolvable:$true] %s58
      %64 = dma.hbm_to_vmem [thread:$0]  %s8, 256, %s59, [#allocation6], 64, 64, 4
    $region37: #{tpu_custom_call.1} parent=1 // pred_fallthru
      _
    // Predicated region
    $region38: #{tpu_custom_call.1} parent=1 // pred_check
      _
    $region39: #{tpu_custom_call.1} parent=1 // pred_check_branch
      %66 = sbr.rel (0) target = $region41
    $region40: #{tpu_custom_call.1} parent=1 // pred_region
      _
    $region41: #{tpu_custom_call.1} parent=1 // pred_fallthru
      _
    // Predicated region
    $region42: #{tpu_custom_call.1} parent=1 // pred_check
      _
    $region43: #{tpu_custom_call.1} parent=1 // pred_check_branch
      %68 = sbr.rel (0) target = $region45
    $region44: #{tpu_custom_call.1} parent=1 // pred_region
      _
    $region45: #{tpu_custom_call.1} parent=1 // pred_fallthru
      _
    // Predicated region
    $region46: #{tpu_custom_call.1} parent=1 // pred_check
      _
    $region47: #{tpu_custom_call.1} parent=1 // pred_check_branch
      %70 = sbr.rel (0) target = $region49
    $region48: #{tpu_custom_call.1} parent=1 // pred_region
      _
    $region49: #{tpu_custom_call.1} parent=1 // pred_fallthru
      _
    // Predicated region
    $region50: #{tpu_custom_call.1} parent=1 // pred_check
      _
    $region51: #{tpu_custom_call.1} parent=1 // pred_check_branch
      %72 = sbr.rel (0) target = $region53
    $region52: #{tpu_custom_call.1} parent=1 // pred_region
      %73 = dma.done [#allocation4], 16
    $region53: #{tpu_custom_call.1} parent=1 // pred_fallthru
      _
    // Predicated region
    $region54: #{tpu_custom_call.1} parent=1 // pred_check
      _
    $region55: #{tpu_custom_call.1} parent=1 // pred_check_branch
      %75 = sbr.rel (0) target = $region57
    $region56: #{tpu_custom_call.1} parent=1 // pred_region
      %76 = dma.done [#allocation6], 16
    $region57: #{tpu_custom_call.1} parent=1 // pred_fallthru
      _
    // Predicated region
    $region58: #{tpu_custom_call.1} parent=1 // pred_check
      _
    $region59: #{tpu_custom_call.1} parent=1 // pred_check_branch
      %78 = sbr.rel (0) target = $region61
    $region60: #{tpu_custom_call.1} parent=1 // pred_region
      %79 = dma.done [#allocation6], 256
    $region61: #{tpu_custom_call.1} parent=1 // pred_fallthru
      _
    %v81 = vld [vmem:[%s0] sm:$0xf]
    %v82 = vld [vmem:[%s0 + $0x4] sm:$0xf]
    %v83 = vld [vmem:[%s0 + $0x8] sm:$0xf]
    %v84 = vld [vmem:[%s0 + $0xc] sm:$0xf]
    %v85 = vld [vmem:[%s0 + $0x10] sm:$0xf]
    %v86 = vld [vmem:[%s0 + $0x14] sm:$0xf]
    %v87 = vld [vmem:[%s0 + $0x18] sm:$0xf]
    %v88 = vld [vmem:[%s0 + $0x1c] sm:$0xf]
    %v89 = vld [vmem:[%s0 + $0x20] sm:$0xf]
    %v90 = vld [vmem:[%s0 + $0x24] sm:$0xf]
    %v91 = vld [vmem:[%s0 + $0x28] sm:$0xf]
    %v92 = vld [vmem:[%s0 + $0x2c] sm:$0xf]
    %v93 = vld [vmem:[%s0 + $0x30] sm:$0xf]
    %v94 = vld [vmem:[%s0 + $0x34] sm:$0xf]
    %v95 = vld [vmem:[%s0 + $0x38] sm:$0xf]
    %v96 = vld [vmem:[%s0 + $0x3c] sm:$0xf]
    %v97 = vld [vmem:[%s0 + $0x40] sm:$0xf]
    %v98 = vld [vmem:[%s0 + $0x44] sm:$0xf]
    %v99 = vld [vmem:[%s0 + $0x48] sm:$0xf]
    %v100 = vld [vmem:[%s0 + $0x4c] sm:$0xf]
    %v101 = vld [vmem:[%s0 + $0x50] sm:$0xf]
    %v102 = vld [vmem:[%s0 + $0x54] sm:$0xf]
    %v103 = vld [vmem:[%s0 + $0x58] sm:$0xf]
    %v104 = vld [vmem:[%s0 + $0x5c] sm:$0xf]
    %v105 = vld [vmem:[%s0 + $0x60] sm:$0xf]
    %v106 = vld [vmem:[%s0 + $0x64] sm:$0xf]
    %v107 = vld [vmem:[%s0 + $0x68] sm:$0xf]
    %v108 = vld [vmem:[%s0 + $0x6c] sm:$0xf]
    %v109 = vld [vmem:[%s0 + $0x70] sm:$0xf]
    %v110 = vld [vmem:[%s0 + $0x74] sm:$0xf]
    %v111 = vld [vmem:[%s0 + $0x78] sm:$0xf]
    %v112 = vld [vmem:[%s0 + $0x7c] sm:$0xf]
    %v113 = vld [vmem:[%s0 + $0x80] sm:$0xf]
    %v114 = vld [vmem:[%s0 + $0x84] sm:$0xf]
    %v115 = vld [vmem:[%s0 + $0x88] sm:$0xf]
    %v116 = vld [vmem:[%s0 + $0x8c] sm:$0xf]
    %v117 = vld [vmem:[%s0 + $0x90] sm:$0xf]
    %v118 = vld [vmem:[%s0 + $0x94] sm:$0xf]
    %v119 = vld [vmem:[%s0 + $0x98] sm:$0xf]
    %v120 = vld [vmem:[%s0 + $0x9c] sm:$0xf]
    %v121 = vld [vmem:[%s0 + $0xa0] sm:$0xf]
    %v122 = vld [vmem:[%s0 + $0xa4] sm:$0xf]
    %v123 = vld [vmem:[%s0 + $0xa8] sm:$0xf]
    %v124 = vld [vmem:[%s0 + $0xac] sm:$0xf]
    %v125 = vld [vmem:[%s0 + $0xb0] sm:$0xf]
    %v126 = vld [vmem:[%s0 + $0xb4] sm:$0xf]
    %v127 = vld [vmem:[%s0 + $0xb8] sm:$0xf]
    %v128 = vld [vmem:[%s0 + $0xbc] sm:$0xf]
    %v129 = vld [vmem:[%s0 + $0xc0] sm:$0xf]
    %v130 = vld [vmem:[%s0 + $0xc4] sm:$0xf]
    %v131 = vld [vmem:[%s0 + $0xc8] sm:$0xf]
    %v132 = vld [vmem:[%s0 + $0xcc] sm:$0xf]
    %v133 = vld [vmem:[%s0 + $0xd0] sm:$0xf]
    %v134 = vld [vmem:[%s0 + $0xd4] sm:$0xf]
    %v135 = vld [vmem:[%s0 + $0xd8] sm:$0xf]
    %v136 = vld [vmem:[%s0 + $0xdc] sm:$0xf]
    %v137 = vld [vmem:[%s0 + $0xe0] sm:$0xf]
    %v138 = vld [vmem:[%s0 + $0xe4] sm:$0xf]
    %v139 = vld [vmem:[%s0 + $0xe8] sm:$0xf]
    %v140 = vld [vmem:[%s0 + $0xec] sm:$0xf]
    %v141 = vld [vmem:[%s0 + $0xf0] sm:$0xf]
    %v142 = vld [vmem:[%s0 + $0xf4] sm:$0xf]
    %v143 = vld [vmem:[%s0 + $0xf8] sm:$0xf]
    %v144 = vld [vmem:[%s0 + $0xfc] sm:$0xf]
    %v145 = vld [vmem:[%s1] sm:$0xf]
    %v146 = vld [vmem:[%s1 + $0x4] sm:$0xf]
    %v147 = vld [vmem:[%s1 + $0x8] sm:$0xf]
    %v148 = vld [vmem:[%s1 + $0xc] sm:$0xf]
    %v149 = vld [vmem:[%s1 + $0x10] sm:$0xf]
    %v150 = vld [vmem:[%s1 + $0x14] sm:$0xf]
    %v151 = vld [vmem:[%s1 + $0x18] sm:$0xf]
    %v152 = vld [vmem:[%s1 + $0x1c] sm:$0xf]
    %v153 = vld [vmem:[%s1 + $0x20] sm:$0xf]
    %v154 = vld [vmem:[%s1 + $0x24] sm:$0xf]
    %v155 = vld [vmem:[%s1 + $0x28] sm:$0xf]
    %v156 = vld [vmem:[%s1 + $0x2c] sm:$0xf]
    %v157 = vld [vmem:[%s1 + $0x30] sm:$0xf]
    %v158 = vld [vmem:[%s1 + $0x34] sm:$0xf]
    %v159 = vld [vmem:[%s1 + $0x38] sm:$0xf]
    %v160 = vld [vmem:[%s1 + $0x3c] sm:$0xf]
    %v161 = vld [vmem:[%s1 + $0x40] sm:$0xf]
    %v162 = vld [vmem:[%s1 + $0x44] sm:$0xf]
    %v163 = vld [vmem:[%s1 + $0x48] sm:$0xf]
    %v164 = vld [vmem:[%s1 + $0x4c] sm:$0xf]
    %v165 = vld [vmem:[%s1 + $0x50] sm:$0xf]
    %v166 = vld [vmem:[%s1 + $0x54] sm:$0xf]
    %v167 = vld [vmem:[%s1 + $0x58] sm:$0xf]
    %v168 = vld [vmem:[%s1 + $0x5c] sm:$0xf]
    %v169 = vld [vmem:[%s1 + $0x60] sm:$0xf]
    %v170 = vld [vmem:[%s1 + $0x64] sm:$0xf]
    %v171 = vld [vmem:[%s1 + $0x68] sm:$0xf]
    %v172 = vld [vmem:[%s1 + $0x6c] sm:$0xf]
    %v173 = vld [vmem:[%s1 + $0x70] sm:$0xf]
    %v174 = vld [vmem:[%s1 + $0x74] sm:$0xf]
    %v175 = vld [vmem:[%s1 + $0x78] sm:$0xf]
    %v176 = vld [vmem:[%s1 + $0x7c] sm:$0xf]
    %v177 = vld [vmem:[%s1 + $0x80] sm:$0xf]
    %v178 = vld [vmem:[%s1 + $0x84] sm:$0xf]
    %v179 = vld [vmem:[%s1 + $0x88] sm:$0xf]
    %v180 = vld [vmem:[%s1 + $0x8c] sm:$0xf]
    %v181 = vld [vmem:[%s1 + $0x90] sm:$0xf]
    %v182 = vld [vmem:[%s1 + $0x94] sm:$0xf]
    %v183 = vld [vmem:[%s1 + $0x98] sm:$0xf]
    %v184 = vld [vmem:[%s1 + $0x9c] sm:$0xf]
    %v185 = vld [vmem:[%s1 + $0xa0] sm:$0xf]
    %v186 = vld [vmem:[%s1 + $0xa4] sm:$0xf]
    %v187 = vld [vmem:[%s1 + $0xa8] sm:$0xf]
    %v188 = vld [vmem:[%s1 + $0xac] sm:$0xf]
    %v189 = vld [vmem:[%s1 + $0xb0] sm:$0xf]
    %v190 = vld [vmem:[%s1 + $0xb4] sm:$0xf]
    %v191 = vld [vmem:[%s1 + $0xb8] sm:$0xf]
    %v192 = vld [vmem:[%s1 + $0xbc] sm:$0xf]
    %v193 = vld [vmem:[%s1 + $0xc0] sm:$0xf]
    %v194 = vld [vmem:[%s1 + $0xc4] sm:$0xf]
    %v195 = vld [vmem:[%s1 + $0xc8] sm:$0xf]
    %v196 = vld [vmem:[%s1 + $0xcc] sm:$0xf]
    %v197 = vld [vmem:[%s1 + $0xd0] sm:$0xf]
    %v198 = vld [vmem:[%s1 + $0xd4] sm:$0xf]
    %v199 = vld [vmem:[%s1 + $0xd8] sm:$0xf]
    %v200 = vld [vmem:[%s1 + $0xdc] sm:$0xf]
    %v201 = vld [vmem:[%s1 + $0xe0] sm:$0xf]
    %v202 = vld [vmem:[%s1 + $0xe4] sm:$0xf]
    %v203 = vld [vmem:[%s1 + $0xe8] sm:$0xf]
    %v204 = vld [vmem:[%s1 + $0xec] sm:$0xf]
    %v205 = vld [vmem:[%s1 + $0xf0] sm:$0xf]
    %v206 = vld [vmem:[%s1 + $0xf4] sm:$0xf]
    %v207 = vld [vmem:[%s1 + $0xf8] sm:$0xf]
    %v208 = vld [vmem:[%s1 + $0xfc] sm:$0xf]
    %v225 = vunpack.c.l.b16 %v81
    %v226 = vunpack.c.l.b16 %v82
    %v227 = vunpack.c.l.b16 %v83
    %v228 = vunpack.c.l.b16 %v84
    %v229 = vunpack.c.l.b16 %v85
    %v230 = vunpack.c.l.b16 %v86
    %v231 = vunpack.c.l.b16 %v87
    %v232 = vunpack.c.l.b16 %v88
    %v233 = vunpack.c.l.b16 %v89
    %v234 = vunpack.c.l.b16 %v90
    %v235 = vunpack.c.l.b16 %v91
    %v236 = vunpack.c.l.b16 %v92
    %v237 = vunpack.c.l.b16 %v93
    %v238 = vunpack.c.l.b16 %v94
    %v239 = vunpack.c.l.b16 %v95
    %v240 = vunpack.c.l.b16 %v96
    %v241 = vpack.c.b16 %v226, %v225
    %v242 = vpack.c.b16 %v228, %v227
    %v243 = vpack.c.b16 %v230, %v229
    %v244 = vpack.c.b16 %v232, %v231
    %v245 = vpack.c.b16 %v234, %v233
    %v246 = vpack.c.b16 %v236, %v235
    %v247 = vpack.c.b16 %v238, %v237
    %v248 = vpack.c.b16 %v240, %v239
    %v273 = vunpack.c.l.b16 %v145
    %v274 = vunpack.c.l.b16 %v146
    %v275 = vunpack.c.l.b16 %v147
    %v276 = vunpack.c.l.b16 %v148
    %v277 = vunpack.c.l.b16 %v149
    %v278 = vunpack.c.l.b16 %v150
    %v279 = vunpack.c.l.b16 %v151
    %v280 = vunpack.c.l.b16 %v152
    %v281 = vunpack.c.l.b16 %v153
    %v282 = vunpack.c.l.b16 %v154
    %v283 = vunpack.c.l.b16 %v155
    %v284 = vunpack.c.l.b16 %v156
    %v285 = vunpack.c.l.b16 %v157
    %v286 = vunpack.c.l.b16 %v158
    %v287 = vunpack.c.l.b16 %v159
    %v288 = vunpack.c.l.b16 %v160
    %v289 = vpack.c.b16 %v274, %v273
    %v290 = vpack.c.b16 %v276, %v275
    %v291 = vpack.c.b16 %v278, %v277
    %v292 = vpack.c.b16 %v280, %v279
    %v293 = vpack.c.b16 %v282, %v281
    %v294 = vpack.c.b16 %v284, %v283
    %v295 = vpack.c.b16 %v286, %v285
    %v296 = vpack.c.b16 %v288, %v287
    %305 = vmatprep.subr.bf16.mxu0 0
    %306 = vmatpush1.bf16.msra.mxu0 %v289
    %307 = vmatprep.subr.bf16.mxu0 0
    %308 = vmatpush1.bf16.msra.mxu0 %v290
    %309 = vmatprep.subr.bf16.mxu0 0
    %310 = vmatpush1.bf16.msra.mxu0 %v291
    %311 = vmatprep.subr.bf16.mxu0 0
    %312 = vmatpush1.bf16.msra.mxu0 %v292
    %313 = vmatprep.subr.bf16.mxu0 0
    %314 = vmatpush1.bf16.msra.mxu0 %v293
    %315 = vmatprep.subr.bf16.mxu0 0
    %316 = vmatpush1.bf16.msra.mxu0 %v294
    %317 = vmatprep.subr.bf16.mxu0 0
    %318 = vmatpush1.bf16.msra.mxu0 %v295
    %319 = vmatprep.subr.bf16.mxu0 0
    %320 = vmatpush1.bf16.msra.mxu0 %v296
    %321 = vmatprep.subr.bf16.mxu0 0
    %322 = vmatpush1.bf16.msra.mxu0 0
    %323 = vmatprep.subr.bf16.mxu0 0
    %324 = vmatpush1.bf16.msra.mxu0 0
    %325 = vmatprep.subr.bf16.mxu0 0
    %326 = vmatpush1.bf16.msra.mxu0 0
    %327 = vmatprep.subr.bf16.mxu0 0
    %328 = vmatpush1.bf16.msra.mxu0 0
    %329 = vmatprep.subr.bf16.mxu0 0
    %330 = vmatpush1.bf16.msra.mxu0 0
    %331 = vmatprep.subr.bf16.mxu0 0
    %332 = vmatpush1.bf16.msra.mxu0 0
    %333 = vmatprep.subr.bf16.mxu0 0
    %334 = vmatpush1.bf16.msra.mxu0 0
    %335 = vmatprep.subr.bf16.mxu0 0
    %336 = vmatpush1.bf16.msra.mxu0 0
    %337 = vmatprep.mubr.bf16.mxu0 0
    %338 = vmatmul.mubr.bf16.gmra.mrb[0].mxu0 %v241
    %v339 = vpop.f32.mrb[0].mxu0
    %v340 = vadd.f32 0.0, %v339
    %v341 = vpop.f32.mrb[0].mxu0
    %v342 = vpop.f32.mrb[0].mxu0
    %v343 = vadd.f32 0.0, %v342
    %v344 = vpop.f32.mrb[0].mxu0
    %345 = vmatprep.mubr.bf16.mxu0 0
    %346 = vmatmul.mubr.bf16.gmra.mrb[0].mxu0 %v242
    %v347 = vpop.f32.mrb[0].mxu0
    %v348 = vadd.f32 0.0, %v347
    %v349 = vpop.f32.mrb[0].mxu0
    %v350 = vpop.f32.mrb[0].mxu0
    %v351 = vadd.f32 0.0, %v350
    %v352 = vpop.f32.mrb[0].mxu0
    %353 = vmatprep.mubr.bf16.mxu0 0
    %354 = vmatmul.mubr.bf16.gmra.mrb[0].mxu0 %v243
    %v355 = vpop.f32.mrb[0].mxu0
    %v356 = vadd.f32 0.0, %v355
    %v357 = vpop.f32.mrb[0].mxu0
    %v358 = vpop.f32.mrb[0].mxu0
    %v359 = vadd.f32 0.0, %v358
    %v360 = vpop.f32.mrb[0].mxu0
    %361 = vmatprep.mubr.bf16.mxu0 0
    %362 = vmatmul.mubr.bf16.gmra.mrb[0].mxu0 %v244
    %v363 = vpop.f32.mrb[0].mxu0
    %v364 = vadd.f32 0.0, %v363
    %v365 = vpop.f32.mrb[0].mxu0
    %v366 = vpop.f32.mrb[0].mxu0
    %v367 = vadd.f32 0.0, %v366
    %v368 = vpop.f32.mrb[0].mxu0
    %369 = vmatprep.mubr.bf16.mxu0 0
    %370 = vmatmul.mubr.bf16.gmra.mrb[0].mxu0 %v245
    %v371 = vpop.f32.mrb[0].mxu0
    %v372 = vadd.f32 0.0, %v371
    %v373 = vpop.f32.mrb[0].mxu0
    %v374 = vpop.f32.mrb[0].mxu0
    %v375 = vadd.f32 0.0, %v374
    %v376 = vpop.f32.mrb[0].mxu0
    %377 = vmatprep.mubr.bf16.mxu0 0
    %378 = vmatmul.mubr.bf16.gmra.mrb[0].mxu0 %v246
    %v379 = vpop.f32.mrb[0].mxu0
    %v380 = vadd.f32 0.0, %v379
    %v381 = vpop.f32.mrb[0].mxu0
    %v382 = vpop.f32.mrb[0].mxu0
    %v383 = vadd.f32 0.0, %v382
    %v384 = vpop.f32.mrb[0].mxu0
    %385 = vmatprep.mubr.bf16.mxu0 0
    %386 = vmatmul.mubr.bf16.gmra.mrb[0].mxu0 %v247
    %v387 = vpop.f32.mrb[0].mxu0
    %v388 = vadd.f32 0.0, %v387
    %v389 = vpop.f32.mrb[0].mxu0
    %v390 = vpop.f32.mrb[0].mxu0
    %v391 = vadd.f32 0.0, %v390
    %v392 = vpop.f32.mrb[0].mxu0
    %393 = vmatprep.mubr.bf16.mxu0 0
    %394 = vmatmul.mubr.bf16.gmra.mrb[0].mxu0 %v248
    %v395 = vpop.f32.mrb[0].mxu0
    %v396 = vadd.f32 0.0, %v395
    %v397 = vpop.f32.mrb[0].mxu0
    %v398 = vpop.f32.mrb[0].mxu0
    %v399 = vadd.f32 0.0, %v398
    %v400 = vpop.f32.mrb[0].mxu0
    %401 = vdwg.mxu0
    %v418 = vunpack.c.l.b16 %v97
    %v419 = vunpack.c.l.b16 %v98
    %v420 = vunpack.c.l.b16 %v99
    %v421 = vunpack.c.l.b16 %v100
    %v422 = vunpack.c.l.b16 %v101
    %v423 = vunpack.c.l.b16 %v102
    %v424 = vunpack.c.l.b16 %v103
    %v425 = vunpack.c.l.b16 %v104
    %v426 = vunpack.c.l.b16 %v105
    %v427 = vunpack.c.l.b16 %v106
    %v428 = vunpack.c.l.b16 %v107
    %v429 = vunpack.c.l.b16 %v108
    %v430 = vunpack.c.l.b16 %v109
    %v431 = vunpack.c.l.b16 %v110
    %v432 = vunpack.c.l.b16 %v111
    %v433 = vunpack.c.l.b16 %v112
    %v434 = vpack.c.b16 %v419, %v418
    %v435 = vpack.c.b16 %v421, %v420
    %v436 = vpack.c.b16 %v423, %v422
    %v437 = vpack.c.b16 %v425, %v424
    %v438 = vpack.c.b16 %v427, %v426
    %v439 = vpack.c.b16 %v429, %v428
    %v440 = vpack.c.b16 %v431, %v430
    %v441 = vpack.c.b16 %v433, %v432
    %v466 = vunpack.c.l.b16 %v161
    %v467 = vunpack.c.l.b16 %v162
    %v468 = vunpack.c.l.b16 %v163
    %v469 = vunpack.c.l.b16 %v164
    %v470 = vunpack.c.l.b16 %v165
    %v471 = vunpack.c.l.b16 %v166
    %v472 = vunpack.c.l.b16 %v167
    %v473 = vunpack.c.l.b16 %v168
    %v474 = vunpack.c.l.b16 %v169
    %v475 = vunpack.c.l.b16 %v170
    %v476 = vunpack.c.l.b16 %v171
    %v477 = vunpack.c.l.b16 %v172
    %v478 = vunpack.c.l.b16 %v173
    %v479 = vunpack.c.l.b16 %v174
    %v480 = vunpack.c.l.b16 %v175
    %v481 = vunpack.c.l.b16 %v176
    %v482 = vpack.c.b16 %v467, %v466
    %v483 = vpack.c.b16 %v469, %v468
    %v484 = vpack.c.b16 %v471, %v470
    %v485 = vpack.c.b16 %v473, %v472
    %v486 = vpack.c.b16 %v475, %v474
    %v487 = vpack.c.b16 %v477, %v476
    %v488 = vpack.c.b16 %v479, %v478
    %v489 = vpack.c.b16 %v481, %v480
    %498 = vmatprep.subr.bf16.mxu0 0
    %499 = vmatpush1.bf16.msra.mxu0 %v482
    %500 = vmatprep.subr.bf16.mxu0 0
    %501 = vmatpush1.bf16.msra.mxu0 %v483
    %502 = vmatprep.subr.bf16.mxu0 0
    %503 = vmatpush1.bf16.msra.mxu0 %v484
    %504 = vmatprep.subr.bf16.mxu0 0
    %505 = vmatpush1.bf16.msra.mxu0 %v485
    %506 = vmatprep.subr.bf16.mxu0 0
    %507 = vmatpush1.bf16.msra.mxu0 %v486
    %508 = vmatprep.subr.bf16.mxu0 0
    %509 = vmatpush1.bf16.msra.mxu0 %v487
    %510 = vmatprep.subr.bf16.mxu0 0
    %511 = vmatpush1.bf16.msra.mxu0 %v488
    %512 = vmatprep.subr.bf16.mxu0 0
    %513 = vmatpush1.bf16.msra.mxu0 %v489
    %514 = vmatprep.subr.bf16.mxu0 0
    %515 = vmatpush1.bf16.msra.mxu0 0
    %516 = vmatprep.subr.bf16.mxu0 0
    %517 = vmatpush1.bf16.msra.mxu0 0
    %518 = vmatprep.subr.bf16.mxu0 0
    %519 = vmatpush1.bf16.msra.mxu0 0
    %520 = vmatprep.subr.bf16.mxu0 0
    %521 = vmatpush1.bf16.msra.mxu0 0
    %522 = vmatprep.subr.bf16.mxu0 0
    %523 = vmatpush1.bf16.msra.mxu0 0
    %524 = vmatprep.subr.bf16.mxu0 0
    %525 = vmatpush1.bf16.msra.mxu0 0
    %526 = vmatprep.subr.bf16.mxu0 0
    %527 = vmatpush1.bf16.msra.mxu0 0
    %528 = vmatprep.subr.bf16.mxu0 0
    %529 = vmatpush1.bf16.msra.mxu0 0
    %530 = vmatprep.mubr.bf16.mxu0 0
    %531 = vmatmul.mubr.bf16.gmra.mrb[0].mxu0 %v434
    %v532 = vpop.f32.mrb[0].mxu0
    %v533 = vadd.f32 0.0, %v532
    %v534 = vpop.f32.mrb[0].mxu0
    %v535 = vpop.f32.mrb[0].mxu0
    %v536 = vadd.f32 0.0, %v535
    %v537 = vpop.f32.mrb[0].mxu0
    %538 = vmatprep.mubr.bf16.mxu0 0
    %539 = vmatmul.mubr.bf16.gmra.mrb[0].mxu0 %v435
    %v540 = vpop.f32.mrb[0].mxu0
    %v541 = vadd.f32 0.0, %v540
    %v542 = vpop.f32.mrb[0].mxu0
    %v543 = vpop.f32.mrb[0].mxu0
    %v544 = vadd.f32 0.0, %v543
    %v545 = vpop.f32.mrb[0].mxu0
    %546 = vmatprep.mubr.bf16.mxu0 0
    %547 = vmatmul.mubr.bf16.gmra.mrb[0].mxu0 %v436
    %v548 = vpop.f32.mrb[0].mxu0
    %v549 = vadd.f32 0.0, %v548
    %v550 = vpop.f32.mrb[0].mxu0
    %v551 = vpop.f32.mrb[0].mxu0
    %v552 = vadd.f32 0.0, %v551
    %v553 = vpop.f32.mrb[0].mxu0
    %554 = vmatprep.mubr.bf16.mxu0 0
    %555 = vmatmul.mubr.bf16.gmra.mrb[0].mxu0 %v437
    %v556 = vpop.f32.mrb[0].mxu0
    %v557 = vadd.f32 0.0, %v556
    %v558 = vpop.f32.mrb[0].mxu0
    %v559 = vpop.f32.mrb[0].mxu0
    %v560 = vadd.f32 0.0, %v559
    %v561 = vpop.f32.mrb[0].mxu0
    %562 = vmatprep.mubr.bf16.mxu0 0
    %563 = vmatmul.mubr.bf16.gmra.mrb[0].mxu0 %v438
    %v564 = vpop.f32.mrb[0].mxu0
    %v565 = vadd.f32 0.0, %v564
    %v566 = vpop.f32.mrb[0].mxu0
    %v567 = vpop.f32.mrb[0].mxu0
    %v568 = vadd.f32 0.0, %v567
    %v569 = vpop.f32.mrb[0].mxu0
    %570 = vmatprep.mubr.bf16.mxu0 0
    %571 = vmatmul.mubr.bf16.gmra.mrb[0].mxu0 %v439
    %v572 = vpop.f32.mrb[0].mxu0
    %v573 = vadd.f32 0.0, %v572
    %v574 = vpop.f32.mrb[0].mxu0
    %v575 = vpop.f32.mrb[0].mxu0
    %v576 = vadd.f32 0.0, %v575
    %v577 = vpop.f32.mrb[0].mxu0
    %578 = vmatprep.mubr.bf16.mxu0 0
    %579 = vmatmul.mubr.bf16.gmra.mrb[0].mxu0 %v440
    %v580 = vpop.f32.mrb[0].mxu0
    %v581 = vadd.f32 0.0, %v580
    %v582 = vpop.f32.mrb[0].mxu0
    %v583 = vpop.f32.mrb[0].mxu0
    %v584 = vadd.f32 0.0, %v583
    %v585 = vpop.f32.mrb[0].mxu0
    %586 = vmatprep.mubr.bf16.mxu0 0
    %587 = vmatmul.mubr.bf16.gmra.mrb[0].mxu0 %v441
    %v588 = vpop.f32.mrb[0].mxu0
    %v589 = vadd.f32 0.0, %v588
    %v590 = vpop.f32.mrb[0].mxu0
    %v591 = vpop.f32.mrb[0].mxu0
    %v592 = vadd.f32 0.0, %v591
    %v593 = vpop.f32.mrb[0].mxu0
    %594 = vdwg.mxu0
    %v611 = vunpack.c.l.b16 %v113
    %v612 = vunpack.c.l.b16 %v114
    %v613 = vunpack.c.l.b16 %v115
    %v614 = vunpack.c.l.b16 %v116
    %v615 = vunpack.c.l.b16 %v117
    %v616 = vunpack.c.l.b16 %v118
    %v617 = vunpack.c.l.b16 %v119
    %v618 = vunpack.c.l.b16 %v120
    %v619 = vunpack.c.l.b16 %v121
    %v620 = vunpack.c.l.b16 %v122
    %v621 = vunpack.c.l.b16 %v123
    %v622 = vunpack.c.l.b16 %v124
    %v623 = vunpack.c.l.b16 %v125
    %v624 = vunpack.c.l.b16 %v126
    %v625 = vunpack.c.l.b16 %v127
    %v626 = vunpack.c.l.b16 %v128
    %v627 = vpack.c.b16 %v612, %v611
    %v628 = vpack.c.b16 %v614, %v613
    %v629 = vpack.c.b16 %v616, %v615
    %v630 = vpack.c.b16 %v618, %v617
    %v631 = vpack.c.b16 %v620, %v619
    %v632 = vpack.c.b16 %v622, %v621
    %v633 = vpack.c.b16 %v624, %v623
    %v634 = vpack.c.b16 %v626, %v625
    %v659 = vunpack.c.l.b16 %v177
    %v660 = vunpack.c.l.b16 %v178
    %v661 = vunpack.c.l.b16 %v179
    %v662 = vunpack.c.l.b16 %v180
    %v663 = vunpack.c.l.b16 %v181
    %v664 = vunpack.c.l.b16 %v182
    %v665 = vunpack.c.l.b16 %v183
    %v666 = vunpack.c.l.b16 %v184
    %v667 = vunpack.c.l.b16 %v185
    %v668 = vunpack.c.l.b16 %v186
    %v669 = vunpack.c.l.b16 %v187
    %v670 = vunpack.c.l.b16 %v188
    %v671 = vunpack.c.l.b16 %v189
    %v672 = vunpack.c.l.b16 %v190
    %v673 = vunpack.c.l.b16 %v191
    %v674 = vunpack.c.l.b16 %v192
    %v675 = vpack.c.b16 %v660, %v659
    %v676 = vpack.c.b16 %v662, %v661
    %v677 = vpack.c.b16 %v664, %v663
    %v678 = vpack.c.b16 %v666, %v665
    %v679 = vpack.c.b16 %v668, %v667
    %v680 = vpack.c.b16 %v670, %v669
    %v681 = vpack.c.b16 %v672, %v671
    %v682 = vpack.c.b16 %v674, %v673
    %691 = vmatprep.subr.bf16.mxu0 0
    %692 = vmatpush1.bf16.msra.mxu0 %v675
    %693 = vmatprep.subr.bf16.mxu0 0
    %694 = vmatpush1.bf16.msra.mxu0 %v676
    %695 = vmatprep.subr.bf16.mxu0 0
    %696 = vmatpush1.bf16.msra.mxu0 %v677
    %697 = vmatprep.subr.bf16.mxu0 0
    %698 = vmatpush1.bf16.msra.mxu0 %v678
    %699 = vmatprep.subr.bf16.mxu0 0
    %700 = vmatpush1.bf16.msra.mxu0 %v679
    %701 = vmatprep.subr.bf16.mxu0 0
    %702 = vmatpush1.bf16.msra.mxu0 %v680
    %703 = vmatprep.subr.bf16.mxu0 0
    %704 = vmatpush1.bf16.msra.mxu0 %v681
    %705 = vmatprep.subr.bf16.mxu0 0
    %706 = vmatpush1.bf16.msra.mxu0 %v682
    %707 = vmatprep.subr.bf16.mxu0 0
    %708 = vmatpush1.bf16.msra.mxu0 0
    %709 = vmatprep.subr.bf16.mxu0 0
    %710 = vmatpush1.bf16.msra.mxu0 0
    %711 = vmatprep.subr.bf16.mxu0 0
    %712 = vmatpush1.bf16.msra.mxu0 0
    %713 = vmatprep.subr.bf16.mxu0 0
    %714 = vmatpush1.bf16.msra.mxu0 0
    %715 = vmatprep.subr.bf16.mxu0 0
    %716 = vmatpush1.bf16.msra.mxu0 0
    %717 = vmatprep.subr.bf16.mxu0 0
    %718 = vmatpush1.bf16.msra.mxu0 0
    %719 = vmatprep.subr.bf16.mxu0 0
    %720 = vmatpush1.bf16.msra.mxu0 0
    %721 = vmatprep.subr.bf16.mxu0 0
    %722 = vmatpush1.bf16.msra.mxu0 0
    %723 = vmatprep.mubr.bf16.mxu0 0
    %724 = vmatmul.mubr.bf16.gmra.mrb[0].mxu0 %v627
    %v725 = vpop.f32.mrb[0].mxu0
    %v726 = vadd.f32 0.0, %v725
    %v727 = vpop.f32.mrb[0].mxu0
    %v728 = vpop.f32.mrb[0].mxu0
    %v729 = vadd.f32 0.0, %v728
    %v730 = vpop.f32.mrb[0].mxu0
    %731 = vmatprep.mubr.bf16.mxu0 0
    %732 = vmatmul.mubr.bf16.gmra.mrb[0].mxu0 %v628
    %v733 = vpop.f32.mrb[0].mxu0
    %v734 = vadd.f32 0.0, %v733
    %v735 = vpop.f32.mrb[0].mxu0
    %v736 = vpop.f32.mrb[0].mxu0
    %v737 = vadd.f32 0.0, %v736
    %v738 = vpop.f32.mrb[0].mxu0
    %739 = vmatprep.mubr.bf16.mxu0 0
    %740 = vmatmul.mubr.bf16.gmra.mrb[0].mxu0 %v629
    %v741 = vpop.f32.mrb[0].mxu0
    %v742 = vadd.f32 0.0, %v741
    %v743 = vpop.f32.mrb[0].mxu0
    %v744 = vpop.f32.mrb[0].mxu0
    %v745 = vadd.f32 0.0, %v744
    %v746 = vpop.f32.mrb[0].mxu0
    %747 = vmatprep.mubr.bf16.mxu0 0
    %748 = vmatmul.mubr.bf16.gmra.mrb[0].mxu0 %v630
    %v749 = vpop.f32.mrb[0].mxu0
    %v750 = vadd.f32 0.0, %v749
    %v751 = vpop.f32.mrb[0].mxu0
    %v752 = vpop.f32.mrb[0].mxu0
    %v753 = vadd.f32 0.0, %v752
    %v754 = vpop.f32.mrb[0].mxu0
    %755 = vmatprep.mubr.bf16.mxu0 0
    %756 = vmatmul.mubr.bf16.gmra.mrb[0].mxu0 %v631
    %v757 = vpop.f32.mrb[0].mxu0
    %v758 = vadd.f32 0.0, %v757
    %v759 = vpop.f32.mrb[0].mxu0
    %v760 = vpop.f32.mrb[0].mxu0
    %v761 = vadd.f32 0.0, %v760
    %v762 = vpop.f32.mrb[0].mxu0
    %763 = vmatprep.mubr.bf16.mxu0 0
    %764 = vmatmul.mubr.bf16.gmra.mrb[0].mxu0 %v632
    %v765 = vpop.f32.mrb[0].mxu0
    %v766 = vadd.f32 0.0, %v765
    %v767 = vpop.f32.mrb[0].mxu0
    %v768 = vpop.f32.mrb[0].mxu0
    %v769 = vadd.f32 0.0, %v768
    %v770 = vpop.f32.mrb[0].mxu0
    %771 = vmatprep.mubr.bf16.mxu0 0
    %772 = vmatmul.mubr.bf16.gmra.mrb[0].mxu0 %v633
    %v773 = vpop.f32.mrb[0].mxu0
    %v774 = vadd.f32 0.0, %v773
    %v775 = vpop.f32.mrb[0].mxu0
    %v776 = vpop.f32.mrb[0].mxu0
    %v777 = vadd.f32 0.0, %v776
    %v778 = vpop.f32.mrb[0].mxu0
    %779 = vmatprep.mubr.bf16.mxu0 0
    %780 = vmatmul.mubr.bf16.gmra.mrb[0].mxu0 %v634
    %v781 = vpop.f32.mrb[0].mxu0
    %v782 = vadd.f32 0.0, %v781
    %v783 = vpop.f32.mrb[0].mxu0
    %v784 = vpop.f32.mrb[0].mxu0
    %v785 = vadd.f32 0.0, %v784
    %v786 = vpop.f32.mrb[0].mxu0
    %787 = vdwg.mxu0
    %v804 = vunpack.c.l.b16 %v129
    %v805 = vunpack.c.l.b16 %v130
    %v806 = vunpack.c.l.b16 %v131
    %v807 = vunpack.c.l.b16 %v132
    %v808 = vunpack.c.l.b16 %v133
    %v809 = vunpack.c.l.b16 %v134
    %v810 = vunpack.c.l.b16 %v135
    %v811 = vunpack.c.l.b16 %v136
    %v812 = vunpack.c.l.b16 %v137
    %v813 = vunpack.c.l.b16 %v138
    %v814 = vunpack.c.l.b16 %v139
    %v815 = vunpack.c.l.b16 %v140
    %v816 = vunpack.c.l.b16 %v141
    %v817 = vunpack.c.l.b16 %v142
    %v818 = vunpack.c.l.b16 %v143
    %v819 = vunpack.c.l.b16 %v144
    %v820 = vpack.c.b16 %v805, %v804
    %v821 = vpack.c.b16 %v807, %v806
    %v822 = vpack.c.b16 %v809, %v808
    %v823 = vpack.c.b16 %v811, %v810
    %v824 = vpack.c.b16 %v813, %v812
    %v825 = vpack.c.b16 %v815, %v814
    %v826 = vpack.c.b16 %v817, %v816
    %v827 = vpack.c.b16 %v819, %v818
    %v852 = vunpack.c.l.b16 %v193
    %v853 = vunpack.c.l.b16 %v194
    %v854 = vunpack.c.l.b16 %v195
    %v855 = vunpack.c.l.b16 %v196
    %v856 = vunpack.c.l.b16 %v197
    %v857 = vunpack.c.l.b16 %v198
    %v858 = vunpack.c.l.b16 %v199
    %v859 = vunpack.c.l.b16 %v200
    %v860 = vunpack.c.l.b16 %v201
    %v861 = vunpack.c.l.b16 %v202
    %v862 = vunpack.c.l.b16 %v203
    %v863 = vunpack.c.l.b16 %v204
    %v864 = vunpack.c.l.b16 %v205
    %v865 = vunpack.c.l.b16 %v206
    %v866 = vunpack.c.l.b16 %v207
    %v867 = vunpack.c.l.b16 %v208
    %v868 = vpack.c.b16 %v853, %v852
    %v869 = vpack.c.b16 %v855, %v854
    %v870 = vpack.c.b16 %v857, %v856
    %v871 = vpack.c.b16 %v859, %v858
    %v872 = vpack.c.b16 %v861, %v860
    %v873 = vpack.c.b16 %v863, %v862
    %v874 = vpack.c.b16 %v865, %v864
    %v875 = vpack.c.b16 %v867, %v866
    %884 = vmatprep.subr.bf16.mxu0 0
    %885 = vmatpush1.bf16.msra.mxu0 %v868
    %886 = vmatprep.subr.bf16.mxu0 0
    %887 = vmatpush1.bf16.msra.mxu0 %v869
    %888 = vmatprep.subr.bf16.mxu0 0
    %889 = vmatpush1.bf16.msra.mxu0 %v870
    %890 = vmatprep.subr.bf16.mxu0 0
    %891 = vmatpush1.bf16.msra.mxu0 %v871
    %892 = vmatprep.subr.bf16.mxu0 0
    %893 = vmatpush1.bf16.msra.mxu0 %v872
    %894 = vmatprep.subr.bf16.mxu0 0
    %895 = vmatpush1.bf16.msra.mxu0 %v873
    %896 = vmatprep.subr.bf16.mxu0 0
    %897 = vmatpush1.bf16.msra.mxu0 %v874
    %898 = vmatprep.subr.bf16.mxu0 0
    %899 = vmatpush1.bf16.msra.mxu0 %v875
    %900 = vmatprep.subr.bf16.mxu0 0
    %901 = vmatpush1.bf16.msra.mxu0 0
    %902 = vmatprep.subr.bf16.mxu0 0
    %903 = vmatpush1.bf16.msra.mxu0 0
    %904 = vmatprep.subr.bf16.mxu0 0
    %905 = vmatpush1.bf16.msra.mxu0 0
    %906 = vmatprep.subr.bf16.mxu0 0
    %907 = vmatpush1.bf16.msra.mxu0 0
    %908 = vmatprep.subr.bf16.mxu0 0
    %909 = vmatpush1.bf16.msra.mxu0 0
    %910 = vmatprep.subr.bf16.mxu0 0
    %911 = vmatpush1.bf16.msra.mxu0 0
    %912 = vmatprep.subr.bf16.mxu0 0
    %913 = vmatpush1.bf16.msra.mxu0 0
    %914 = vmatprep.subr.bf16.mxu0 0
    %915 = vmatpush1.bf16.msra.mxu0 0
    %916 = vmatprep.mubr.bf16.mxu0 0
    %917 = vmatmul.mubr.bf16.gmra.mrb[0].mxu0 %v820
    %v918 = vpop.f32.mrb[0].mxu0
    %v919 = vadd.f32 0.0, %v918
    %v920 = vpop.f32.mrb[0].mxu0
    %v921 = vpop.f32.mrb[0].mxu0
    %v922 = vadd.f32 0.0, %v921
    %v923 = vpop.f32.mrb[0].mxu0
    %924 = vmatprep.mubr.bf16.mxu0 0
    %925 = vmatmul.mubr.bf16.gmra.mrb[0].mxu0 %v821
    %v926 = vpop.f32.mrb[0].mxu0
    %v927 = vadd.f32 0.0, %v926
    %v928 = vpop.f32.mrb[0].mxu0
    %v929 = vpop.f32.mrb[0].mxu0
    %v930 = vadd.f32 0.0, %v929
    %v931 = vpop.f32.mrb[0].mxu0
    %932 = vmatprep.mubr.bf16.mxu0 0
    %933 = vmatmul.mubr.bf16.gmra.mrb[0].mxu0 %v822
    %v934 = vpop.f32.mrb[0].mxu0
    %v935 = vadd.f32 0.0, %v934
    %v936 = vpop.f32.mrb[0].mxu0
    %v937 = vpop.f32.mrb[0].mxu0
    %v938 = vadd.f32 0.0, %v937
    %v939 = vpop.f32.mrb[0].mxu0
    %940 = vmatprep.mubr.bf16.mxu0 0
    %941 = vmatmul.mubr.bf16.gmra.mrb[0].mxu0 %v823
    %v942 = vpop.f32.mrb[0].mxu0
    %v943 = vadd.f32 0.0, %v942
    %v944 = vpop.f32.mrb[0].mxu0
    %v945 = vpop.f32.mrb[0].mxu0
    %v946 = vadd.f32 0.0, %v945
    %v947 = vpop.f32.mrb[0].mxu0
    %948 = vmatprep.mubr.bf16.mxu0 0
    %949 = vmatmul.mubr.bf16.gmra.mrb[0].mxu0 %v824
    %v950 = vpop.f32.mrb[0].mxu0
    %v951 = vadd.f32 0.0, %v950
    %v952 = vpop.f32.mrb[0].mxu0
    %v953 = vpop.f32.mrb[0].mxu0
    %v954 = vadd.f32 0.0, %v953
    %v955 = vpop.f32.mrb[0].mxu0
    %956 = vmatprep.mubr.bf16.mxu0 0
    %957 = vmatmul.mubr.bf16.gmra.mrb[0].mxu0 %v825
    %v958 = vpop.f32.mrb[0].mxu0
    %v959 = vadd.f32 0.0, %v958
    %v960 = vpop.f32.mrb[0].mxu0
    %v961 = vpop.f32.mrb[0].mxu0
    %v962 = vadd.f32 0.0, %v961
    %v963 = vpop.f32.mrb[0].mxu0
    %964 = vmatprep.mubr.bf16.mxu0 0
    %965 = vmatmul.mubr.bf16.gmra.mrb[0].mxu0 %v826
    %v966 = vpop.f32.mrb[0].mxu0
    %v967 = vadd.f32 0.0, %v966
    %v968 = vpop.f32.mrb[0].mxu0
    %v969 = vpop.f32.mrb[0].mxu0
    %v970 = vadd.f32 0.0, %v969
    %v971 = vpop.f32.mrb[0].mxu0
    %972 = vmatprep.mubr.bf16.mxu0 0
    %973 = vmatmul.mubr.bf16.gmra.mrb[0].mxu0 %v827
    %v974 = vpop.f32.mrb[0].mxu0
    %v975 = vadd.f32 0.0, %v974
    %v976 = vpop.f32.mrb[0].mxu0
    %v977 = vpop.f32.mrb[0].mxu0
    %v978 = vadd.f32 0.0, %v977
    %v979 = vpop.f32.mrb[0].mxu0
    %980 = vdwg.mxu0
    %v981 = vpack.c.bf16 %v343, %v340
    %v982 = vpack.c.bf16 %v351, %v348
    %v983 = vpack.c.bf16 %v359, %v356
    %v984 = vpack.c.bf16 %v367, %v364
    %v985 = vpack.c.bf16 %v375, %v372
    %v986 = vpack.c.bf16 %v383, %v380
    %v987 = vpack.c.bf16 %v391, %v388
    %v988 = vpack.c.bf16 %v399, %v396
    %v989 = vpack.c.bf16 %v536, %v533
    %v990 = vpack.c.bf16 %v544, %v541
    %v991 = vpack.c.bf16 %v552, %v549
    %v992 = vpack.c.bf16 %v560, %v557
    %v993 = vpack.c.bf16 %v568, %v565
    %v994 = vpack.c.bf16 %v576, %v573
    %v995 = vpack.c.bf16 %v584, %v581
    %v996 = vpack.c.bf16 %v592, %v589
    %v997 = vpack.c.bf16 %v729, %v726
    %v998 = vpack.c.bf16 %v737, %v734
    %v999 = vpack.c.bf16 %v745, %v742
    %v1000 = vpack.c.bf16 %v753, %v750
    %v1001 = vpack.c.bf16 %v761, %v758
    %v1002 = vpack.c.bf16 %v769, %v766
    %v1003 = vpack.c.bf16 %v777, %v774
    %v1004 = vpack.c.bf16 %v785, %v782
    %v1005 = vpack.c.bf16 %v922, %v919
    %v1006 = vpack.c.bf16 %v930, %v927
    %v1007 = vpack.c.bf16 %v938, %v935
    %v1008 = vpack.c.bf16 %v946, %v943
    %v1009 = vpack.c.bf16 %v954, %v951
    %v1010 = vpack.c.bf16 %v962, %v959
    %v1011 = vpack.c.bf16 %v970, %v967
    %v1012 = vpack.c.bf16 %v978, %v975
    %v1013 = vld [vmem:[%s2] sm:$0x3]
    %v1014 = vld [vmem:[#allocation3] sm:$0x1]
    %v1016 = vlaneseq
    %v1017 = vshrl.u32 %v1016, 7
    %v1018 = vsub.s32 0, %v1017
    %v1019 = vrot.slane %v1014, %v1018
    %vm1021 = vcmask 31744
    %v1023 = vsel %vm1021, %v981, 0
    %v1026 = vsel %vm1021, %v982, 0
    %v1029 = vsel %vm1021, %v983, 0
    %v1032 = vsel %vm1021, %v984, 0
    %v1035 = vsel %vm1021, %v985, 0
    %v1038 = vsel %vm1021, %v986, 0
    %v1041 = vsel %vm1021, %v987, 0
    %v1044 = vsel %vm1021, %v988, 0
    %v1047 = vsel %vm1021, %v989, 0
    %v1050 = vsel %vm1021, %v990, 0
    %v1053 = vsel %vm1021, %v991, 0
    %v1056 = vsel %vm1021, %v992, 0
    %v1059 = vsel %vm1021, %v993, 0
    %v1062 = vsel %vm1021, %v994, 0
    %v1065 = vsel %vm1021, %v995, 0
    %v1068 = vsel %vm1021, %v996, 0
    %v1071 = vsel %vm1021, %v997, 0
    %v1074 = vsel %vm1021, %v998, 0
    %v1077 = vsel %vm1021, %v999, 0
    %v1080 = vsel %vm1021, %v1000, 0
    %v1083 = vsel %vm1021, %v1001, 0
    %v1086 = vsel %vm1021, %v1002, 0
    %v1089 = vsel %vm1021, %v1003, 0
    %v1092 = vsel %vm1021, %v1004, 0
    %v1095 = vsel %vm1021, %v1005, 0
    %v1098 = vsel %vm1021, %v1006, 0
    %v1101 = vsel %vm1021, %v1007, 0
    %v1104 = vsel %vm1021, %v1008, 0
    %v1107 = vsel %vm1021, %v1009, 0
    %v1110 = vsel %vm1021, %v1010, 0
    %v1113 = vsel %vm1021, %v1011, 0
    %v1116 = vsel %vm1021, %v1012, 0
    %vm1118 = vcmask 1041408
    %v1120 = vsel %vm1118, %v1013, 0
    %1122 = vmatprep.subr.bf16.mxu0 0
    %1123 = vmatpush1.bf16.msra.mxu0 %v1120
    %1124 = vmatprep.subr.bf16.mxu0 0
    %1125 = vmatpush1.bf16.msra.mxu0 0
    %1126 = vmatprep.subr.bf16.mxu0 0
    %1127 = vmatpush1.bf16.msra.mxu0 0
    %1128 = vmatprep.subr.bf16.mxu0 0
    %1129 = vmatpush1.bf16.msra.mxu0 0
    %1130 = vmatprep.subr.bf16.mxu0 0
    %1131 = vmatpush1.bf16.msra.mxu0 0
    %1132 = vmatprep.subr.bf16.mxu0 0
    %1133 = vmatpush1.bf16.msra.mxu0 0
    %1134 = vmatprep.subr.bf16.mxu0 0
    %1135 = vmatpush1.bf16.msra.mxu0 0
    %1136 = vmatprep.subr.bf16.mxu0 0
    %1137 = vmatpush1.bf16.msra.mxu0 0
    %1138 = vmatprep.subr.bf16.mxu0 0
    %1139 = vmatpush1.bf16.msra.mxu0 0
    %1140 = vmatprep.subr.bf16.mxu0 0
    %1141 = vmatpush1.bf16.msra.mxu0 0
    %1142 = vmatprep.subr.bf16.mxu0 0
    %1143 = vmatpush1.bf16.msra.mxu0 0
    %1144 = vmatprep.subr.bf16.mxu0 0
    %1145 = vmatpush1.bf16.msra.mxu0 0
    %1146 = vmatprep.subr.bf16.mxu0 0
    %1147 = vmatpush1.bf16.msra.mxu0 0
    %1148 = vmatprep.subr.bf16.mxu0 0
    %1149 = vmatpush1.bf16.msra.mxu0 0
    %1150 = vmatprep.subr.bf16.mxu0 0
    %1151 = vmatpush1.bf16.msra.mxu0 0
    %1152 = vmatprep.subr.bf16.mxu0 0
    %1153 = vmatpush1.bf16.msra.mxu0 0
    %1154 = vmatprep.mubr.bf16.mxu0 0
    %1155 = vmatmul.mubr.bf16.gmra.mrb[0].mxu0 %v1023
    %v1156 = vpop.f32.mrb[0].mxu0
    %v1157 = vadd.f32 %v1019, %v1156
    %v1158 = vpop.f32.mrb[0].mxu0
    %v1159 = vpop.f32.mrb[0].mxu0
    %v1160 = vadd.f32 %v1019, %v1159
    %v1161 = vpop.f32.mrb[0].mxu0
    %1162 = vmatprep.mubr.bf16.mxu0 0
    %1163 = vmatmul.mubr.bf16.gmra.mrb[0].mxu0 %v1026
    %v1164 = vpop.f32.mrb[0].mxu0
    %v1165 = vadd.f32 %v1019, %v1164
    %v1166 = vpop.f32.mrb[0].mxu0
    %v1167 = vpop.f32.mrb[0].mxu0
    %v1168 = vadd.f32 %v1019, %v1167
    %v1169 = vpop.f32.mrb[0].mxu0
    %1170 = vmatprep.mubr.bf16.mxu0 0
    %1171 = vmatmul.mubr.bf16.gmra.mrb[0].mxu0 %v1029
    %v1172 = vpop.f32.mrb[0].mxu0
    %v1173 = vadd.f32 %v1019, %v1172
    %v1174 = vpop.f32.mrb[0].mxu0
    %v1175 = vpop.f32.mrb[0].mxu0
    %v1176 = vadd.f32 %v1019, %v1175
    %v1177 = vpop.f32.mrb[0].mxu0
    %1178 = vmatprep.mubr.bf16.mxu0 0
    %1179 = vmatmul.mubr.bf16.gmra.mrb[0].mxu0 %v1032
    %v1180 = vpop.f32.mrb[0].mxu0
    %v1181 = vadd.f32 %v1019, %v1180
    %v1182 = vpop.f32.mrb[0].mxu0
    %v1183 = vpop.f32.mrb[0].mxu0
    %v1184 = vadd.f32 %v1019, %v1183
    %v1185 = vpop.f32.mrb[0].mxu0
    %1186 = vmatprep.mubr.bf16.mxu0 0
    %1187 = vmatmul.mubr.bf16.gmra.mrb[0].mxu0 %v1035
    %v1188 = vpop.f32.mrb[0].mxu0
    %v1189 = vadd.f32 %v1019, %v1188
    %v1190 = vpop.f32.mrb[0].mxu0
    %v1191 = vpop.f32.mrb[0].mxu0
    %v1192 = vadd.f32 %v1019, %v1191
    %v1193 = vpop.f32.mrb[0].mxu0
    %1194 = vmatprep.mubr.bf16.mxu0 0
    %1195 = vmatmul.mubr.bf16.gmra.mrb[0].mxu0 %v1038
    %v1196 = vpop.f32.mrb[0].mxu0
    %v1197 = vadd.f32 %v1019, %v1196
    %v1198 = vpop.f32.mrb[0].mxu0
    %v1199 = vpop.f32.mrb[0].mxu0
    %v1200 = vadd.f32 %v1019, %v1199
    %v1201 = vpop.f32.mrb[0].mxu0
    %1202 = vmatprep.mubr.bf16.mxu0 0
    %1203 = vmatmul.mubr.bf16.gmra.mrb[0].mxu0 %v1041
    %v1204 = vpop.f32.mrb[0].mxu0
    %v1205 = vadd.f32 %v1019, %v1204
    %v1206 = vpop.f32.mrb[0].mxu0
    %v1207 = vpop.f32.mrb[0].mxu0
    %v1208 = vadd.f32 %v1019, %v1207
    %v1209 = vpop.f32.mrb[0].mxu0
    %1210 = vmatprep.mubr.bf16.mxu0 0
    %1211 = vmatmul.mubr.bf16.gmra.mrb[0].mxu0 %v1044
    %v1212 = vpop.f32.mrb[0].mxu0
    %v1213 = vadd.f32 %v1019, %v1212
    %v1214 = vpop.f32.mrb[0].mxu0
    %v1215 = vpop.f32.mrb[0].mxu0
    %v1216 = vadd.f32 %v1019, %v1215
    %v1217 = vpop.f32.mrb[0].mxu0
    %1218 = vmatprep.mubr.bf16.mxu0 0
    %1219 = vmatmul.mubr.bf16.gmra.mrb[0].mxu0 %v1047
    %v1220 = vpop.f32.mrb[0].mxu0
    %v1221 = vadd.f32 %v1019, %v1220
    %v1222 = vpop.f32.mrb[0].mxu0
    %v1223 = vpop.f32.mrb[0].mxu0
    %v1224 = vadd.f32 %v1019, %v1223
    %v1225 = vpop.f32.mrb[0].mxu0
    %1226 = vmatprep.mubr.bf16.mxu0 0
    %1227 = vmatmul.mubr.bf16.gmra.mrb[0].mxu0 %v1050
    %v1228 = vpop.f32.mrb[0].mxu0
    %v1229 = vadd.f32 %v1019, %v1228
    %v1230 = vpop.f32.mrb[0].mxu0
    %v1231 = vpop.f32.mrb[0].mxu0
    %v1232 = vadd.f32 %v1019, %v1231
    %v1233 = vpop.f32.mrb[0].mxu0
    %1234 = vmatprep.mubr.bf16.mxu0 0
    %1235 = vmatmul.mubr.bf16.gmra.mrb[0].mxu0 %v1053
    %v1236 = vpop.f32.mrb[0].mxu0
    %v1237 = vadd.f32 %v1019, %v1236
    %v1238 = vpop.f32.mrb[0].mxu0
    %v1239 = vpop.f32.mrb[0].mxu0
    %v1240 = vadd.f32 %v1019, %v1239
    %v1241 = vpop.f32.mrb[0].mxu0
    %1242 = vmatprep.mubr.bf16.mxu0 0
    %1243 = vmatmul.mubr.bf16.gmra.mrb[0].mxu0 %v1056
    %v1244 = vpop.f32.mrb[0].mxu0
    %v1245 = vadd.f32 %v1019, %v1244
    %v1246 = vpop.f32.mrb[0].mxu0
    %v1247 = vpop.f32.mrb[0].mxu0
    %v1248 = vadd.f32 %v1019, %v1247
    %v1249 = vpop.f32.mrb[0].mxu0
    %1250 = vmatprep.mubr.bf16.mxu0 0
    %1251 = vmatmul.mubr.bf16.gmra.mrb[0].mxu0 %v1059
    %v1252 = vpop.f32.mrb[0].mxu0
    %v1253 = vadd.f32 %v1019, %v1252
    %v1254 = vpop.f32.mrb[0].mxu0
    %v1255 = vpop.f32.mrb[0].mxu0
    %v1256 = vadd.f32 %v1019, %v1255
    %v1257 = vpop.f32.mrb[0].mxu0
    %1258 = vmatprep.mubr.bf16.mxu0 0
    %1259 = vmatmul.mubr.bf16.gmra.mrb[0].mxu0 %v1062
    %v1260 = vpop.f32.mrb[0].mxu0
    %v1261 = vadd.f32 %v1019, %v1260
    %v1262 = vpop.f32.mrb[0].mxu0
    %v1263 = vpop.f32.mrb[0].mxu0
    %v1264 = vadd.f32 %v1019, %v1263
    %v1265 = vpop.f32.mrb[0].mxu0
    %1266 = vmatprep.mubr.bf16.mxu0 0
    %1267 = vmatmul.mubr.bf16.gmra.mrb[0].mxu0 %v1065
    %v1268 = vpop.f32.mrb[0].mxu0
    %v1269 = vadd.f32 %v1019, %v1268
    %v1270 = vpop.f32.mrb[0].mxu0
    %v1271 = vpop.f32.mrb[0].mxu0
    %v1272 = vadd.f32 %v1019, %v1271
    %v1273 = vpop.f32.mrb[0].mxu0
    %1274 = vmatprep.mubr.bf16.mxu0 0
    %1275 = vmatmul.mubr.bf16.gmra.mrb[0].mxu0 %v1068
    %v1276 = vpop.f32.mrb[0].mxu0
    %v1277 = vadd.f32 %v1019, %v1276
    %v1278 = vpop.f32.mrb[0].mxu0
    %v1279 = vpop.f32.mrb[0].mxu0
    %v1280 = vadd.f32 %v1019, %v1279
    %v1281 = vpop.f32.mrb[0].mxu0
    %1282 = vmatprep.mubr.bf16.mxu0 0
    %1283 = vmatmul.mubr.bf16.gmra.mrb[0].mxu0 %v1071
    %v1284 = vpop.f32.mrb[0].mxu0
    %v1285 = vadd.f32 %v1019, %v1284
    %v1286 = vpop.f32.mrb[0].mxu0
    %v1287 = vpop.f32.mrb[0].mxu0
    %v1288 = vadd.f32 %v1019, %v1287
    %v1289 = vpop.f32.mrb[0].mxu0
    %1290 = vmatprep.mubr.bf16.mxu0 0
    %1291 = vmatmul.mubr.bf16.gmra.mrb[0].mxu0 %v1074
    %v1292 = vpop.f32.mrb[0].mxu0
    %v1293 = vadd.f32 %v1019, %v1292
    %v1294 = vpop.f32.mrb[0].mxu0
    %v1295 = vpop.f32.mrb[0].mxu0
    %v1296 = vadd.f32 %v1019, %v1295
    %v1297 = vpop.f32.mrb[0].mxu0
    %1298 = vmatprep.mubr.bf16.mxu0 0
    %1299 = vmatmul.mubr.bf16.gmra.mrb[0].mxu0 %v1077
    %v1300 = vpop.f32.mrb[0].mxu0
    %v1301 = vadd.f32 %v1019, %v1300
    %v1302 = vpop.f32.mrb[0].mxu0
    %v1303 = vpop.f32.mrb[0].mxu0
    %v1304 = vadd.f32 %v1019, %v1303
    %v1305 = vpop.f32.mrb[0].mxu0
    %1306 = vmatprep.mubr.bf16.mxu0 0
    %1307 = vmatmul.mubr.bf16.gmra.mrb[0].mxu0 %v1080
    %v1308 = vpop.f32.mrb[0].mxu0
    %v1309 = vadd.f32 %v1019, %v1308
    %v1310 = vpop.f32.mrb[0].mxu0
    %v1311 = vpop.f32.mrb[0].mxu0
    %v1312 = vadd.f32 %v1019, %v1311
    %v1313 = vpop.f32.mrb[0].mxu0
    %1314 = vmatprep.mubr.bf16.mxu0 0
    %1315 = vmatmul.mubr.bf16.gmra.mrb[0].mxu0 %v1083
    %v1316 = vpop.f32.mrb[0].mxu0
    %v1317 = vadd.f32 %v1019, %v1316
    %v1318 = vpop.f32.mrb[0].mxu0
    %v1319 = vpop.f32.mrb[0].mxu0
    %v1320 = vadd.f32 %v1019, %v1319
    %v1321 = vpop.f32.mrb[0].mxu0
    %1322 = vmatprep.mubr.bf16.mxu0 0
    %1323 = vmatmul.mubr.bf16.gmra.mrb[0].mxu0 %v1086
    %v1324 = vpop.f32.mrb[0].mxu0
    %v1325 = vadd.f32 %v1019, %v1324
    %v1326 = vpop.f32.mrb[0].mxu0
    %v1327 = vpop.f32.mrb[0].mxu0
    %v1328 = vadd.f32 %v1019, %v1327
    %v1329 = vpop.f32.mrb[0].mxu0
    %1330 = vmatprep.mubr.bf16.mxu0 0
    %1331 = vmatmul.mubr.bf16.gmra.mrb[0].mxu0 %v1089
    %v1332 = vpop.f32.mrb[0].mxu0
    %v1333 = vadd.f32 %v1019, %v1332
    %v1334 = vpop.f32.mrb[0].mxu0
    %v1335 = vpop.f32.mrb[0].mxu0
    %v1336 = vadd.f32 %v1019, %v1335
    %v1337 = vpop.f32.mrb[0].mxu0
    %1338 = vmatprep.mubr.bf16.mxu0 0
    %1339 = vmatmul.mubr.bf16.gmra.mrb[0].mxu0 %v1092
    %v1340 = vpop.f32.mrb[0].mxu0
    %v1341 = vadd.f32 %v1019, %v1340
    %v1342 = vpop.f32.mrb[0].mxu0
    %v1343 = vpop.f32.mrb[0].mxu0
    %v1344 = vadd.f32 %v1019, %v1343
    %v1345 = vpop.f32.mrb[0].mxu0
    %1346 = vmatprep.mubr.bf16.mxu0 0
    %1347 = vmatmul.mubr.bf16.gmra.mrb[0].mxu0 %v1095
    %v1348 = vpop.f32.mrb[0].mxu0
    %v1349 = vadd.f32 %v1019, %v1348
    %v1350 = vpop.f32.mrb[0].mxu0
    %v1351 = vpop.f32.mrb[0].mxu0
    %v1352 = vadd.f32 %v1019, %v1351
    %v1353 = vpop.f32.mrb[0].mxu0
    %1354 = vmatprep.mubr.bf16.mxu0 0
    %1355 = vmatmul.mubr.bf16.gmra.mrb[0].mxu0 %v1098
    %v1356 = vpop.f32.mrb[0].mxu0
    %v1357 = vadd.f32 %v1019, %v1356
    %v1358 = vpop.f32.mrb[0].mxu0
    %v1359 = vpop.f32.mrb[0].mxu0
    %v1360 = vadd.f32 %v1019, %v1359
    %v1361 = vpop.f32.mrb[0].mxu0
    %1362 = vmatprep.mubr.bf16.mxu0 0
    %1363 = vmatmul.mubr.bf16.gmra.mrb[0].mxu0 %v1101
    %v1364 = vpop.f32.mrb[0].mxu0
    %v1365 = vadd.f32 %v1019, %v1364
    %v1366 = vpop.f32.mrb[0].mxu0
    %v1367 = vpop.f32.mrb[0].mxu0
    %v1368 = vadd.f32 %v1019, %v1367
    %v1369 = vpop.f32.mrb[0].mxu0
    %1370 = vmatprep.mubr.bf16.mxu0 0
    %1371 = vmatmul.mubr.bf16.gmra.mrb[0].mxu0 %v1104
    %v1372 = vpop.f32.mrb[0].mxu0
    %v1373 = vadd.f32 %v1019, %v1372
    %v1374 = vpop.f32.mrb[0].mxu0
    %v1375 = vpop.f32.mrb[0].mxu0
    %v1376 = vadd.f32 %v1019, %v1375
    %v1377 = vpop.f32.mrb[0].mxu0
    %1378 = vmatprep.mubr.bf16.mxu0 0
    %1379 = vmatmul.mubr.bf16.gmra.mrb[0].mxu0 %v1107
    %v1380 = vpop.f32.mrb[0].mxu0
    %v1381 = vadd.f32 %v1019, %v1380
    %v1382 = vpop.f32.mrb[0].mxu0
    %v1383 = vpop.f32.mrb[0].mxu0
    %v1384 = vadd.f32 %v1019, %v1383
    %v1385 = vpop.f32.mrb[0].mxu0
    %1386 = vmatprep.mubr.bf16.mxu0 0
    %1387 = vmatmul.mubr.bf16.gmra.mrb[0].mxu0 %v1110
    %v1388 = vpop.f32.mrb[0].mxu0
    %v1389 = vadd.f32 %v1019, %v1388
    %v1390 = vpop.f32.mrb[0].mxu0
    %v1391 = vpop.f32.mrb[0].mxu0
    %v1392 = vadd.f32 %v1019, %v1391
    %v1393 = vpop.f32.mrb[0].mxu0
    %1394 = vmatprep.mubr.bf16.mxu0 0
    %1395 = vmatmul.mubr.bf16.gmra.mrb[0].mxu0 %v1113
    %v1396 = vpop.f32.mrb[0].mxu0
    %v1397 = vadd.f32 %v1019, %v1396
    %v1398 = vpop.f32.mrb[0].mxu0
    %v1399 = vpop.f32.mrb[0].mxu0
    %v1400 = vadd.f32 %v1019, %v1399
    %v1401 = vpop.f32.mrb[0].mxu0
    %1402 = vmatprep.mubr.bf16.mxu0 0
    %1403 = vmatmul.mubr.bf16.gmra.mrb[0].mxu0 %v1116
    %v1404 = vpop.f32.mrb[0].mxu0
    %v1405 = vadd.f32 %v1019, %v1404
    %v1406 = vpop.f32.mrb[0].mxu0
    %v1407 = vpop.f32.mrb[0].mxu0
    %v1408 = vadd.f32 %v1019, %v1407
    %v1409 = vpop.f32.mrb[0].mxu0
    %1410 = vdwg.mxu0
    %v1411 = vmax.f32 %v1157, 0.0
    %v1412 = vmax.f32 %v1160, 0.0
    %v1413 = vmax.f32 %v1165, 0.0
    %v1414 = vmax.f32 %v1168, 0.0
    %v1415 = vmax.f32 %v1173, 0.0
    %v1416 = vmax.f32 %v1176, 0.0
    %v1417 = vmax.f32 %v1181, 0.0
    %v1418 = vmax.f32 %v1184, 0.0
    %v1419 = vmax.f32 %v1189, 0.0
    %v1420 = vmax.f32 %v1192, 0.0
    %v1421 = vmax.f32 %v1197, 0.0
    %v1422 = vmax.f32 %v1200, 0.0
    %v1423 = vmax.f32 %v1205, 0.0
    %v1424 = vmax.f32 %v1208, 0.0
    %v1425 = vmax.f32 %v1213, 0.0
    %v1426 = vmax.f32 %v1216, 0.0
    %v1427 = vmax.f32 %v1221, 0.0
    %v1428 = vmax.f32 %v1224, 0.0
    %v1429 = vmax.f32 %v1229, 0.0
    %v1430 = vmax.f32 %v1232, 0.0
    %v1431 = vmax.f32 %v1237, 0.0
    %v1432 = vmax.f32 %v1240, 0.0
    %v1433 = vmax.f32 %v1245, 0.0
    %v1434 = vmax.f32 %v1248, 0.0
    %v1435 = vmax.f32 %v1253, 0.0
    %v1436 = vmax.f32 %v1256, 0.0
    %v1437 = vmax.f32 %v1261, 0.0
    %v1438 = vmax.f32 %v1264, 0.0
    %v1439 = vmax.f32 %v1269, 0.0
    %v1440 = vmax.f32 %v1272, 0.0
    %v1441 = vmax.f32 %v1277, 0.0
    %v1442 = vmax.f32 %v1280, 0.0
    %v1443 = vmax.f32 %v1285, 0.0
    %v1444 = vmax.f32 %v1288, 0.0
    %v1445 = vmax.f32 %v1293, 0.0
    %v1446 = vmax.f32 %v1296, 0.0
    %v1447 = vmax.f32 %v1301, 0.0
    %v1448 = vmax.f32 %v1304, 0.0
    %v1449 = vmax.f32 %v1309, 0.0
    %v1450 = vmax.f32 %v1312, 0.0
    %v1451 = vmax.f32 %v1317, 0.0
    %v1452 = vmax.f32 %v1320, 0.0
    %v1453 = vmax.f32 %v1325, 0.0
    %v1454 = vmax.f32 %v1328, 0.0
    %v1455 = vmax.f32 %v1333, 0.0
    %v1456 = vmax.f32 %v1336, 0.0
    %v1457 = vmax.f32 %v1341, 0.0
    %v1458 = vmax.f32 %v1344, 0.0
    %v1459 = vmax.f32 %v1349, 0.0
    %v1460 = vmax.f32 %v1352, 0.0
    %v1461 = vmax.f32 %v1357, 0.0
    %v1462 = vmax.f32 %v1360, 0.0
    %v1463 = vmax.f32 %v1365, 0.0
    %v1464 = vmax.f32 %v1368, 0.0
    %v1465 = vmax.f32 %v1373, 0.0
    %v1466 = vmax.f32 %v1376, 0.0
    %v1467 = vmax.f32 %v1381, 0.0
    %v1468 = vmax.f32 %v1384, 0.0
    %v1469 = vmax.f32 %v1389, 0.0
    %v1470 = vmax.f32 %v1392, 0.0
    %v1471 = vmax.f32 %v1397, 0.0
    %v1472 = vmax.f32 %v1400, 0.0
    %v1473 = vmax.f32 %v1405, 0.0
    %v1474 = vmax.f32 %v1408, 0.0
    %v1475 = vpack.c.bf16 %v1412, %v1411
    %v1476 = vpack.c.bf16 %v1414, %v1413
    %v1477 = vpack.c.bf16 %v1416, %v1415
    %v1478 = vpack.c.bf16 %v1418, %v1417
    %v1479 = vpack.c.bf16 %v1420, %v1419
    %v1480 = vpack.c.bf16 %v1422, %v1421
    %v1481 = vpack.c.bf16 %v1424, %v1423
    %v1482 = vpack.c.bf16 %v1426, %v1425
    %v1483 = vpack.c.bf16 %v1428, %v1427
    %v1484 = vpack.c.bf16 %v1430, %v1429
    %v1485 = vpack.c.bf16 %v1432, %v1431
    %v1486 = vpack.c.bf16 %v1434, %v1433
    %v1487 = vpack.c.bf16 %v1436, %v1435
    %v1488 = vpack.c.bf16 %v1438, %v1437
    %v1489 = vpack.c.bf16 %v1440, %v1439
    %v1490 = vpack.c.bf16 %v1442, %v1441
    %v1491 = vpack.c.bf16 %v1444, %v1443
    %v1492 = vpack.c.bf16 %v1446, %v1445
    %v1493 = vpack.c.bf16 %v1448, %v1447
    %v1494 = vpack.c.bf16 %v1450, %v1449
    %v1495 = vpack.c.bf16 %v1452, %v1451
    %v1496 = vpack.c.bf16 %v1454, %v1453
    %v1497 = vpack.c.bf16 %v1456, %v1455
    %v1498 = vpack.c.bf16 %v1458, %v1457
    %v1499 = vpack.c.bf16 %v1460, %v1459
    %v1500 = vpack.c.bf16 %v1462, %v1461
    %v1501 = vpack.c.bf16 %v1464, %v1463
    %v1502 = vpack.c.bf16 %v1466, %v1465
    %v1503 = vpack.c.bf16 %v1468, %v1467
    %v1504 = vpack.c.bf16 %v1470, %v1469
    %v1505 = vpack.c.bf16 %v1472, %v1471
    %v1506 = vpack.c.bf16 %v1474, %v1473
    %v1507 = vld [vmem:[%s4] sm:$0xf]
    %v1508 = vld [vmem:[%s4 + $0x4] sm:$0xf]
    %v1509 = vld [vmem:[%s4 + $0x8] sm:$0xf]
    %v1510 = vld [vmem:[%s4 + $0xc] sm:$0xf]
    %v1515 = vunpack.c.l.b16 %v1507
    %v1516 = vunpack.c.l.b16 %v1508
    %v1517 = vunpack.c.l.b16 %v1509
    %v1518 = vunpack.c.l.b16 %v1510
    %v1519 = vpack.c.b16 %v1516, %v1515
    %v1520 = vpack.c.b16 %v1518, %v1517
    %vm1523 = vcmask 261120
    %v1525 = vsel %vm1523, %v1475, 0
    %v1528 = vsel %vm1523, %v1476, 0
    %v1531 = vsel %vm1523, %v1477, 0
    %v1534 = vsel %vm1523, %v1478, 0
    %v1537 = vsel %vm1523, %v1479, 0
    %v1540 = vsel %vm1523, %v1480, 0
    %v1543 = vsel %vm1523, %v1481, 0
    %v1546 = vsel %vm1523, %v1482, 0
    %v1549 = vsel %vm1523, %v1483, 0
    %v1552 = vsel %vm1523, %v1484, 0
    %v1555 = vsel %vm1523, %v1485, 0
    %v1558 = vsel %vm1523, %v1486, 0
    %v1561 = vsel %vm1523, %v1487, 0
    %v1564 = vsel %vm1523, %v1488, 0
    %v1567 = vsel %vm1523, %v1489, 0
    %v1570 = vsel %vm1523, %v1490, 0
    %v1573 = vsel %vm1523, %v1491, 0
    %v1576 = vsel %vm1523, %v1492, 0
    %v1579 = vsel %vm1523, %v1493, 0
    %v1582 = vsel %vm1523, %v1494, 0
    %v1585 = vsel %vm1523, %v1495, 0
    %v1588 = vsel %vm1523, %v1496, 0
    %v1591 = vsel %vm1523, %v1497, 0
    %v1594 = vsel %vm1523, %v1498, 0
    %v1597 = vsel %vm1523, %v1499, 0
    %v1600 = vsel %vm1523, %v1500, 0
    %v1603 = vsel %vm1523, %v1501, 0
    %v1606 = vsel %vm1523, %v1502, 0
    %v1609 = vsel %vm1523, %v1503, 0
    %v1612 = vsel %vm1523, %v1504, 0
    %v1615 = vsel %vm1523, %v1505, 0
    %v1618 = vsel %vm1523, %v1506, 0
    %1620 = vmatprep.subr.bf16.mxu0 0
    %1621 = vmatpush1.bf16.msra.mxu0 %v1519
    %1622 = vmatprep.subr.bf16.mxu0 0
    %1623 = vmatpush1.bf16.msra.mxu0 %v1520
    %1624 = vmatprep.subr.bf16.mxu0 0
    %1625 = vmatpush1.bf16.msra.mxu0 0
    %1626 = vmatprep.subr.bf16.mxu0 0
    %1627 = vmatpush1.bf16.msra.mxu0 0
    %1628 = vmatprep.subr.bf16.mxu0 0
    %1629 = vmatpush1.bf16.msra.mxu0 0
    %1630 = vmatprep.subr.bf16.mxu0 0
    %1631 = vmatpush1.bf16.msra.mxu0 0
    %1632 = vmatprep.subr.bf16.mxu0 0
    %1633 = vmatpush1.bf16.msra.mxu0 0
    %1634 = vmatprep.subr.bf16.mxu0 0
    %1635 = vmatpush1.bf16.msra.mxu0 0
    %1636 = vmatprep.subr.bf16.mxu0 0
    %1637 = vmatpush1.bf16.msra.mxu0 0
    %1638 = vmatprep.subr.bf16.mxu0 0
    %1639 = vmatpush1.bf16.msra.mxu0 0
    %1640 = vmatprep.subr.bf16.mxu0 0
    %1641 = vmatpush1.bf16.msra.mxu0 0
    %1642 = vmatprep.subr.bf16.mxu0 0
    %1643 = vmatpush1.bf16.msra.mxu0 0
    %1644 = vmatprep.subr.bf16.mxu0 0
    %1645 = vmatpush1.bf16.msra.mxu0 0
    %1646 = vmatprep.subr.bf16.mxu0 0
    %1647 = vmatpush1.bf16.msra.mxu0 0
    %1648 = vmatprep.subr.bf16.mxu0 0
    %1649 = vmatpush1.bf16.msra.mxu0 0
    %1650 = vmatprep.subr.bf16.mxu0 0
    %1651 = vmatpush1.bf16.msra.mxu0 0
    %1652 = vmatprep.mubr.bf16.mxu0 0
    %1653 = vmatmul.mubr.bf16.gmra.mrb[0].mxu0 %v1525
    %v1654 = vpop.f32.mrb[0].mxu0
    %v1655 = vadd.f32 0.0, %v1654
    %v1656 = vpop.f32.mrb[0].mxu0
    %v1657 = vpop.f32.mrb[0].mxu0
    %v1658 = vadd.f32 0.0, %v1657
    %v1659 = vpop.f32.mrb[0].mxu0
    %1660 = vmatprep.mubr.bf16.mxu0 0
    %1661 = vmatmul.mubr.bf16.gmra.mrb[0].mxu0 %v1528
    %v1662 = vpop.f32.mrb[0].mxu0
    %v1663 = vadd.f32 0.0, %v1662
    %v1664 = vpop.f32.mrb[0].mxu0
    %v1665 = vpop.f32.mrb[0].mxu0
    %v1666 = vadd.f32 0.0, %v1665
    %v1667 = vpop.f32.mrb[0].mxu0
    %1668 = vmatprep.mubr.bf16.mxu0 0
    %1669 = vmatmul.mubr.bf16.gmra.mrb[0].mxu0 %v1531
    %v1670 = vpop.f32.mrb[0].mxu0
    %v1671 = vadd.f32 0.0, %v1670
    %v1672 = vpop.f32.mrb[0].mxu0
    %v1673 = vpop.f32.mrb[0].mxu0
    %v1674 = vadd.f32 0.0, %v1673
    %v1675 = vpop.f32.mrb[0].mxu0
    %1676 = vmatprep.mubr.bf16.mxu0 0
    %1677 = vmatmul.mubr.bf16.gmra.mrb[0].mxu0 %v1534
    %v1678 = vpop.f32.mrb[0].mxu0
    %v1679 = vadd.f32 0.0, %v1678
    %v1680 = vpop.f32.mrb[0].mxu0
    %v1681 = vpop.f32.mrb[0].mxu0
    %v1682 = vadd.f32 0.0, %v1681
    %v1683 = vpop.f32.mrb[0].mxu0
    %1684 = vmatprep.mubr.bf16.mxu0 0
    %1685 = vmatmul.mubr.bf16.gmra.mrb[0].mxu0 %v1537
    %v1686 = vpop.f32.mrb[0].mxu0
    %v1687 = vadd.f32 0.0, %v1686
    %v1688 = vpop.f32.mrb[0].mxu0
    %v1689 = vpop.f32.mrb[0].mxu0
    %v1690 = vadd.f32 0.0, %v1689
    %v1691 = vpop.f32.mrb[0].mxu0
    %1692 = vmatprep.mubr.bf16.mxu0 0
    %1693 = vmatmul.mubr.bf16.gmra.mrb[0].mxu0 %v1540
    %v1694 = vpop.f32.mrb[0].mxu0
    %v1695 = vadd.f32 0.0, %v1694
    %v1696 = vpop.f32.mrb[0].mxu0
    %v1697 = vpop.f32.mrb[0].mxu0
    %v1698 = vadd.f32 0.0, %v1697
    %v1699 = vpop.f32.mrb[0].mxu0
    %1700 = vmatprep.mubr.bf16.mxu0 0
    %1701 = vmatmul.mubr.bf16.gmra.mrb[0].mxu0 %v1543
    %v1702 = vpop.f32.mrb[0].mxu0
    %v1703 = vadd.f32 0.0, %v1702
    %v1704 = vpop.f32.mrb[0].mxu0
    %v1705 = vpop.f32.mrb[0].mxu0
    %v1706 = vadd.f32 0.0, %v1705
    %v1707 = vpop.f32.mrb[0].mxu0
    %1708 = vmatprep.mubr.bf16.mxu0 0
    %1709 = vmatmul.mubr.bf16.gmra.mrb[0].mxu0 %v1546
    %v1710 = vpop.f32.mrb[0].mxu0
    %v1711 = vadd.f32 0.0, %v1710
    %v1712 = vpop.f32.mrb[0].mxu0
    %v1713 = vpop.f32.mrb[0].mxu0
    %v1714 = vadd.f32 0.0, %v1713
    %v1715 = vpop.f32.mrb[0].mxu0
    %1716 = vmatprep.mubr.bf16.mxu0 0
    %1717 = vmatmul.mubr.bf16.gmra.mrb[0].mxu0 %v1549
    %v1718 = vpop.f32.mrb[0].mxu0
    %v1719 = vadd.f32 0.0, %v1718
    %v1720 = vpop.f32.mrb[0].mxu0
    %v1721 = vpop.f32.mrb[0].mxu0
    %v1722 = vadd.f32 0.0, %v1721
    %v1723 = vpop.f32.mrb[0].mxu0
    %1724 = vmatprep.mubr.bf16.mxu0 0
    %1725 = vmatmul.mubr.bf16.gmra.mrb[0].mxu0 %v1552
    %v1726 = vpop.f32.mrb[0].mxu0
    %v1727 = vadd.f32 0.0, %v1726
    %v1728 = vpop.f32.mrb[0].mxu0
    %v1729 = vpop.f32.mrb[0].mxu0
    %v1730 = vadd.f32 0.0, %v1729
    %v1731 = vpop.f32.mrb[0].mxu0
    %1732 = vmatprep.mubr.bf16.mxu0 0
    %1733 = vmatmul.mubr.bf16.gmra.mrb[0].mxu0 %v1555
    %v1734 = vpop.f32.mrb[0].mxu0
    %v1735 = vadd.f32 0.0, %v1734
    %v1736 = vpop.f32.mrb[0].mxu0
    %v1737 = vpop.f32.mrb[0].mxu0
    %v1738 = vadd.f32 0.0, %v1737
    %v1739 = vpop.f32.mrb[0].mxu0
    %1740 = vmatprep.mubr.bf16.mxu0 0
    %1741 = vmatmul.mubr.bf16.gmra.mrb[0].mxu0 %v1558
    %v1742 = vpop.f32.mrb[0].mxu0
    %v1743 = vadd.f32 0.0, %v1742
    %v1744 = vpop.f32.mrb[0].mxu0
    %v1745 = vpop.f32.mrb[0].mxu0
    %v1746 = vadd.f32 0.0, %v1745
    %v1747 = vpop.f32.mrb[0].mxu0
    %1748 = vmatprep.mubr.bf16.mxu0 0
    %1749 = vmatmul.mubr.bf16.gmra.mrb[0].mxu0 %v1561
    %v1750 = vpop.f32.mrb[0].mxu0
    %v1751 = vadd.f32 0.0, %v1750
    %v1752 = vpop.f32.mrb[0].mxu0
    %v1753 = vpop.f32.mrb[0].mxu0
    %v1754 = vadd.f32 0.0, %v1753
    %v1755 = vpop.f32.mrb[0].mxu0
    %1756 = vmatprep.mubr.bf16.mxu0 0
    %1757 = vmatmul.mubr.bf16.gmra.mrb[0].mxu0 %v1564
    %v1758 = vpop.f32.mrb[0].mxu0
    %v1759 = vadd.f32 0.0, %v1758
    %v1760 = vpop.f32.mrb[0].mxu0
    %v1761 = vpop.f32.mrb[0].mxu0
    %v1762 = vadd.f32 0.0, %v1761
    %v1763 = vpop.f32.mrb[0].mxu0
    %1764 = vmatprep.mubr.bf16.mxu0 0
    %1765 = vmatmul.mubr.bf16.gmra.mrb[0].mxu0 %v1567
    %v1766 = vpop.f32.mrb[0].mxu0
    %v1767 = vadd.f32 0.0, %v1766
    %v1768 = vpop.f32.mrb[0].mxu0
    %v1769 = vpop.f32.mrb[0].mxu0
    %v1770 = vadd.f32 0.0, %v1769
    %v1771 = vpop.f32.mrb[0].mxu0
    %1772 = vmatprep.mubr.bf16.mxu0 0
    %1773 = vmatmul.mubr.bf16.gmra.mrb[0].mxu0 %v1570
    %v1774 = vpop.f32.mrb[0].mxu0
    %v1775 = vadd.f32 0.0, %v1774
    %v1776 = vpop.f32.mrb[0].mxu0
    %v1777 = vpop.f32.mrb[0].mxu0
    %v1778 = vadd.f32 0.0, %v1777
    %v1779 = vpop.f32.mrb[0].mxu0
    %1780 = vmatprep.mubr.bf16.mxu0 0
    %1781 = vmatmul.mubr.bf16.gmra.mrb[0].mxu0 %v1573
    %v1782 = vpop.f32.mrb[0].mxu0
    %v1783 = vadd.f32 0.0, %v1782
    %v1784 = vpop.f32.mrb[0].mxu0
    %v1785 = vpop.f32.mrb[0].mxu0
    %v1786 = vadd.f32 0.0, %v1785
    %v1787 = vpop.f32.mrb[0].mxu0
    %1788 = vmatprep.mubr.bf16.mxu0 0
    %1789 = vmatmul.mubr.bf16.gmra.mrb[0].mxu0 %v1576
    %v1790 = vpop.f32.mrb[0].mxu0
    %v1791 = vadd.f32 0.0, %v1790
    %v1792 = vpop.f32.mrb[0].mxu0
    %v1793 = vpop.f32.mrb[0].mxu0
    %v1794 = vadd.f32 0.0, %v1793
    %v1795 = vpop.f32.mrb[0].mxu0
    %1796 = vmatprep.mubr.bf16.mxu0 0
    %1797 = vmatmul.mubr.bf16.gmra.mrb[0].mxu0 %v1579
    %v1798 = vpop.f32.mrb[0].mxu0
    %v1799 = vadd.f32 0.0, %v1798
    %v1800 = vpop.f32.mrb[0].mxu0
    %v1801 = vpop.f32.mrb[0].mxu0
    %v1802 = vadd.f32 0.0, %v1801
    %v1803 = vpop.f32.mrb[0].mxu0
    %1804 = vmatprep.mubr.bf16.mxu0 0
    %1805 = vmatmul.mubr.bf16.gmra.mrb[0].mxu0 %v1582
    %v1806 = vpop.f32.mrb[0].mxu0
    %v1807 = vadd.f32 0.0, %v1806
    %v1808 = vpop.f32.mrb[0].mxu0
    %v1809 = vpop.f32.mrb[0].mxu0
    %v1810 = vadd.f32 0.0, %v1809
    %v1811 = vpop.f32.mrb[0].mxu0
    %1812 = vmatprep.mubr.bf16.mxu0 0
    %1813 = vmatmul.mubr.bf16.gmra.mrb[0].mxu0 %v1585
    %v1814 = vpop.f32.mrb[0].mxu0
    %v1815 = vadd.f32 0.0, %v1814
    %v1816 = vpop.f32.mrb[0].mxu0
    %v1817 = vpop.f32.mrb[0].mxu0
    %v1818 = vadd.f32 0.0, %v1817
    %v1819 = vpop.f32.mrb[0].mxu0
    %1820 = vmatprep.mubr.bf16.mxu0 0
    %1821 = vmatmul.mubr.bf16.gmra.mrb[0].mxu0 %v1588
    %v1822 = vpop.f32.mrb[0].mxu0
    %v1823 = vadd.f32 0.0, %v1822
    %v1824 = vpop.f32.mrb[0].mxu0
    %v1825 = vpop.f32.mrb[0].mxu0
    %v1826 = vadd.f32 0.0, %v1825
    %v1827 = vpop.f32.mrb[0].mxu0
    %1828 = vmatprep.mubr.bf16.mxu0 0
    %1829 = vmatmul.mubr.bf16.gmra.mrb[0].mxu0 %v1591
    %v1830 = vpop.f32.mrb[0].mxu0
    %v1831 = vadd.f32 0.0, %v1830
    %v1832 = vpop.f32.mrb[0].mxu0
    %v1833 = vpop.f32.mrb[0].mxu0
    %v1834 = vadd.f32 0.0, %v1833
    %v1835 = vpop.f32.mrb[0].mxu0
    %1836 = vmatprep.mubr.bf16.mxu0 0
    %1837 = vmatmul.mubr.bf16.gmra.mrb[0].mxu0 %v1594
    %v1838 = vpop.f32.mrb[0].mxu0
    %v1839 = vadd.f32 0.0, %v1838
    %v1840 = vpop.f32.mrb[0].mxu0
    %v1841 = vpop.f32.mrb[0].mxu0
    %v1842 = vadd.f32 0.0, %v1841
    %v1843 = vpop.f32.mrb[0].mxu0
    %1844 = vmatprep.mubr.bf16.mxu0 0
    %1845 = vmatmul.mubr.bf16.gmra.mrb[0].mxu0 %v1597
    %v1846 = vpop.f32.mrb[0].mxu0
    %v1847 = vadd.f32 0.0, %v1846
    %v1848 = vpop.f32.mrb[0].mxu0
    %v1849 = vpop.f32.mrb[0].mxu0
    %v1850 = vadd.f32 0.0, %v1849
    %v1851 = vpop.f32.mrb[0].mxu0
    %1852 = vmatprep.mubr.bf16.mxu0 0
    %1853 = vmatmul.mubr.bf16.gmra.mrb[0].mxu0 %v1600
    %v1854 = vpop.f32.mrb[0].mxu0
    %v1855 = vadd.f32 0.0, %v1854
    %v1856 = vpop.f32.mrb[0].mxu0
    %v1857 = vpop.f32.mrb[0].mxu0
    %v1858 = vadd.f32 0.0, %v1857
    %v1859 = vpop.f32.mrb[0].mxu0
    %1860 = vmatprep.mubr.bf16.mxu0 0
    %1861 = vmatmul.mubr.bf16.gmra.mrb[0].mxu0 %v1603
    %v1862 = vpop.f32.mrb[0].mxu0
    %v1863 = vadd.f32 0.0, %v1862
    %v1864 = vpop.f32.mrb[0].mxu0
    %v1865 = vpop.f32.mrb[0].mxu0
    %v1866 = vadd.f32 0.0, %v1865
    %v1867 = vpop.f32.mrb[0].mxu0
    %1868 = vmatprep.mubr.bf16.mxu0 0
    %1869 = vmatmul.mubr.bf16.gmra.mrb[0].mxu0 %v1606
    %v1870 = vpop.f32.mrb[0].mxu0
    %v1871 = vadd.f32 0.0, %v1870
    %v1872 = vpop.f32.mrb[0].mxu0
    %v1873 = vpop.f32.mrb[0].mxu0
    %v1874 = vadd.f32 0.0, %v1873
    %v1875 = vpop.f32.mrb[0].mxu0
    %1876 = vmatprep.mubr.bf16.mxu0 0
    %1877 = vmatmul.mubr.bf16.gmra.mrb[0].mxu0 %v1609
    %v1878 = vpop.f32.mrb[0].mxu0
    %v1879 = vadd.f32 0.0, %v1878
    %v1880 = vpop.f32.mrb[0].mxu0
    %v1881 = vpop.f32.mrb[0].mxu0
    %v1882 = vadd.f32 0.0, %v1881
    %v1883 = vpop.f32.mrb[0].mxu0
    %1884 = vmatprep.mubr.bf16.mxu0 0
    %1885 = vmatmul.mubr.bf16.gmra.mrb[0].mxu0 %v1612
    %v1886 = vpop.f32.mrb[0].mxu0
    %v1887 = vadd.f32 0.0, %v1886
    %v1888 = vpop.f32.mrb[0].mxu0
    %v1889 = vpop.f32.mrb[0].mxu0
    %v1890 = vadd.f32 0.0, %v1889
    %v1891 = vpop.f32.mrb[0].mxu0
    %1892 = vmatprep.mubr.bf16.mxu0 0
    %1893 = vmatmul.mubr.bf16.gmra.mrb[0].mxu0 %v1615
    %v1894 = vpop.f32.mrb[0].mxu0
    %v1895 = vadd.f32 0.0, %v1894
    %v1896 = vpop.f32.mrb[0].mxu0
    %v1897 = vpop.f32.mrb[0].mxu0
    %v1898 = vadd.f32 0.0, %v1897
    %v1899 = vpop.f32.mrb[0].mxu0
    %1900 = vmatprep.mubr.bf16.mxu0 0
    %1901 = vmatmul.mubr.bf16.gmra.mrb[0].mxu0 %v1618
    %v1902 = vpop.f32.mrb[0].mxu0
    %v1903 = vadd.f32 0.0, %v1902
    %v1904 = vpop.f32.mrb[0].mxu0
    %v1905 = vpop.f32.mrb[0].mxu0
    %v1906 = vadd.f32 0.0, %v1905
    %v1907 = vpop.f32.mrb[0].mxu0
    %1908 = vdwg.mxu0
    %v1909 = vpack.c.bf16 %v1658, %v1655
    %v1910 = vpack.c.bf16 %v1666, %v1663
    %v1911 = vpack.c.bf16 %v1674, %v1671
    %v1912 = vpack.c.bf16 %v1682, %v1679
    %v1913 = vpack.c.bf16 %v1690, %v1687
    %v1914 = vpack.c.bf16 %v1698, %v1695
    %v1915 = vpack.c.bf16 %v1706, %v1703
    %v1916 = vpack.c.bf16 %v1714, %v1711
    %v1917 = vpack.c.bf16 %v1722, %v1719
    %v1918 = vpack.c.bf16 %v1730, %v1727
    %v1919 = vpack.c.bf16 %v1738, %v1735
    %v1920 = vpack.c.bf16 %v1746, %v1743
    %v1921 = vpack.c.bf16 %v1754, %v1751
    %v1922 = vpack.c.bf16 %v1762, %v1759
    %v1923 = vpack.c.bf16 %v1770, %v1767
    %v1924 = vpack.c.bf16 %v1778, %v1775
    %v1925 = vpack.c.bf16 %v1786, %v1783
    %v1926 = vpack.c.bf16 %v1794, %v1791
    %v1927 = vpack.c.bf16 %v1802, %v1799
    %v1928 = vpack.c.bf16 %v1810, %v1807
    %v1929 = vpack.c.bf16 %v1818, %v1815
    %v1930 = vpack.c.bf16 %v1826, %v1823
    %v1931 = vpack.c.bf16 %v1834, %v1831
    %v1932 = vpack.c.bf16 %v1842, %v1839
    %v1933 = vpack.c.bf16 %v1850, %v1847
    %v1934 = vpack.c.bf16 %v1858, %v1855
    %v1935 = vpack.c.bf16 %v1866, %v1863
    %v1936 = vpack.c.bf16 %v1874, %v1871
    %v1937 = vpack.c.bf16 %v1882, %v1879
    %v1938 = vpack.c.bf16 %v1890, %v1887
    %v1939 = vpack.c.bf16 %v1898, %v1895
    %v1940 = vpack.c.bf16 %v1906, %v1903
    %1941 = vmatprep.subr.bf16.mxu0 0
    %1942 = vmatpush1.bf16.msra.mxu0 %v1909
    %1943 = vmatprep.subr.bf16.mxu0 0
    %1944 = vmatpush1.bf16.msra.mxu0 %v1910
    %1945 = vmatprep.subr.bf16.mxu0 0
    %1946 = vmatpush1.bf16.msra.mxu0 %v1911
    %1947 = vmatprep.subr.bf16.mxu0 0
    %1948 = vmatpush1.bf16.msra.mxu0 %v1912
    %1949 = vmatprep.subr.bf16.mxu0 0
    %1950 = vmatpush1.bf16.msra.mxu0 %v1913
    %1951 = vmatprep.subr.bf16.mxu0 0
    %1952 = vmatpush1.bf16.msra.mxu0 %v1914
    %1953 = vmatprep.subr.bf16.mxu0 0
    %1954 = vmatpush1.bf16.msra.mxu0 %v1915
    %1955 = vmatprep.subr.bf16.mxu0 0
    %1956 = vmatpush1.bf16.msra.mxu0 %v1916
    %1957 = vmatprep.subr.bf16.mxu0 0
    %1958 = vmatpush1.bf16.msra.mxu0 0
    %1959 = vmatprep.subr.bf16.mxu0 0
    %1960 = vmatpush1.bf16.msra.mxu0 0
    %1961 = vmatprep.subr.bf16.mxu0 0
    %1962 = vmatpush1.bf16.msra.mxu0 0
    %1963 = vmatprep.subr.bf16.mxu0 0
    %1964 = vmatpush1.bf16.msra.mxu0 0
    %1965 = vmatprep.subr.bf16.mxu0 0
    %1966 = vmatpush1.bf16.msra.mxu0 0
    %1967 = vmatprep.subr.bf16.mxu0 0
    %1968 = vmatpush1.bf16.msra.mxu0 0
    %1969 = vmatprep.subr.bf16.mxu0 0
    %1970 = vmatpush1.bf16.msra.mxu0 0
    %1971 = vmatprep.subr.bf16.mxu0 0
    %1972 = vmatpush1.bf16.msra.mxu0 0
    %1973 = vmatprep.mubr.bf16.mxu0 0
    %1974 = vmatmul.mubr.bf16.gmra.mrb[0].mxu0 %v241
    %v1975 = vpop.f32.mrb[0].mxu0
    %v1976 = vadd.f32 0.0, %v1975
    %v1977 = vpop.f32.mrb[0].mxu0
    %v1978 = vpop.f32.mrb[0].mxu0
    %v1979 = vadd.f32 0.0, %v1978
    %v1980 = vpop.f32.mrb[0].mxu0
    %1981 = vmatprep.mubr.bf16.mxu0 0
    %1982 = vmatmul.mubr.bf16.gmra.mrb[0].mxu0 %v242
    %v1983 = vpop.f32.mrb[0].mxu0
    %v1984 = vadd.f32 0.0, %v1983
    %v1985 = vpop.f32.mrb[0].mxu0
    %v1986 = vpop.f32.mrb[0].mxu0
    %v1987 = vadd.f32 0.0, %v1986
    %v1988 = vpop.f32.mrb[0].mxu0
    %1989 = vmatprep.mubr.bf16.mxu0 0
    %1990 = vmatmul.mubr.bf16.gmra.mrb[0].mxu0 %v243
    %v1991 = vpop.f32.mrb[0].mxu0
    %v1992 = vadd.f32 0.0, %v1991
    %v1993 = vpop.f32.mrb[0].mxu0
    %v1994 = vpop.f32.mrb[0].mxu0
    %v1995 = vadd.f32 0.0, %v1994
    %v1996 = vpop.f32.mrb[0].mxu0
    %1997 = vmatprep.mubr.bf16.mxu0 0
    %1998 = vmatmul.mubr.bf16.gmra.mrb[0].mxu0 %v244
    %v1999 = vpop.f32.mrb[0].mxu0
    %v2000 = vadd.f32 0.0, %v1999
    %v2001 = vpop.f32.mrb[0].mxu0
    %v2002 = vpop.f32.mrb[0].mxu0
    %v2003 = vadd.f32 0.0, %v2002
    %v2004 = vpop.f32.mrb[0].mxu0
    %2005 = vmatprep.mubr.bf16.mxu0 0
    %2006 = vmatmul.mubr.bf16.gmra.mrb[0].mxu0 %v245
    %v2007 = vpop.f32.mrb[0].mxu0
    %v2008 = vadd.f32 0.0, %v2007
    %v2009 = vpop.f32.mrb[0].mxu0
    %v2010 = vpop.f32.mrb[0].mxu0
    %v2011 = vadd.f32 0.0, %v2010
    %v2012 = vpop.f32.mrb[0].mxu0
    %2013 = vmatprep.mubr.bf16.mxu0 0
    %2014 = vmatmul.mubr.bf16.gmra.mrb[0].mxu0 %v246
    %v2015 = vpop.f32.mrb[0].mxu0
    %v2016 = vadd.f32 0.0, %v2015
    %v2017 = vpop.f32.mrb[0].mxu0
    %v2018 = vpop.f32.mrb[0].mxu0
    %v2019 = vadd.f32 0.0, %v2018
    %v2020 = vpop.f32.mrb[0].mxu0
    %2021 = vmatprep.mubr.bf16.mxu0 0
    %2022 = vmatmul.mubr.bf16.gmra.mrb[0].mxu0 %v247
    %v2023 = vpop.f32.mrb[0].mxu0
    %v2024 = vadd.f32 0.0, %v2023
    %v2025 = vpop.f32.mrb[0].mxu0
    %v2026 = vpop.f32.mrb[0].mxu0
    %v2027 = vadd.f32 0.0, %v2026
    %v2028 = vpop.f32.mrb[0].mxu0
    %2029 = vmatprep.mubr.bf16.mxu0 0
    %2030 = vmatmul.mubr.bf16.gmra.mrb[0].mxu0 %v248
    %v2031 = vpop.f32.mrb[0].mxu0
    %v2032 = vadd.f32 0.0, %v2031
    %v2033 = vpop.f32.mrb[0].mxu0
    %v2034 = vpop.f32.mrb[0].mxu0
    %v2035 = vadd.f32 0.0, %v2034
    %v2036 = vpop.f32.mrb[0].mxu0
    %2037 = vdwg.mxu0
    %2038 = vmatprep.subr.bf16.mxu0 0
    %2039 = vmatpush1.bf16.msra.mxu0 %v1917
    %2040 = vmatprep.subr.bf16.mxu0 0
    %2041 = vmatpush1.bf16.msra.mxu0 %v1918
    %2042 = vmatprep.subr.bf16.mxu0 0
    %2043 = vmatpush1.bf16.msra.mxu0 %v1919
    %2044 = vmatprep.subr.bf16.mxu0 0
    %2045 = vmatpush1.bf16.msra.mxu0 %v1920
    %2046 = vmatprep.subr.bf16.mxu0 0
    %2047 = vmatpush1.bf16.msra.mxu0 %v1921
    %2048 = vmatprep.subr.bf16.mxu0 0
    %2049 = vmatpush1.bf16.msra.mxu0 %v1922
    %2050 = vmatprep.subr.bf16.mxu0 0
    %2051 = vmatpush1.bf16.msra.mxu0 %v1923
    %2052 = vmatprep.subr.bf16.mxu0 0
    %2053 = vmatpush1.bf16.msra.mxu0 %v1924
    %2054 = vmatprep.subr.bf16.mxu0 0
    %2055 = vmatpush1.bf16.msra.mxu0 0
    %2056 = vmatprep.subr.bf16.mxu0 0
    %2057 = vmatpush1.bf16.msra.mxu0 0
    %2058 = vmatprep.subr.bf16.mxu0 0
    %2059 = vmatpush1.bf16.msra.mxu0 0
    %2060 = vmatprep.subr.bf16.mxu0 0
    %2061 = vmatpush1.bf16.msra.mxu0 0
    %2062 = vmatprep.subr.bf16.mxu0 0
    %2063 = vmatpush1.bf16.msra.mxu0 0
    %2064 = vmatprep.subr.bf16.mxu0 0
    %2065 = vmatpush1.bf16.msra.mxu0 0
    %2066 = vmatprep.subr.bf16.mxu0 0
    %2067 = vmatpush1.bf16.msra.mxu0 0
    %2068 = vmatprep.subr.bf16.mxu0 0
    %2069 = vmatpush1.bf16.msra.mxu0 0
    %2070 = vmatprep.mubr.bf16.mxu0 0
    %2071 = vmatmul.mubr.bf16.gmra.mrb[0].mxu0 %v434
    %v2072 = vpop.f32.mrb[0].mxu0
    %v2073 = vadd.f32 0.0, %v2072
    %v2074 = vpop.f32.mrb[0].mxu0
    %v2075 = vpop.f32.mrb[0].mxu0
    %v2076 = vadd.f32 0.0, %v2075
    %v2077 = vpop.f32.mrb[0].mxu0
    %2078 = vmatprep.mubr.bf16.mxu0 0
    %2079 = vmatmul.mubr.bf16.gmra.mrb[0].mxu0 %v435
    %v2080 = vpop.f32.mrb[0].mxu0
    %v2081 = vadd.f32 0.0, %v2080
    %v2082 = vpop.f32.mrb[0].mxu0
    %v2083 = vpop.f32.mrb[0].mxu0
    %v2084 = vadd.f32 0.0, %v2083
    %v2085 = vpop.f32.mrb[0].mxu0
    %2086 = vmatprep.mubr.bf16.mxu0 0
    %2087 = vmatmul.mubr.bf16.gmra.mrb[0].mxu0 %v436
    %v2088 = vpop.f32.mrb[0].mxu0
    %v2089 = vadd.f32 0.0, %v2088
    %v2090 = vpop.f32.mrb[0].mxu0
    %v2091 = vpop.f32.mrb[0].mxu0
    %v2092 = vadd.f32 0.0, %v2091
    %v2093 = vpop.f32.mrb[0].mxu0
    %2094 = vmatprep.mubr.bf16.mxu0 0
    %2095 = vmatmul.mubr.bf16.gmra.mrb[0].mxu0 %v437
    %v2096 = vpop.f32.mrb[0].mxu0
    %v2097 = vadd.f32 0.0, %v2096
    %v2098 = vpop.f32.mrb[0].mxu0
    %v2099 = vpop.f32.mrb[0].mxu0
    %v2100 = vadd.f32 0.0, %v2099
    %v2101 = vpop.f32.mrb[0].mxu0
    %2102 = vmatprep.mubr.bf16.mxu0 0
    %2103 = vmatmul.mubr.bf16.gmra.mrb[0].mxu0 %v438
    %v2104 = vpop.f32.mrb[0].mxu0
    %v2105 = vadd.f32 0.0, %v2104
    %v2106 = vpop.f32.mrb[0].mxu0
    %v2107 = vpop.f32.mrb[0].mxu0
    %v2108 = vadd.f32 0.0, %v2107
    %v2109 = vpop.f32.mrb[0].mxu0
    %2110 = vmatprep.mubr.bf16.mxu0 0
    %2111 = vmatmul.mubr.bf16.gmra.mrb[0].mxu0 %v439
    %v2112 = vpop.f32.mrb[0].mxu0
    %v2113 = vadd.f32 0.0, %v2112
    %v2114 = vpop.f32.mrb[0].mxu0
    %v2115 = vpop.f32.mrb[0].mxu0
    %v2116 = vadd.f32 0.0, %v2115
    %v2117 = vpop.f32.mrb[0].mxu0
    %2118 = vmatprep.mubr.bf16.mxu0 0
    %2119 = vmatmul.mubr.bf16.gmra.mrb[0].mxu0 %v440
    %v2120 = vpop.f32.mrb[0].mxu0
    %v2121 = vadd.f32 0.0, %v2120
    %v2122 = vpop.f32.mrb[0].mxu0
    %v2123 = vpop.f32.mrb[0].mxu0
    %v2124 = vadd.f32 0.0, %v2123
    %v2125 = vpop.f32.mrb[0].mxu0
    %2126 = vmatprep.mubr.bf16.mxu0 0
    %2127 = vmatmul.mubr.bf16.gmra.mrb[0].mxu0 %v441
    %v2128 = vpop.f32.mrb[0].mxu0
    %v2129 = vadd.f32 0.0, %v2128
    %v2130 = vpop.f32.mrb[0].mxu0
    %v2131 = vpop.f32.mrb[0].mxu0
    %v2132 = vadd.f32 0.0, %v2131
    %v2133 = vpop.f32.mrb[0].mxu0
    %2134 = vdwg.mxu0
    %2135 = vmatprep.subr.bf16.mxu0 0
    %2136 = vmatpush1.bf16.msra.mxu0 %v1925
    %2137 = vmatprep.subr.bf16.mxu0 0
    %2138 = vmatpush1.bf16.msra.mxu0 %v1926
    %2139 = vmatprep.subr.bf16.mxu0 0
    %2140 = vmatpush1.bf16.msra.mxu0 %v1927
    %2141 = vmatprep.subr.bf16.mxu0 0
    %2142 = vmatpush1.bf16.msra.mxu0 %v1928
    %2143 = vmatprep.subr.bf16.mxu0 0
    %2144 = vmatpush1.bf16.msra.mxu0 %v1929
    %2145 = vmatprep.subr.bf16.mxu0 0
    %2146 = vmatpush1.bf16.msra.mxu0 %v1930
    %2147 = vmatprep.subr.bf16.mxu0 0
    %2148 = vmatpush1.bf16.msra.mxu0 %v1931
    %2149 = vmatprep.subr.bf16.mxu0 0
    %2150 = vmatpush1.bf16.msra.mxu0 %v1932
    %2151 = vmatprep.subr.bf16.mxu0 0
    %2152 = vmatpush1.bf16.msra.mxu0 0
    %2153 = vmatprep.subr.bf16.mxu0 0
    %2154 = vmatpush1.bf16.msra.mxu0 0
    %2155 = vmatprep.subr.bf16.mxu0 0
    %2156 = vmatpush1.bf16.msra.mxu0 0
    %2157 = vmatprep.subr.bf16.mxu0 0
    %2158 = vmatpush1.bf16.msra.mxu0 0
    %2159 = vmatprep.subr.bf16.mxu0 0
    %2160 = vmatpush1.bf16.msra.mxu0 0
    %2161 = vmatprep.subr.bf16.mxu0 0
    %2162 = vmatpush1.bf16.msra.mxu0 0
    %2163 = vmatprep.subr.bf16.mxu0 0
    %2164 = vmatpush1.bf16.msra.mxu0 0
    %2165 = vmatprep.subr.bf16.mxu0 0
    %2166 = vmatpush1.bf16.msra.mxu0 0
    %2167 = vmatprep.mubr.bf16.mxu0 0
    %2168 = vmatmul.mubr.bf16.gmra.mrb[0].mxu0 %v627
    %v2169 = vpop.f32.mrb[0].mxu0
    %v2170 = vadd.f32 0.0, %v2169
    %v2171 = vpop.f32.mrb[0].mxu0
    %v2172 = vpop.f32.mrb[0].mxu0
    %v2173 = vadd.f32 0.0, %v2172
    %v2174 = vpop.f32.mrb[0].mxu0
    %2175 = vmatprep.mubr.bf16.mxu0 0
    %2176 = vmatmul.mubr.bf16.gmra.mrb[0].mxu0 %v628
    %v2177 = vpop.f32.mrb[0].mxu0
    %v2178 = vadd.f32 0.0, %v2177
    %v2179 = vpop.f32.mrb[0].mxu0
    %v2180 = vpop.f32.mrb[0].mxu0
    %v2181 = vadd.f32 0.0, %v2180
    %v2182 = vpop.f32.mrb[0].mxu0
    %2183 = vmatprep.mubr.bf16.mxu0 0
    %2184 = vmatmul.mubr.bf16.gmra.mrb[0].mxu0 %v629
    %v2185 = vpop.f32.mrb[0].mxu0
    %v2186 = vadd.f32 0.0, %v2185
    %v2187 = vpop.f32.mrb[0].mxu0
    %v2188 = vpop.f32.mrb[0].mxu0
    %v2189 = vadd.f32 0.0, %v2188
    %v2190 = vpop.f32.mrb[0].mxu0
    %2191 = vmatprep.mubr.bf16.mxu0 0
    %2192 = vmatmul.mubr.bf16.gmra.mrb[0].mxu0 %v630
    %v2193 = vpop.f32.mrb[0].mxu0
    %v2194 = vadd.f32 0.0, %v2193
    %v2195 = vpop.f32.mrb[0].mxu0
    %v2196 = vpop.f32.mrb[0].mxu0
    %v2197 = vadd.f32 0.0, %v2196
    %v2198 = vpop.f32.mrb[0].mxu0
    %2199 = vmatprep.mubr.bf16.mxu0 0
    %2200 = vmatmul.mubr.bf16.gmra.mrb[0].mxu0 %v631
    %v2201 = vpop.f32.mrb[0].mxu0
    %v2202 = vadd.f32 0.0, %v2201
    %v2203 = vpop.f32.mrb[0].mxu0
    %v2204 = vpop.f32.mrb[0].mxu0
    %v2205 = vadd.f32 0.0, %v2204
    %v2206 = vpop.f32.mrb[0].mxu0
    %2207 = vmatprep.mubr.bf16.mxu0 0
    %2208 = vmatmul.mubr.bf16.gmra.mrb[0].mxu0 %v632
    %v2209 = vpop.f32.mrb[0].mxu0
    %v2210 = vadd.f32 0.0, %v2209
    %v2211 = vpop.f32.mrb[0].mxu0
    %v2212 = vpop.f32.mrb[0].mxu0
    %v2213 = vadd.f32 0.0, %v2212
    %v2214 = vpop.f32.mrb[0].mxu0
    %2215 = vmatprep.mubr.bf16.mxu0 0
    %2216 = vmatmul.mubr.bf16.gmra.mrb[0].mxu0 %v633
    %v2217 = vpop.f32.mrb[0].mxu0
    %v2218 = vadd.f32 0.0, %v2217
    %v2219 = vpop.f32.mrb[0].mxu0
    %v2220 = vpop.f32.mrb[0].mxu0
    %v2221 = vadd.f32 0.0, %v2220
    %v2222 = vpop.f32.mrb[0].mxu0
    %2223 = vmatprep.mubr.bf16.mxu0 0
    %2224 = vmatmul.mubr.bf16.gmra.mrb[0].mxu0 %v634
    %v2225 = vpop.f32.mrb[0].mxu0
    %v2226 = vadd.f32 0.0, %v2225
    %v2227 = vpop.f32.mrb[0].mxu0
    %v2228 = vpop.f32.mrb[0].mxu0
    %v2229 = vadd.f32 0.0, %v2228
    %v2230 = vpop.f32.mrb[0].mxu0
    %2231 = vdwg.mxu0
    %2232 = vmatprep.subr.bf16.mxu0 0
    %2233 = vmatpush1.bf16.msra.mxu0 %v1933
    %2234 = vmatprep.subr.bf16.mxu0 0
    %2235 = vmatpush1.bf16.msra.mxu0 %v1934
    %2236 = vmatprep.subr.bf16.mxu0 0
    %2237 = vmatpush1.bf16.msra.mxu0 %v1935
    %2238 = vmatprep.subr.bf16.mxu0 0
    %2239 = vmatpush1.bf16.msra.mxu0 %v1936
    %2240 = vmatprep.subr.bf16.mxu0 0
    %2241 = vmatpush1.bf16.msra.mxu0 %v1937
    %2242 = vmatprep.subr.bf16.mxu0 0
    %2243 = vmatpush1.bf16.msra.mxu0 %v1938
    %2244 = vmatprep.subr.bf16.mxu0 0
    %2245 = vmatpush1.bf16.msra.mxu0 %v1939
    %2246 = vmatprep.subr.bf16.mxu0 0
    %2247 = vmatpush1.bf16.msra.mxu0 %v1940
    %2248 = vmatprep.subr.bf16.mxu0 0
    %2249 = vmatpush1.bf16.msra.mxu0 0
    %2250 = vmatprep.subr.bf16.mxu0 0
    %2251 = vmatpush1.bf16.msra.mxu0 0
    %2252 = vmatprep.subr.bf16.mxu0 0
    %2253 = vmatpush1.bf16.msra.mxu0 0
    %2254 = vmatprep.subr.bf16.mxu0 0
    %2255 = vmatpush1.bf16.msra.mxu0 0
    %2256 = vmatprep.subr.bf16.mxu0 0
    %2257 = vmatpush1.bf16.msra.mxu0 0
    %2258 = vmatprep.subr.bf16.mxu0 0
    %2259 = vmatpush1.bf16.msra.mxu0 0
    %2260 = vmatprep.subr.bf16.mxu0 0
    %2261 = vmatpush1.bf16.msra.mxu0 0
    %2262 = vmatprep.subr.bf16.mxu0 0
    %2263 = vmatpush1.bf16.msra.mxu0 0
    %2264 = vmatprep.mubr.bf16.mxu0 0
    %2265 = vmatmul.mubr.bf16.gmra.mrb[0].mxu0 %v820
    %v2266 = vpop.f32.mrb[0].mxu0
    %v2267 = vadd.f32 0.0, %v2266
    %v2268 = vpop.f32.mrb[0].mxu0
    %v2269 = vpop.f32.mrb[0].mxu0
    %v2270 = vadd.f32 0.0, %v2269
    %v2271 = vpop.f32.mrb[0].mxu0
    %2272 = vmatprep.mubr.bf16.mxu0 0
    %2273 = vmatmul.mubr.bf16.gmra.mrb[0].mxu0 %v821
    %v2274 = vpop.f32.mrb[0].mxu0
    %v2275 = vadd.f32 0.0, %v2274
    %v2276 = vpop.f32.mrb[0].mxu0
    %v2277 = vpop.f32.mrb[0].mxu0
    %v2278 = vadd.f32 0.0, %v2277
    %v2279 = vpop.f32.mrb[0].mxu0
    %2280 = vmatprep.mubr.bf16.mxu0 0
    %2281 = vmatmul.mubr.bf16.gmra.mrb[0].mxu0 %v822
    %v2282 = vpop.f32.mrb[0].mxu0
    %v2283 = vadd.f32 0.0, %v2282
    %v2284 = vpop.f32.mrb[0].mxu0
    %v2285 = vpop.f32.mrb[0].mxu0
    %v2286 = vadd.f32 0.0, %v2285
    %v2287 = vpop.f32.mrb[0].mxu0
    %2288 = vmatprep.mubr.bf16.mxu0 0
    %2289 = vmatmul.mubr.bf16.gmra.mrb[0].mxu0 %v823
    %v2290 = vpop.f32.mrb[0].mxu0
    %v2291 = vadd.f32 0.0, %v2290
    %v2292 = vpop.f32.mrb[0].mxu0
    %v2293 = vpop.f32.mrb[0].mxu0
    %v2294 = vadd.f32 0.0, %v2293
    %v2295 = vpop.f32.mrb[0].mxu0
    %2296 = vmatprep.mubr.bf16.mxu0 0
    %2297 = vmatmul.mubr.bf16.gmra.mrb[0].mxu0 %v824
    %v2298 = vpop.f32.mrb[0].mxu0
    %v2299 = vadd.f32 0.0, %v2298
    %v2300 = vpop.f32.mrb[0].mxu0
    %v2301 = vpop.f32.mrb[0].mxu0
    %v2302 = vadd.f32 0.0, %v2301
    %v2303 = vpop.f32.mrb[0].mxu0
    %2304 = vmatprep.mubr.bf16.mxu0 0
    %2305 = vmatmul.mubr.bf16.gmra.mrb[0].mxu0 %v825
    %v2306 = vpop.f32.mrb[0].mxu0
    %v2307 = vadd.f32 0.0, %v2306
    %v2308 = vpop.f32.mrb[0].mxu0
    %v2309 = vpop.f32.mrb[0].mxu0
    %v2310 = vadd.f32 0.0, %v2309
    %v2311 = vpop.f32.mrb[0].mxu0
    %2312 = vmatprep.mubr.bf16.mxu0 0
    %2313 = vmatmul.mubr.bf16.gmra.mrb[0].mxu0 %v826
    %v2314 = vpop.f32.mrb[0].mxu0
    %v2315 = vadd.f32 0.0, %v2314
    %v2316 = vpop.f32.mrb[0].mxu0
    %v2317 = vpop.f32.mrb[0].mxu0
    %v2318 = vadd.f32 0.0, %v2317
    %v2319 = vpop.f32.mrb[0].mxu0
    %2320 = vmatprep.mubr.bf16.mxu0 0
    %2321 = vmatmul.mubr.bf16.gmra.mrb[0].mxu0 %v827
    %v2322 = vpop.f32.mrb[0].mxu0
    %v2323 = vadd.f32 0.0, %v2322
    %v2324 = vpop.f32.mrb[0].mxu0
    %v2325 = vpop.f32.mrb[0].mxu0
    %v2326 = vadd.f32 0.0, %v2325
    %v2327 = vpop.f32.mrb[0].mxu0
    %2328 = vdwg.mxu0
    %v2329 = vld [vmem:[#allocation5] sm:$0x1]
    %v2331 = vlaneseq
    %v2332 = vshrl.u32 %v2331, 7
    %v2333 = vsub.s32 0, %v2332
    %v2334 = vrot.slane %v2329, %v2333
    %v2336 = vadd.f32 %v1976, %v2334
    %v2337 = vadd.f32 %v1979, %v2334
    %v2338 = vadd.f32 %v1984, %v2334
    %v2339 = vadd.f32 %v1987, %v2334
    %v2340 = vadd.f32 %v1992, %v2334
    %v2341 = vadd.f32 %v1995, %v2334
    %v2342 = vadd.f32 %v2000, %v2334
    %v2343 = vadd.f32 %v2003, %v2334
    %v2344 = vadd.f32 %v2008, %v2334
    %v2345 = vadd.f32 %v2011, %v2334
    %v2346 = vadd.f32 %v2016, %v2334
    %v2347 = vadd.f32 %v2019, %v2334
    %v2348 = vadd.f32 %v2024, %v2334
    %v2349 = vadd.f32 %v2027, %v2334
    %v2350 = vadd.f32 %v2032, %v2334
    %v2351 = vadd.f32 %v2035, %v2334
    %v2352 = vadd.f32 %v2073, %v2334
    %v2353 = vadd.f32 %v2076, %v2334
    %v2354 = vadd.f32 %v2081, %v2334
    %v2355 = vadd.f32 %v2084, %v2334
    %v2356 = vadd.f32 %v2089, %v2334
    %v2357 = vadd.f32 %v2092, %v2334
    %v2358 = vadd.f32 %v2097, %v2334
    %v2359 = vadd.f32 %v2100, %v2334
    %v2360 = vadd.f32 %v2105, %v2334
    %v2361 = vadd.f32 %v2108, %v2334
    %v2362 = vadd.f32 %v2113, %v2334
    %v2363 = vadd.f32 %v2116, %v2334
    %v2364 = vadd.f32 %v2121, %v2334
    %v2365 = vadd.f32 %v2124, %v2334
    %v2366 = vadd.f32 %v2129, %v2334
    %v2367 = vadd.f32 %v2132, %v2334
    %v2368 = vadd.f32 %v2170, %v2334
    %v2369 = vadd.f32 %v2173, %v2334
    %v2370 = vadd.f32 %v2178, %v2334
    %v2371 = vadd.f32 %v2181, %v2334
    %v2372 = vadd.f32 %v2186, %v2334
    %v2373 = vadd.f32 %v2189, %v2334
    %v2374 = vadd.f32 %v2194, %v2334
    %v2375 = vadd.f32 %v2197, %v2334
    %v2376 = vadd.f32 %v2202, %v2334
    %v2377 = vadd.f32 %v2205, %v2334
    %v2378 = vadd.f32 %v2210, %v2334
    %v2379 = vadd.f32 %v2213, %v2334
    %v2380 = vadd.f32 %v2218, %v2334
    %v2381 = vadd.f32 %v2221, %v2334
    %v2382 = vadd.f32 %v2226, %v2334
    %v2383 = vadd.f32 %v2229, %v2334
    %v2384 = vadd.f32 %v2267, %v2334
    %v2385 = vadd.f32 %v2270, %v2334
    %v2386 = vadd.f32 %v2275, %v2334
    %v2387 = vadd.f32 %v2278, %v2334
    %v2388 = vadd.f32 %v2283, %v2334
    %v2389 = vadd.f32 %v2286, %v2334
    %v2390 = vadd.f32 %v2291, %v2334
    %v2391 = vadd.f32 %v2294, %v2334
    %v2392 = vadd.f32 %v2299, %v2334
    %v2393 = vadd.f32 %v2302, %v2334
    %v2394 = vadd.f32 %v2307, %v2334
    %v2395 = vadd.f32 %v2310, %v2334
    %v2396 = vadd.f32 %v2315, %v2334
    %v2397 = vadd.f32 %v2318, %v2334
    %v2398 = vadd.f32 %v2323, %v2334
    %v2399 = vadd.f32 %v2326, %v2334
    %v2400 = vmax.f32 %v2336, 0.0
    %v2401 = vmax.f32 %v2337, 0.0
    %v2402 = vmax.f32 %v2338, 0.0
    %v2403 = vmax.f32 %v2339, 0.0
    %v2404 = vmax.f32 %v2340, 0.0
    %v2405 = vmax.f32 %v2341, 0.0
    %v2406 = vmax.f32 %v2342, 0.0
    %v2407 = vmax.f32 %v2343, 0.0
    %v2408 = vmax.f32 %v2344, 0.0
    %v2409 = vmax.f32 %v2345, 0.0
    %v2410 = vmax.f32 %v2346, 0.0
    %v2411 = vmax.f32 %v2347, 0.0
    %v2412 = vmax.f32 %v2348, 0.0
    %v2413 = vmax.f32 %v2349, 0.0
    %v2414 = vmax.f32 %v2350, 0.0
    %v2415 = vmax.f32 %v2351, 0.0
    %v2416 = vmax.f32 %v2352, 0.0
    %v2417 = vmax.f32 %v2353, 0.0
    %v2418 = vmax.f32 %v2354, 0.0
    %v2419 = vmax.f32 %v2355, 0.0
    %v2420 = vmax.f32 %v2356, 0.0
    %v2421 = vmax.f32 %v2357, 0.0
    %v2422 = vmax.f32 %v2358, 0.0
    %v2423 = vmax.f32 %v2359, 0.0
    %v2424 = vmax.f32 %v2360, 0.0
    %v2425 = vmax.f32 %v2361, 0.0
    %v2426 = vmax.f32 %v2362, 0.0
    %v2427 = vmax.f32 %v2363, 0.0
    %v2428 = vmax.f32 %v2364, 0.0
    %v2429 = vmax.f32 %v2365, 0.0
    %v2430 = vmax.f32 %v2366, 0.0
    %v2431 = vmax.f32 %v2367, 0.0
    %v2432 = vmax.f32 %v2368, 0.0
    %v2433 = vmax.f32 %v2369, 0.0
    %v2434 = vmax.f32 %v2370, 0.0
    %v2435 = vmax.f32 %v2371, 0.0
    %v2436 = vmax.f32 %v2372, 0.0
    %v2437 = vmax.f32 %v2373, 0.0
    %v2438 = vmax.f32 %v2374, 0.0
    %v2439 = vmax.f32 %v2375, 0.0
    %v2440 = vmax.f32 %v2376, 0.0
    %v2441 = vmax.f32 %v2377, 0.0
    %v2442 = vmax.f32 %v2378, 0.0
    %v2443 = vmax.f32 %v2379, 0.0
    %v2444 = vmax.f32 %v2380, 0.0
    %v2445 = vmax.f32 %v2381, 0.0
    %v2446 = vmax.f32 %v2382, 0.0
    %v2447 = vmax.f32 %v2383, 0.0
    %v2448 = vmax.f32 %v2384, 0.0
    %v2449 = vmax.f32 %v2385, 0.0
    %v2450 = vmax.f32 %v2386, 0.0
    %v2451 = vmax.f32 %v2387, 0.0
    %v2452 = vmax.f32 %v2388, 0.0
    %v2453 = vmax.f32 %v2389, 0.0
    %v2454 = vmax.f32 %v2390, 0.0
    %v2455 = vmax.f32 %v2391, 0.0
    %v2456 = vmax.f32 %v2392, 0.0
    %v2457 = vmax.f32 %v2393, 0.0
    %v2458 = vmax.f32 %v2394, 0.0
    %v2459 = vmax.f32 %v2395, 0.0
    %v2460 = vmax.f32 %v2396, 0.0
    %v2461 = vmax.f32 %v2397, 0.0
    %v2462 = vmax.f32 %v2398, 0.0
    %v2463 = vmax.f32 %v2399, 0.0
    %v2464 = vsel %vm1523, %v2400, 0.0
    %v2465 = vrot.slane %v2464, 4
    %v2466 = vadd.f32 %v2464, %v2465
    %v2467 = vrot.slane %v2466, 2
    %v2468 = vadd.f32 %v2466, %v2467
    %v2469 = vrot.slane %v2468, 1
    %v2470 = vadd.f32 %v2468, %v2469
    %v2471 = vsel %vm1523, %v2401, 0.0
    %v2472 = vrot.slane %v2471, 4
    %v2473 = vadd.f32 %v2471, %v2472
    %v2474 = vrot.slane %v2473, 2
    %v2475 = vadd.f32 %v2473, %v2474
    %v2476 = vrot.slane %v2475, 1
    %v2477 = vadd.f32 %v2475, %v2476
    %v2478 = vsel %vm1523, %v2402, 0.0
    %v2479 = vrot.slane %v2478, 4
    %v2480 = vadd.f32 %v2478, %v2479
    %v2481 = vrot.slane %v2480, 2
    %v2482 = vadd.f32 %v2480, %v2481
    %v2483 = vrot.slane %v2482, 1
    %v2484 = vadd.f32 %v2482, %v2483
    %v2485 = vsel %vm1523, %v2403, 0.0
    %v2486 = vrot.slane %v2485, 4
    %v2487 = vadd.f32 %v2485, %v2486
    %v2488 = vrot.slane %v2487, 2
    %v2489 = vadd.f32 %v2487, %v2488
    %v2490 = vrot.slane %v2489, 1
    %v2491 = vadd.f32 %v2489, %v2490
    %v2492 = vsel %vm1523, %v2404, 0.0
    %v2493 = vrot.slane %v2492, 4
    %v2494 = vadd.f32 %v2492, %v2493
    %v2495 = vrot.slane %v2494, 2
    %v2496 = vadd.f32 %v2494, %v2495
    %v2497 = vrot.slane %v2496, 1
    %v2498 = vadd.f32 %v2496, %v2497
    %v2499 = vsel %vm1523, %v2405, 0.0
    %v2500 = vrot.slane %v2499, 4
    %v2501 = vadd.f32 %v2499, %v2500
    %v2502 = vrot.slane %v2501, 2
    %v2503 = vadd.f32 %v2501, %v2502
    %v2504 = vrot.slane %v2503, 1
    %v2505 = vadd.f32 %v2503, %v2504
    %v2506 = vsel %vm1523, %v2406, 0.0
    %v2507 = vrot.slane %v2506, 4
    %v2508 = vadd.f32 %v2506, %v2507
    %v2509 = vrot.slane %v2508, 2
    %v2510 = vadd.f32 %v2508, %v2509
    %v2511 = vrot.slane %v2510, 1
    %v2512 = vadd.f32 %v2510, %v2511
    %v2513 = vsel %vm1523, %v2407, 0.0
    %v2514 = vrot.slane %v2513, 4
    %v2515 = vadd.f32 %v2513, %v2514
    %v2516 = vrot.slane %v2515, 2
    %v2517 = vadd.f32 %v2515, %v2516
    %v2518 = vrot.slane %v2517, 1
    %v2519 = vadd.f32 %v2517, %v2518
    %v2520 = vsel %vm1523, %v2408, 0.0
    %v2521 = vrot.slane %v2520, 4
    %v2522 = vadd.f32 %v2520, %v2521
    %v2523 = vrot.slane %v2522, 2
    %v2524 = vadd.f32 %v2522, %v2523
    %v2525 = vrot.slane %v2524, 1
    %v2526 = vadd.f32 %v2524, %v2525
    %v2527 = vsel %vm1523, %v2409, 0.0
    %v2528 = vrot.slane %v2527, 4
    %v2529 = vadd.f32 %v2527, %v2528
    %v2530 = vrot.slane %v2529, 2
    %v2531 = vadd.f32 %v2529, %v2530
    %v2532 = vrot.slane %v2531, 1
    %v2533 = vadd.f32 %v2531, %v2532
    %v2534 = vsel %vm1523, %v2410, 0.0
    %v2535 = vrot.slane %v2534, 4
    %v2536 = vadd.f32 %v2534, %v2535
    %v2537 = vrot.slane %v2536, 2
    %v2538 = vadd.f32 %v2536, %v2537
    %v2539 = vrot.slane %v2538, 1
    %v2540 = vadd.f32 %v2538, %v2539
    %v2541 = vsel %vm1523, %v2411, 0.0
    %v2542 = vrot.slane %v2541, 4
    %v2543 = vadd.f32 %v2541, %v2542
    %v2544 = vrot.slane %v2543, 2
    %v2545 = vadd.f32 %v2543, %v2544
    %v2546 = vrot.slane %v2545, 1
    %v2547 = vadd.f32 %v2545, %v2546
    %v2548 = vsel %vm1523, %v2412, 0.0
    %v2549 = vrot.slane %v2548, 4
    %v2550 = vadd.f32 %v2548, %v2549
    %v2551 = vrot.slane %v2550, 2
    %v2552 = vadd.f32 %v2550, %v2551
    %v2553 = vrot.slane %v2552, 1
    %v2554 = vadd.f32 %v2552, %v2553
    %v2555 = vsel %vm1523, %v2413, 0.0
    %v2556 = vrot.slane %v2555, 4
    %v2557 = vadd.f32 %v2555, %v2556
    %v2558 = vrot.slane %v2557, 2
    %v2559 = vadd.f32 %v2557, %v2558
    %v2560 = vrot.slane %v2559, 1
    %v2561 = vadd.f32 %v2559, %v2560
    %v2562 = vsel %vm1523, %v2414, 0.0
    %v2563 = vrot.slane %v2562, 4
    %v2564 = vadd.f32 %v2562, %v2563
    %v2565 = vrot.slane %v2564, 2
    %v2566 = vadd.f32 %v2564, %v2565
    %v2567 = vrot.slane %v2566, 1
    %v2568 = vadd.f32 %v2566, %v2567
    %v2569 = vsel %vm1523, %v2415, 0.0
    %v2570 = vrot.slane %v2569, 4
    %v2571 = vadd.f32 %v2569, %v2570
    %v2572 = vrot.slane %v2571, 2
    %v2573 = vadd.f32 %v2571, %v2572
    %v2574 = vrot.slane %v2573, 1
    %v2575 = vadd.f32 %v2573, %v2574
    %v2576 = vsel %vm1523, %v2416, 0.0
    %v2577 = vrot.slane %v2576, 4
    %v2578 = vadd.f32 %v2576, %v2577
    %v2579 = vrot.slane %v2578, 2
    %v2580 = vadd.f32 %v2578, %v2579
    %v2581 = vrot.slane %v2580, 1
    %v2582 = vadd.f32 %v2580, %v2581
    %v2583 = vsel %vm1523, %v2417, 0.0
    %v2584 = vrot.slane %v2583, 4
    %v2585 = vadd.f32 %v2583, %v2584
    %v2586 = vrot.slane %v2585, 2
    %v2587 = vadd.f32 %v2585, %v2586
    %v2588 = vrot.slane %v2587, 1
    %v2589 = vadd.f32 %v2587, %v2588
    %v2590 = vsel %vm1523, %v2418, 0.0
    %v2591 = vrot.slane %v2590, 4
    %v2592 = vadd.f32 %v2590, %v2591
    %v2593 = vrot.slane %v2592, 2
    %v2594 = vadd.f32 %v2592, %v2593
    %v2595 = vrot.slane %v2594, 1
    %v2596 = vadd.f32 %v2594, %v2595
    %v2597 = vsel %vm1523, %v2419, 0.0
    %v2598 = vrot.slane %v2597, 4
    %v2599 = vadd.f32 %v2597, %v2598
    %v2600 = vrot.slane %v2599, 2
    %v2601 = vadd.f32 %v2599, %v2600
    %v2602 = vrot.slane %v2601, 1
    %v2603 = vadd.f32 %v2601, %v2602
    %v2604 = vsel %vm1523, %v2420, 0.0
    %v2605 = vrot.slane %v2604, 4
    %v2606 = vadd.f32 %v2604, %v2605
    %v2607 = vrot.slane %v2606, 2
    %v2608 = vadd.f32 %v2606, %v2607
    %v2609 = vrot.slane %v2608, 1
    %v2610 = vadd.f32 %v2608, %v2609
    %v2611 = vsel %vm1523, %v2421, 0.0
    %v2612 = vrot.slane %v2611, 4
    %v2613 = vadd.f32 %v2611, %v2612
    %v2614 = vrot.slane %v2613, 2
    %v2615 = vadd.f32 %v2613, %v2614
    %v2616 = vrot.slane %v2615, 1
    %v2617 = vadd.f32 %v2615, %v2616
    %v2618 = vsel %vm1523, %v2422, 0.0
    %v2619 = vrot.slane %v2618, 4
    %v2620 = vadd.f32 %v2618, %v2619
    %v2621 = vrot.slane %v2620, 2
    %v2622 = vadd.f32 %v2620, %v2621
    %v2623 = vrot.slane %v2622, 1
    %v2624 = vadd.f32 %v2622, %v2623
    %v2625 = vsel %vm1523, %v2423, 0.0
    %v2626 = vrot.slane %v2625, 4
    %v2627 = vadd.f32 %v2625, %v2626
    %v2628 = vrot.slane %v2627, 2
    %v2629 = vadd.f32 %v2627, %v2628
    %v2630 = vrot.slane %v2629, 1
    %v2631 = vadd.f32 %v2629, %v2630
    %v2632 = vsel %vm1523, %v2424, 0.0
    %v2633 = vrot.slane %v2632, 4
    %v2634 = vadd.f32 %v2632, %v2633
    %v2635 = vrot.slane %v2634, 2
    %v2636 = vadd.f32 %v2634, %v2635
    %v2637 = vrot.slane %v2636, 1
    %v2638 = vadd.f32 %v2636, %v2637
    %v2639 = vsel %vm1523, %v2425, 0.0
    %v2640 = vrot.slane %v2639, 4
    %v2641 = vadd.f32 %v2639, %v2640
    %v2642 = vrot.slane %v2641, 2
    %v2643 = vadd.f32 %v2641, %v2642
    %v2644 = vrot.slane %v2643, 1
    %v2645 = vadd.f32 %v2643, %v2644
    %v2646 = vsel %vm1523, %v2426, 0.0
    %v2647 = vrot.slane %v2646, 4
    %v2648 = vadd.f32 %v2646, %v2647
    %v2649 = vrot.slane %v2648, 2
    %v2650 = vadd.f32 %v2648, %v2649
    %v2651 = vrot.slane %v2650, 1
    %v2652 = vadd.f32 %v2650, %v2651
    %v2653 = vsel %vm1523, %v2427, 0.0
    %v2654 = vrot.slane %v2653, 4
    %v2655 = vadd.f32 %v2653, %v2654
    %v2656 = vrot.slane %v2655, 2
    %v2657 = vadd.f32 %v2655, %v2656
    %v2658 = vrot.slane %v2657, 1
    %v2659 = vadd.f32 %v2657, %v2658
    %v2660 = vsel %vm1523, %v2428, 0.0
    %v2661 = vrot.slane %v2660, 4
    %v2662 = vadd.f32 %v2660, %v2661
    %v2663 = vrot.slane %v2662, 2
    %v2664 = vadd.f32 %v2662, %v2663
    %v2665 = vrot.slane %v2664, 1
    %v2666 = vadd.f32 %v2664, %v2665
    %v2667 = vsel %vm1523, %v2429, 0.0
    %v2668 = vrot.slane %v2667, 4
    %v2669 = vadd.f32 %v2667, %v2668
    %v2670 = vrot.slane %v2669, 2
    %v2671 = vadd.f32 %v2669, %v2670
    %v2672 = vrot.slane %v2671, 1
    %v2673 = vadd.f32 %v2671, %v2672
    %v2674 = vsel %vm1523, %v2430, 0.0
    %v2675 = vrot.slane %v2674, 4
    %v2676 = vadd.f32 %v2674, %v2675
    %v2677 = vrot.slane %v2676, 2
    %v2678 = vadd.f32 %v2676, %v2677
    %v2679 = vrot.slane %v2678, 1
    %v2680 = vadd.f32 %v2678, %v2679
    %v2681 = vsel %vm1523, %v2431, 0.0
    %v2682 = vrot.slane %v2681, 4
    %v2683 = vadd.f32 %v2681, %v2682
    %v2684 = vrot.slane %v2683, 2
    %v2685 = vadd.f32 %v2683, %v2684
    %v2686 = vrot.slane %v2685, 1
    %v2687 = vadd.f32 %v2685, %v2686
    %v2688 = vsel %vm1523, %v2432, 0.0
    %v2689 = vrot.slane %v2688, 4
    %v2690 = vadd.f32 %v2688, %v2689
    %v2691 = vrot.slane %v2690, 2
    %v2692 = vadd.f32 %v2690, %v2691
    %v2693 = vrot.slane %v2692, 1
    %v2694 = vadd.f32 %v2692, %v2693
    %v2695 = vsel %vm1523, %v2433, 0.0
    %v2696 = vrot.slane %v2695, 4
    %v2697 = vadd.f32 %v2695, %v2696
    %v2698 = vrot.slane %v2697, 2
    %v2699 = vadd.f32 %v2697, %v2698
    %v2700 = vrot.slane %v2699, 1
    %v2701 = vadd.f32 %v2699, %v2700
    %v2702 = vsel %vm1523, %v2434, 0.0
    %v2703 = vrot.slane %v2702, 4
    %v2704 = vadd.f32 %v2702, %v2703
    %v2705 = vrot.slane %v2704, 2
    %v2706 = vadd.f32 %v2704, %v2705
    %v2707 = vrot.slane %v2706, 1
    %v2708 = vadd.f32 %v2706, %v2707
    %v2709 = vsel %vm1523, %v2435, 0.0
    %v2710 = vrot.slane %v2709, 4
    %v2711 = vadd.f32 %v2709, %v2710
    %v2712 = vrot.slane %v2711, 2
    %v2713 = vadd.f32 %v2711, %v2712
    %v2714 = vrot.slane %v2713, 1
    %v2715 = vadd.f32 %v2713, %v2714
    %v2716 = vsel %vm1523, %v2436, 0.0
    %v2717 = vrot.slane %v2716, 4
    %v2718 = vadd.f32 %v2716, %v2717
    %v2719 = vrot.slane %v2718, 2
    %v2720 = vadd.f32 %v2718, %v2719
    %v2721 = vrot.slane %v2720, 1
    %v2722 = vadd.f32 %v2720, %v2721
    %v2723 = vsel %vm1523, %v2437, 0.0
    %v2724 = vrot.slane %v2723, 4
    %v2725 = vadd.f32 %v2723, %v2724
    %v2726 = vrot.slane %v2725, 2
    %v2727 = vadd.f32 %v2725, %v2726
    %v2728 = vrot.slane %v2727, 1
    %v2729 = vadd.f32 %v2727, %v2728
    %v2730 = vsel %vm1523, %v2438, 0.0
    %v2731 = vrot.slane %v2730, 4
    %v2732 = vadd.f32 %v2730, %v2731
    %v2733 = vrot.slane %v2732, 2
    %v2734 = vadd.f32 %v2732, %v2733
    %v2735 = vrot.slane %v2734, 1
    %v2736 = vadd.f32 %v2734, %v2735
    %v2737 = vsel %vm1523, %v2439, 0.0
    %v2738 = vrot.slane %v2737, 4
    %v2739 = vadd.f32 %v2737, %v2738
    %v2740 = vrot.slane %v2739, 2
    %v2741 = vadd.f32 %v2739, %v2740
    %v2742 = vrot.slane %v2741, 1
    %v2743 = vadd.f32 %v2741, %v2742
    %v2744 = vsel %vm1523, %v2440, 0.0
    %v2745 = vrot.slane %v2744, 4
    %v2746 = vadd.f32 %v2744, %v2745
    %v2747 = vrot.slane %v2746, 2
    %v2748 = vadd.f32 %v2746, %v2747
    %v2749 = vrot.slane %v2748, 1
    %v2750 = vadd.f32 %v2748, %v2749
    %v2751 = vsel %vm1523, %v2441, 0.0
    %v2752 = vrot.slane %v2751, 4
    %v2753 = vadd.f32 %v2751, %v2752
    %v2754 = vrot.slane %v2753, 2
    %v2755 = vadd.f32 %v2753, %v2754
    %v2756 = vrot.slane %v2755, 1
    %v2757 = vadd.f32 %v2755, %v2756
    %v2758 = vsel %vm1523, %v2442, 0.0
    %v2759 = vrot.slane %v2758, 4
    %v2760 = vadd.f32 %v2758, %v2759
    %v2761 = vrot.slane %v2760, 2
    %v2762 = vadd.f32 %v2760, %v2761
    %v2763 = vrot.slane %v2762, 1
    %v2764 = vadd.f32 %v2762, %v2763
    %v2765 = vsel %vm1523, %v2443, 0.0
    %v2766 = vrot.slane %v2765, 4
    %v2767 = vadd.f32 %v2765, %v2766
    %v2768 = vrot.slane %v2767, 2
    %v2769 = vadd.f32 %v2767, %v2768
    %v2770 = vrot.slane %v2769, 1
    %v2771 = vadd.f32 %v2769, %v2770
    %v2772 = vsel %vm1523, %v2444, 0.0
    %v2773 = vrot.slane %v2772, 4
    %v2774 = vadd.f32 %v2772, %v2773
    %v2775 = vrot.slane %v2774, 2
    %v2776 = vadd.f32 %v2774, %v2775
    %v2777 = vrot.slane %v2776, 1
    %v2778 = vadd.f32 %v2776, %v2777
    %v2779 = vsel %vm1523, %v2445, 0.0
    %v2780 = vrot.slane %v2779, 4
    %v2781 = vadd.f32 %v2779, %v2780
    %v2782 = vrot.slane %v2781, 2
    %v2783 = vadd.f32 %v2781, %v2782
    %v2784 = vrot.slane %v2783, 1
    %v2785 = vadd.f32 %v2783, %v2784
    %v2786 = vsel %vm1523, %v2446, 0.0
    %v2787 = vrot.slane %v2786, 4
    %v2788 = vadd.f32 %v2786, %v2787
    %v2789 = vrot.slane %v2788, 2
    %v2790 = vadd.f32 %v2788, %v2789
    %v2791 = vrot.slane %v2790, 1
    %v2792 = vadd.f32 %v2790, %v2791
    %v2793 = vsel %vm1523, %v2447, 0.0
    %v2794 = vrot.slane %v2793, 4
    %v2795 = vadd.f32 %v2793, %v2794
    %v2796 = vrot.slane %v2795, 2
    %v2797 = vadd.f32 %v2795, %v2796
    %v2798 = vrot.slane %v2797, 1
    %v2799 = vadd.f32 %v2797, %v2798
    %v2800 = vsel %vm1523, %v2448, 0.0
    %v2801 = vrot.slane %v2800, 4
    %v2802 = vadd.f32 %v2800, %v2801
    %v2803 = vrot.slane %v2802, 2
    %v2804 = vadd.f32 %v2802, %v2803
    %v2805 = vrot.slane %v2804, 1
    %v2806 = vadd.f32 %v2804, %v2805
    %v2807 = vsel %vm1523, %v2449, 0.0
    %v2808 = vrot.slane %v2807, 4
    %v2809 = vadd.f32 %v2807, %v2808
    %v2810 = vrot.slane %v2809, 2
    %v2811 = vadd.f32 %v2809, %v2810
    %v2812 = vrot.slane %v2811, 1
    %v2813 = vadd.f32 %v2811, %v2812
    %v2814 = vsel %vm1523, %v2450, 0.0
    %v2815 = vrot.slane %v2814, 4
    %v2816 = vadd.f32 %v2814, %v2815
    %v2817 = vrot.slane %v2816, 2
    %v2818 = vadd.f32 %v2816, %v2817
    %v2819 = vrot.slane %v2818, 1
    %v2820 = vadd.f32 %v2818, %v2819
    %v2821 = vsel %vm1523, %v2451, 0.0
    %v2822 = vrot.slane %v2821, 4
    %v2823 = vadd.f32 %v2821, %v2822
    %v2824 = vrot.slane %v2823, 2
    %v2825 = vadd.f32 %v2823, %v2824
    %v2826 = vrot.slane %v2825, 1
    %v2827 = vadd.f32 %v2825, %v2826
    %v2828 = vsel %vm1523, %v2452, 0.0
    %v2829 = vrot.slane %v2828, 4
    %v2830 = vadd.f32 %v2828, %v2829
    %v2831 = vrot.slane %v2830, 2
    %v2832 = vadd.f32 %v2830, %v2831
    %v2833 = vrot.slane %v2832, 1
    %v2834 = vadd.f32 %v2832, %v2833
    %v2835 = vsel %vm1523, %v2453, 0.0
    %v2836 = vrot.slane %v2835, 4
    %v2837 = vadd.f32 %v2835, %v2836
    %v2838 = vrot.slane %v2837, 2
    %v2839 = vadd.f32 %v2837, %v2838
    %v2840 = vrot.slane %v2839, 1
    %v2841 = vadd.f32 %v2839, %v2840
    %v2842 = vsel %vm1523, %v2454, 0.0
    %v2843 = vrot.slane %v2842, 4
    %v2844 = vadd.f32 %v2842, %v2843
    %v2845 = vrot.slane %v2844, 2
    %v2846 = vadd.f32 %v2844, %v2845
    %v2847 = vrot.slane %v2846, 1
    %v2848 = vadd.f32 %v2846, %v2847
    %v2849 = vsel %vm1523, %v2455, 0.0
    %v2850 = vrot.slane %v2849, 4
    %v2851 = vadd.f32 %v2849, %v2850
    %v2852 = vrot.slane %v2851, 2
    %v2853 = vadd.f32 %v2851, %v2852
    %v2854 = vrot.slane %v2853, 1
    %v2855 = vadd.f32 %v2853, %v2854
    %v2856 = vsel %vm1523, %v2456, 0.0
    %v2857 = vrot.slane %v2856, 4
    %v2858 = vadd.f32 %v2856, %v2857
    %v2859 = vrot.slane %v2858, 2
    %v2860 = vadd.f32 %v2858, %v2859
    %v2861 = vrot.slane %v2860, 1
    %v2862 = vadd.f32 %v2860, %v2861
    %v2863 = vsel %vm1523, %v2457, 0.0
    %v2864 = vrot.slane %v2863, 4
    %v2865 = vadd.f32 %v2863, %v2864
    %v2866 = vrot.slane %v2865, 2
    %v2867 = vadd.f32 %v2865, %v2866
    %v2868 = vrot.slane %v2867, 1
    %v2869 = vadd.f32 %v2867, %v2868
    %v2870 = vsel %vm1523, %v2458, 0.0
    %v2871 = vrot.slane %v2870, 4
    %v2872 = vadd.f32 %v2870, %v2871
    %v2873 = vrot.slane %v2872, 2
    %v2874 = vadd.f32 %v2872, %v2873
    %v2875 = vrot.slane %v2874, 1
    %v2876 = vadd.f32 %v2874, %v2875
    %v2877 = vsel %vm1523, %v2459, 0.0
    %v2878 = vrot.slane %v2877, 4
    %v2879 = vadd.f32 %v2877, %v2878
    %v2880 = vrot.slane %v2879, 2
    %v2881 = vadd.f32 %v2879, %v2880
    %v2882 = vrot.slane %v2881, 1
    %v2883 = vadd.f32 %v2881, %v2882
    %v2884 = vsel %vm1523, %v2460, 0.0
    %v2885 = vrot.slane %v2884, 4
    %v2886 = vadd.f32 %v2884, %v2885
    %v2887 = vrot.slane %v2886, 2
    %v2888 = vadd.f32 %v2886, %v2887
    %v2889 = vrot.slane %v2888, 1
    %v2890 = vadd.f32 %v2888, %v2889
    %v2891 = vsel %vm1523, %v2461, 0.0
    %v2892 = vrot.slane %v2891, 4
    %v2893 = vadd.f32 %v2891, %v2892
    %v2894 = vrot.slane %v2893, 2
    %v2895 = vadd.f32 %v2893, %v2894
    %v2896 = vrot.slane %v2895, 1
    %v2897 = vadd.f32 %v2895, %v2896
    %v2898 = vsel %vm1523, %v2462, 0.0
    %v2899 = vrot.slane %v2898, 4
    %v2900 = vadd.f32 %v2898, %v2899
    %v2901 = vrot.slane %v2900, 2
    %v2902 = vadd.f32 %v2900, %v2901
    %v2903 = vrot.slane %v2902, 1
    %v2904 = vadd.f32 %v2902, %v2903
    %v2905 = vsel %vm1523, %v2463, 0.0
    %v2906 = vrot.slane %v2905, 4
    %v2907 = vadd.f32 %v2905, %v2906
    %v2908 = vrot.slane %v2907, 2
    %v2909 = vadd.f32 %v2907, %v2908
    %v2910 = vrot.slane %v2909, 1
    %v2911 = vadd.f32 %v2909, %v2910
    %v2912 = vpack.c.bf16 %v2470, %v2470
    %v2913 = vpack.c.bf16 %v2477, %v2477
    %v2914 = vpack.c.bf16 %v2484, %v2484
    %v2915 = vpack.c.bf16 %v2491, %v2491
    %v2916 = vpack.c.bf16 %v2498, %v2498
    %v2917 = vpack.c.bf16 %v2505, %v2505
    %v2918 = vpack.c.bf16 %v2512, %v2512
    %v2919 = vpack.c.bf16 %v2519, %v2519
    %v2920 = vpack.c.bf16 %v2526, %v2526
    %v2921 = vpack.c.bf16 %v2533, %v2533
    %v2922 = vpack.c.bf16 %v2540, %v2540
    %v2923 = vpack.c.bf16 %v2547, %v2547
    %v2924 = vpack.c.bf16 %v2554, %v2554
    %v2925 = vpack.c.bf16 %v2561, %v2561
    %v2926 = vpack.c.bf16 %v2568, %v2568
    %v2927 = vpack.c.bf16 %v2575, %v2575
    %v2928 = vpack.c.bf16 %v2582, %v2582
    %v2929 = vpack.c.bf16 %v2589, %v2589
    %v2930 = vpack.c.bf16 %v2596, %v2596
    %v2931 = vpack.c.bf16 %v2603, %v2603
    %v2932 = vpack.c.bf16 %v2610, %v2610
    %v2933 = vpack.c.bf16 %v2617, %v2617
    %v2934 = vpack.c.bf16 %v2624, %v2624
    %v2935 = vpack.c.bf16 %v2631, %v2631
    %v2936 = vpack.c.bf16 %v2638, %v2638
    %v2937 = vpack.c.bf16 %v2645, %v2645
    %v2938 = vpack.c.bf16 %v2652, %v2652
    %v2939 = vpack.c.bf16 %v2659, %v2659
    %v2940 = vpack.c.bf16 %v2666, %v2666
    %v2941 = vpack.c.bf16 %v2673, %v2673
    %v2942 = vpack.c.bf16 %v2680, %v2680
    %v2943 = vpack.c.bf16 %v2687, %v2687
    %v2944 = vpack.c.bf16 %v2694, %v2694
    %v2945 = vpack.c.bf16 %v2701, %v2701
    %v2946 = vpack.c.bf16 %v2708, %v2708
    %v2947 = vpack.c.bf16 %v2715, %v2715
    %v2948 = vpack.c.bf16 %v2722, %v2722
    %v2949 = vpack.c.bf16 %v2729, %v2729
    %v2950 = vpack.c.bf16 %v2736, %v2736
    %v2951 = vpack.c.bf16 %v2743, %v2743
    %v2952 = vpack.c.bf16 %v2750, %v2750
    %v2953 = vpack.c.bf16 %v2757, %v2757
    %v2954 = vpack.c.bf16 %v2764, %v2764
    %v2955 = vpack.c.bf16 %v2771, %v2771
    %v2956 = vpack.c.bf16 %v2778, %v2778
    %v2957 = vpack.c.bf16 %v2785, %v2785
    %v2958 = vpack.c.bf16 %v2792, %v2792
    %v2959 = vpack.c.bf16 %v2799, %v2799
    %v2960 = vpack.c.bf16 %v2806, %v2806
    %v2961 = vpack.c.bf16 %v2813, %v2813
    %v2962 = vpack.c.bf16 %v2820, %v2820
    %v2963 = vpack.c.bf16 %v2827, %v2827
    %v2964 = vpack.c.bf16 %v2834, %v2834
    %v2965 = vpack.c.bf16 %v2841, %v2841
    %v2966 = vpack.c.bf16 %v2848, %v2848
    %v2967 = vpack.c.bf16 %v2855, %v2855
    %v2968 = vpack.c.bf16 %v2862, %v2862
    %v2969 = vpack.c.bf16 %v2869, %v2869
    %v2970 = vpack.c.bf16 %v2876, %v2876
    %v2971 = vpack.c.bf16 %v2883, %v2883
    %v2972 = vpack.c.bf16 %v2890, %v2890
    %v2973 = vpack.c.bf16 %v2897, %v2897
    %v2974 = vpack.c.bf16 %v2904, %v2904
    %v2975 = vpack.c.bf16 %v2911, %v2911
    %v2976 = vld [vmem:[%s6] sm:$0xf]
    %v2977 = vld [vmem:[%s6 + $0x4] sm:$0xf]
    %v2978 = vld [vmem:[%s6 + $0x8] sm:$0xf]
    %v2979 = vld [vmem:[%s6 + $0xc] sm:$0xf]
    %v2980 = vld [vmem:[%s7] sm:$0x1]
    %v2982 = vlaneseq
    %v2983 = vshrl.u32 %v2982, 7
    %v2984 = vsub.s32 0, %v2983
    %v2985 = vrot.slane %v2980, %v2984
    %v3051 = vunpack.c.l.b16 %v2912
    %v3052 = vunpack.c.l.b16 %v2913
    %v3053 = vunpack.c.l.b16 %v2914
    %v3054 = vunpack.c.l.b16 %v2915
    %v3055 = vunpack.c.l.b16 %v2916
    %v3056 = vunpack.c.l.b16 %v2917
    %v3057 = vunpack.c.l.b16 %v2918
    %v3058 = vunpack.c.l.b16 %v2919
    %v3059 = vunpack.c.l.b16 %v2920
    %v3060 = vunpack.c.l.b16 %v2921
    %v3061 = vunpack.c.l.b16 %v2922
    %v3062 = vunpack.c.l.b16 %v2923
    %v3063 = vunpack.c.l.b16 %v2924
    %v3064 = vunpack.c.l.b16 %v2925
    %v3065 = vunpack.c.l.b16 %v2926
    %v3066 = vunpack.c.l.b16 %v2927
    %v3067 = vunpack.c.l.b16 %v2928
    %v3068 = vunpack.c.l.b16 %v2929
    %v3069 = vunpack.c.l.b16 %v2930
    %v3070 = vunpack.c.l.b16 %v2931
    %v3071 = vunpack.c.l.b16 %v2932
    %v3072 = vunpack.c.l.b16 %v2933
    %v3073 = vunpack.c.l.b16 %v2934
    %v3074 = vunpack.c.l.b16 %v2935
    %v3075 = vunpack.c.l.b16 %v2936
    %v3076 = vunpack.c.l.b16 %v2937
    %v3077 = vunpack.c.l.b16 %v2938
    %v3078 = vunpack.c.l.b16 %v2939
    %v3079 = vunpack.c.l.b16 %v2940
    %v3080 = vunpack.c.l.b16 %v2941
    %v3081 = vunpack.c.l.b16 %v2942
    %v3082 = vunpack.c.l.b16 %v2943
    %v3083 = vunpack.c.l.b16 %v2944
    %v3084 = vunpack.c.l.b16 %v2945
    %v3085 = vunpack.c.l.b16 %v2946
    %v3086 = vunpack.c.l.b16 %v2947
    %v3087 = vunpack.c.l.b16 %v2948
    %v3088 = vunpack.c.l.b16 %v2949
    %v3089 = vunpack.c.l.b16 %v2950
    %v3090 = vunpack.c.l.b16 %v2951
    %v3091 = vunpack.c.l.b16 %v2952
    %v3092 = vunpack.c.l.b16 %v2953
    %v3093 = vunpack.c.l.b16 %v2954
    %v3094 = vunpack.c.l.b16 %v2955
    %v3095 = vunpack.c.l.b16 %v2956
    %v3096 = vunpack.c.l.b16 %v2957
    %v3097 = vunpack.c.l.b16 %v2958
    %v3098 = vunpack.c.l.b16 %v2959
    %v3099 = vunpack.c.l.b16 %v2960
    %v3100 = vunpack.c.l.b16 %v2961
    %v3101 = vunpack.c.l.b16 %v2962
    %v3102 = vunpack.c.l.b16 %v2963
    %v3103 = vunpack.c.l.b16 %v2964
    %v3104 = vunpack.c.l.b16 %v2965
    %v3105 = vunpack.c.l.b16 %v2966
    %v3106 = vunpack.c.l.b16 %v2967
    %v3107 = vunpack.c.l.b16 %v2968
    %v3108 = vunpack.c.l.b16 %v2969
    %v3109 = vunpack.c.l.b16 %v2970
    %v3110 = vunpack.c.l.b16 %v2971
    %v3111 = vunpack.c.l.b16 %v2972
    %v3112 = vunpack.c.l.b16 %v2973
    %v3113 = vunpack.c.l.b16 %v2974
    %v3114 = vunpack.c.l.b16 %v2975
    %vm3115 = vcmask 1041409
    %v3116 = vsel %vm3115, %v3052, %v3051
    %vm3117 = vcmask 1042434
    %v3118 = vsel %vm3117, %v3053, %v3116
    %vm3119 = vcmask 1043459
    %v3120 = vsel %vm3119, %v3054, %v3118
    %vm3121 = vcmask 1044484
    %v3122 = vsel %vm3121, %v3055, %v3120
    %vm3123 = vcmask 1045509
    %v3124 = vsel %vm3123, %v3056, %v3122
    %vm3125 = vcmask 1046534
    %v3126 = vsel %vm3125, %v3057, %v3124
    %vm3127 = vcmask 1047559
    %v3128 = vsel %vm3127, %v3058, %v3126
    %v3129 = vsel %vm3115, %v3060, %v3059
    %v3130 = vsel %vm3117, %v3061, %v3129
    %v3131 = vsel %vm3119, %v3062, %v3130
    %v3132 = vsel %vm3121, %v3063, %v3131
    %v3133 = vsel %vm3123, %v3064, %v3132
    %v3134 = vsel %vm3125, %v3065, %v3133
    %v3135 = vsel %vm3127, %v3066, %v3134
    %v3136 = vsel %vm3115, %v3068, %v3067
    %v3137 = vsel %vm3117, %v3069, %v3136
    %v3138 = vsel %vm3119, %v3070, %v3137
    %v3139 = vsel %vm3121, %v3071, %v3138
    %v3140 = vsel %vm3123, %v3072, %v3139
    %v3141 = vsel %vm3125, %v3073, %v3140
    %v3142 = vsel %vm3127, %v3074, %v3141
    %v3143 = vsel %vm3115, %v3076, %v3075
    %v3144 = vsel %vm3117, %v3077, %v3143
    %v3145 = vsel %vm3119, %v3078, %v3144
    %v3146 = vsel %vm3121, %v3079, %v3145
    %v3147 = vsel %vm3123, %v3080, %v3146
    %v3148 = vsel %vm3125, %v3081, %v3147
    %v3149 = vsel %vm3127, %v3082, %v3148
    %v3150 = vsel %vm3115, %v3084, %v3083
    %v3151 = vsel %vm3117, %v3085, %v3150
    %v3152 = vsel %vm3119, %v3086, %v3151
    %v3153 = vsel %vm3121, %v3087, %v3152
    %v3154 = vsel %vm3123, %v3088, %v3153
    %v3155 = vsel %vm3125, %v3089, %v3154
    %v3156 = vsel %vm3127, %v3090, %v3155
    %v3157 = vsel %vm3115, %v3092, %v3091
    %v3158 = vsel %vm3117, %v3093, %v3157
    %v3159 = vsel %vm3119, %v3094, %v3158
    %v3160 = vsel %vm3121, %v3095, %v3159
    %v3161 = vsel %vm3123, %v3096, %v3160
    %v3162 = vsel %vm3125, %v3097, %v3161
    %v3163 = vsel %vm3127, %v3098, %v3162
    %v3164 = vsel %vm3115, %v3100, %v3099
    %v3165 = vsel %vm3117, %v3101, %v3164
    %v3166 = vsel %vm3119, %v3102, %v3165
    %v3167 = vsel %vm3121, %v3103, %v3166
    %v3168 = vsel %vm3123, %v3104, %v3167
    %v3169 = vsel %vm3125, %v3105, %v3168
    %v3170 = vsel %vm3127, %v3106, %v3169
    %v3171 = vsel %vm3115, %v3108, %v3107
    %v3172 = vsel %vm3117, %v3109, %v3171
    %v3173 = vsel %vm3119, %v3110, %v3172
    %v3174 = vsel %vm3121, %v3111, %v3173
    %v3175 = vsel %vm3123, %v3112, %v3174
    %v3176 = vsel %vm3125, %v3113, %v3175
    %v3177 = vsel %vm3127, %v3114, %v3176
    %v3178 = vpack.c.b16 %v3135, %v3128
    %v3179 = vpack.c.b16 %v3149, %v3142
    %v3180 = vpack.c.b16 %v3163, %v3156
    %v3181 = vpack.c.b16 %v3177, %v3170
    %v3186 = vunpack.c.l.b16 %v2976
    %v3187 = vunpack.c.l.b16 %v2977
    %v3188 = vunpack.c.l.b16 %v2978
    %v3189 = vunpack.c.l.b16 %v2979
    %v3190 = vpack.c.b16 %v3187, %v3186
    %v3191 = vpack.c.b16 %v3189, %v3188
    %v3195 = vsel %vm1523, %v3178, 0
    %v3198 = vsel %vm1523, %v3179, 0
    %v3201 = vsel %vm1523, %v3180, 0
    %v3204 = vsel %vm1523, %v3181, 0
    %3206 = vmatprep.subr.bf16.mxu0 0
    %3207 = vmatpush1.bf16.msra.mxu0 %v3190
    %3208 = vmatprep.subr.bf16.mxu0 0
    %3209 = vmatpush1.bf16.msra.mxu0 %v3191
    %3210 = vmatprep.subr.bf16.mxu0 0
    %3211 = vmatpush1.bf16.msra.mxu0 0
    %3212 = vmatprep.subr.bf16.mxu0 0
    %3213 = vmatpush1.bf16.msra.mxu0 0
    %3214 = vmatprep.subr.bf16.mxu0 0
    %3215 = vmatpush1.bf16.msra.mxu0 0
    %3216 = vmatprep.subr.bf16.mxu0 0
    %3217 = vmatpush1.bf16.msra.mxu0 0
    %3218 = vmatprep.subr.bf16.mxu0 0
    %3219 = vmatpush1.bf16.msra.mxu0 0
    %3220 = vmatprep.subr.bf16.mxu0 0
    %3221 = vmatpush1.bf16.msra.mxu0 0
    %3222 = vmatprep.subr.bf16.mxu0 0
    %3223 = vmatpush1.bf16.msra.mxu0 0
    %3224 = vmatprep.subr.bf16.mxu0 0
    %3225 = vmatpush1.bf16.msra.mxu0 0
    %3226 = vmatprep.subr.bf16.mxu0 0
    %3227 = vmatpush1.bf16.msra.mxu0 0
    %3228 = vmatprep.subr.bf16.mxu0 0
    %3229 = vmatpush1.bf16.msra.mxu0 0
    %3230 = vmatprep.subr.bf16.mxu0 0
    %3231 = vmatpush1.bf16.msra.mxu0 0
    %3232 = vmatprep.subr.bf16.mxu0 0
    %3233 = vmatpush1.bf16.msra.mxu0 0
    %3234 = vmatprep.subr.bf16.mxu0 0
    %3235 = vmatpush1.bf16.msra.mxu0 0
    %3236 = vmatprep.subr.bf16.mxu0 0
    %3237 = vmatpush1.bf16.msra.mxu0 0
    %3238 = vmatprep.mubr.bf16.mxu0 0
    %3239 = vmatmul.mubr.bf16.gmra.mrb[0].mxu0 %v3195
    %v3240 = vpop.f32.mrb[0].mxu0
    %v3241 = vadd.f32 %v2985, %v3240
    %v3242 = vpop.f32.mrb[0].mxu0
    %v3243 = vpop.f32.mrb[0].mxu0
    %v3244 = vadd.f32 %v2985, %v3243
    %v3245 = vpop.f32.mrb[0].mxu0
    %3246 = vmatprep.mubr.bf16.mxu0 0
    %3247 = vmatmul.mubr.bf16.gmra.mrb[0].mxu0 %v3198
    %v3248 = vpop.f32.mrb[0].mxu0
    %v3249 = vadd.f32 %v2985, %v3248
    %v3250 = vpop.f32.mrb[0].mxu0
    %v3251 = vpop.f32.mrb[0].mxu0
    %v3252 = vadd.f32 %v2985, %v3251
    %v3253 = vpop.f32.mrb[0].mxu0
    %3254 = vmatprep.mubr.bf16.mxu0 0
    %3255 = vmatmul.mubr.bf16.gmra.mrb[0].mxu0 %v3201
    %v3256 = vpop.f32.mrb[0].mxu0
    %v3257 = vadd.f32 %v2985, %v3256
    %v3258 = vpop.f32.mrb[0].mxu0
    %v3259 = vpop.f32.mrb[0].mxu0
    %v3260 = vadd.f32 %v2985, %v3259
    %v3261 = vpop.f32.mrb[0].mxu0
    %3262 = vmatprep.mubr.bf16.mxu0 0
    %3263 = vmatmul.mubr.bf16.gmra.mrb[0].mxu0 %v3204
    %v3264 = vpop.f32.mrb[0].mxu0
    %v3265 = vadd.f32 %v2985, %v3264
    %v3266 = vpop.f32.mrb[0].mxu0
    %v3267 = vpop.f32.mrb[0].mxu0
    %v3268 = vadd.f32 %v2985, %v3267
    %v3269 = vpop.f32.mrb[0].mxu0
    %3270 = vdwg.mxu0
    %v3271 = vmax.f32 %v3241, 0.0
    %v3272 = vmax.f32 %v3244, 0.0
    %v3273 = vmax.f32 %v3249, 0.0
    %v3274 = vmax.f32 %v3252, 0.0
    %v3275 = vmax.f32 %v3257, 0.0
    %v3276 = vmax.f32 %v3260, 0.0
    %v3277 = vmax.f32 %v3265, 0.0
    %v3278 = vmax.f32 %v3268, 0.0
    %v3279 = vpack.c.bf16 %v3272, %v3271
    %v3280 = vpack.c.bf16 %v3274, %v3273
    %v3281 = vpack.c.bf16 %v3276, %v3275
    %v3282 = vpack.c.bf16 %v3278, %v3277
    %v3283 = vld [vmem:[#allocation7] sm:$0xf]
    %v3284 = vld [vmem:[#allocation7 + $0x4] sm:$0xf]
    %v3285 = vld [vmem:[#allocation7 + $0x8] sm:$0xf]
    %v3286 = vld [vmem:[#allocation7 + $0xc] sm:$0xf]
    %v3287 = vld [vmem:[%s9] sm:$0x1]
    %v3289 = vlaneseq
    %v3290 = vshrl.u32 %v3289, 7
    %v3291 = vsub.s32 0, %v3290
    %v3292 = vrot.slane %v3287, %v3291
    %v3298 = vunpack.c.l.b16 %v3283
    %v3299 = vunpack.c.l.b16 %v3284
    %v3300 = vunpack.c.l.b16 %v3285
    %v3301 = vunpack.c.l.b16 %v3286
    %v3302 = vpack.c.b16 %v3299, %v3298
    %v3303 = vpack.c.b16 %v3301, %v3300
    %v3307 = vsel %vm1523, %v3279, 0
    %v3310 = vsel %vm1523, %v3280, 0
    %v3313 = vsel %vm1523, %v3281, 0
    %v3316 = vsel %vm1523, %v3282, 0
    %3318 = vmatprep.subr.bf16.mxu0 0
    %3319 = vmatpush1.bf16.msra.mxu0 %v3302
    %3320 = vmatprep.subr.bf16.mxu0 0
    %3321 = vmatpush1.bf16.msra.mxu0 %v3303
    %3322 = vmatprep.subr.bf16.mxu0 0
    %3323 = vmatpush1.bf16.msra.mxu0 0
    %3324 = vmatprep.subr.bf16.mxu0 0
    %3325 = vmatpush1.bf16.msra.mxu0 0
    %3326 = vmatprep.subr.bf16.mxu0 0
    %3327 = vmatpush1.bf16.msra.mxu0 0
    %3328 = vmatprep.subr.bf16.mxu0 0
    %3329 = vmatpush1.bf16.msra.mxu0 0
    %3330 = vmatprep.subr.bf16.mxu0 0
    %3331 = vmatpush1.bf16.msra.mxu0 0
    %3332 = vmatprep.subr.bf16.mxu0 0
    %3333 = vmatpush1.bf16.msra.mxu0 0
    %3334 = vmatprep.subr.bf16.mxu0 0
    %3335 = vmatpush1.bf16.msra.mxu0 0
    %3336 = vmatprep.subr.bf16.mxu0 0
    %3337 = vmatpush1.bf16.msra.mxu0 0
    %3338 = vmatprep.subr.bf16.mxu0 0
    %3339 = vmatpush1.bf16.msra.mxu0 0
    %3340 = vmatprep.subr.bf16.mxu0 0
    %3341 = vmatpush1.bf16.msra.mxu0 0
    %3342 = vmatprep.subr.bf16.mxu0 0
    %3343 = vmatpush1.bf16.msra.mxu0 0
    %3344 = vmatprep.subr.bf16.mxu0 0
    %3345 = vmatpush1.bf16.msra.mxu0 0
    %3346 = vmatprep.subr.bf16.mxu0 0
    %3347 = vmatpush1.bf16.msra.mxu0 0
    %3348 = vmatprep.subr.bf16.mxu0 0
    %3349 = vmatpush1.bf16.msra.mxu0 0
    %3350 = vmatprep.mubr.bf16.mxu0 0
    %3351 = vmatmul.mubr.bf16.gmra.mrb[0].mxu0 %v3307
    %v3352 = vpop.f32.mrb[0].mxu0
    %v3353 = vadd.f32 %v3292, %v3352
    %v3354 = vpop.f32.mrb[0].mxu0
    %v3355 = vpop.f32.mrb[0].mxu0
    %v3356 = vadd.f32 %v3292, %v3355
    %v3357 = vpop.f32.mrb[0].mxu0
    %3358 = vmatprep.mubr.bf16.mxu0 0
    %3359 = vmatmul.mubr.bf16.gmra.mrb[0].mxu0 %v3310
    %v3360 = vpop.f32.mrb[0].mxu0
    %v3361 = vadd.f32 %v3292, %v3360
    %v3362 = vpop.f32.mrb[0].mxu0
    %v3363 = vpop.f32.mrb[0].mxu0
    %v3364 = vadd.f32 %v3292, %v3363
    %v3365 = vpop.f32.mrb[0].mxu0
    %3366 = vmatprep.mubr.bf16.mxu0 0
    %3367 = vmatmul.mubr.bf16.gmra.mrb[0].mxu0 %v3313
    %v3368 = vpop.f32.mrb[0].mxu0
    %v3369 = vadd.f32 %v3292, %v3368
    %v3370 = vpop.f32.mrb[0].mxu0
    %v3371 = vpop.f32.mrb[0].mxu0
    %v3372 = vadd.f32 %v3292, %v3371
    %v3373 = vpop.f32.mrb[0].mxu0
    %3374 = vmatprep.mubr.bf16.mxu0 0
    %3375 = vmatmul.mubr.bf16.gmra.mrb[0].mxu0 %v3316
    %v3376 = vpop.f32.mrb[0].mxu0
    %v3377 = vadd.f32 %v3292, %v3376
    %v3378 = vpop.f32.mrb[0].mxu0
    %v3379 = vpop.f32.mrb[0].mxu0
    %v3380 = vadd.f32 %v3292, %v3379
    %v3381 = vpop.f32.mrb[0].mxu0
    %3382 = vdwg.mxu0
    %v3383 = vmax.f32 %v3353, 0.0
    %v3384 = vmax.f32 %v3356, 0.0
    %v3385 = vmax.f32 %v3361, 0.0
    %v3386 = vmax.f32 %v3364, 0.0
    %v3387 = vmax.f32 %v3369, 0.0
    %v3388 = vmax.f32 %v3372, 0.0
    %v3389 = vmax.f32 %v3377, 0.0
    %v3390 = vmax.f32 %v3380, 0.0
    %v3391 = vld [vmem:[%s10] sm:$0x1]
    %v3392 = vunpack.c.l.bf16 %v3391
    %v3393 = vlaneseq
    %v3394 = vshrl.u32 %v3393, 7
    %v3395 = vsub.s32 0, %v3394
    %v3396 = vrot.slane %v3392, %v3395
    %v3397 = vmul.f32 %v3383, %v3396
    %v3398 = vmul.f32 %v3384, %v3396
    %v3399 = vmul.f32 %v3385, %v3396
    %v3400 = vmul.f32 %v3386, %v3396
    %v3401 = vmul.f32 %v3387, %v3396
    %v3402 = vmul.f32 %v3388, %v3396
    %v3403 = vmul.f32 %v3389, %v3396
    %v3404 = vmul.f32 %v3390, %v3396
    %v3405 = vsel %vm1523, %v3397, 0.0
    %3406 = vadd.xlane.f32.xlu0 %v3405
    %v3407 = vpop.xlane.xlu0 %3406
    %v3408 = vsel %vm1523, %v3398, 0.0
    %3409 = vadd.xlane.f32.xlu0 %v3408
    %v3410 = vpop.xlane.xlu0 %3409
    %v3411 = vsel %vm1523, %v3399, 0.0
    %3412 = vadd.xlane.f32.xlu0 %v3411
    %v3413 = vpop.xlane.xlu0 %3412
    %v3414 = vsel %vm1523, %v3400, 0.0
    %3415 = vadd.xlane.f32.xlu0 %v3414
    %v3416 = vpop.xlane.xlu0 %3415
    %v3417 = vsel %vm1523, %v3401, 0.0
    %3418 = vadd.xlane.f32.xlu0 %v3417
    %v3419 = vpop.xlane.xlu0 %3418
    %v3420 = vsel %vm1523, %v3402, 0.0
    %3421 = vadd.xlane.f32.xlu0 %v3420
    %v3422 = vpop.xlane.xlu0 %3421
    %v3423 = vsel %vm1523, %v3403, 0.0
    %3424 = vadd.xlane.f32.xlu0 %v3423
    %v3425 = vpop.xlane.xlu0 %3424
    %v3426 = vsel %vm1523, %v3404, 0.0
    %3427 = vadd.xlane.f32.xlu0 %v3426
    %v3428 = vpop.xlane.xlu0 %3427
    %v3429 = vld [vmem:[#allocation2] sm:$0x1]
    %v3431 = vlaneseq
    %v3432 = vshrl.u32 %v3431, 7
    %v3433 = vsub.s32 0, %v3432
    %v3434 = vrot.slane %v3429, %v3433
    %v3436 = vadd.f32 %v3407, %v3434
    %v3437 = vadd.f32 %v3410, %v3434
    %v3438 = vadd.f32 %v3413, %v3434
    %v3439 = vadd.f32 %v3416, %v3434
    %v3440 = vadd.f32 %v3419, %v3434
    %v3441 = vadd.f32 %v3422, %v3434
    %v3442 = vadd.f32 %v3425, %v3434
    %v3443 = vadd.f32 %v3428, %v3434
    %vm3444 = vcmask 7168
    %3445 = vst.msk [vmem:[%s12] sm:$0xff] %vm3444, %v3436
    %3446 = vst.msk [vmem:[%s12 + $0x8] sm:$0xff] %vm3444, %v3437
    %3447 = vst.msk [vmem:[%s12 + $0x10] sm:$0xff] %vm3444, %v3438
    %3448 = vst.msk [vmem:[%s12 + $0x18] sm:$0xff] %vm3444, %v3439
    %3449 = vst.msk [vmem:[%s12 + $0x20] sm:$0xff] %vm3444, %v3440
    %3450 = vst.msk [vmem:[%s12 + $0x28] sm:$0xff] %vm3444, %v3441
    %3451 = vst.msk [vmem:[%s12 + $0x30] sm:$0xff] %vm3444, %v3442
    %3452 = vst.msk [vmem:[%s12 + $0x38] sm:$0xff] %vm3444, %v3443
    // Predicated region
    $region62: #{tpu_custom_call.1} parent=1 // pred_check
      _
    $region63: #{tpu_custom_call.1} parent=1 // pred_check_branch
      %3454 = sbr.rel (0) target = $region65
    $region64: #{tpu_custom_call.1} parent=1 // pred_region
      _
    $region65: #{tpu_custom_call.1} parent=1 // pred_fallthru
      _
    // Predicated region
    $region66: #{tpu_custom_call.1} parent=1 // pred_check
      _
    $region67: #{tpu_custom_call.1} parent=1 // pred_check_branch
      %3456 = sbr.rel (0) target = $region69
    $region68: #{tpu_custom_call.1} parent=1 // pred_region
      _
    $region69: #{tpu_custom_call.1} parent=1 // pred_fallthru
      _
    %3457 = vsyncpa [#allocation4], 1
    %3458 = vsyncpa [#allocation6], 1

</llo_original>
